<compile_context>
chip_gen: v7x
topology: tpu7x:2x2x1
jax: 0.10.0
libtpu: 0.0.40
codegen_flags: <defaults>
</compile_context>

<pallas_src>
import jax
import jax.numpy as jnp
from jax.experimental import pallas as pl
from jax.experimental.pallas import tpu as pltpu

# ---------------------------------------------------------------------------
# Packed-parameter layout (single f32 vector, lane-aligned 128-multiple slices)
# ---------------------------------------------------------------------------
_PACK_SIZES = [
    ("b1", 128),
    ("b2", 256), ("g2", 256), ("be2", 256),
    ("b3", 512), ("g3", 512), ("be3", 512),
    ("b4", 1024), ("g4", 1024), ("be4", 1024),
    ("b5", 896),                       # 784 padded to 896 (7 x 128)
]
_PACK_OFFSETS = {}
_off = 0
for _name, _sz in _PACK_SIZES:
    _PACK_OFFSETS[_name] = (_off, _sz)
    _off += _sz
_PACK_TOTAL = _off                      # 6400 = 50 x 128


def _leaky_relu(x, slope=0.2):
    return jnp.where(x > 0, x, slope * x)


def _batchnorm_train(x, gamma, beta, eps=0.8):
    # nn.BatchNorm1d(C, 0.8): second positional arg is eps=0.8.
    # Module default mode is train() -> batch statistics, biased variance.
    mu = jnp.mean(x, axis=0, keepdims=True)
    var = jnp.mean((x - mu) * (x - mu), axis=0, keepdims=True)
    return (x - mu) * jax.lax.rsqrt(var + eps) * gamma + beta


def cgan_kernel(
    x_ref,                      # (B, 128) bf16  gen_input (zero-padded 110->128)
    w1_ref,                     # (128, 128)  bf16 (zero-padded rows 110..127)
    w2_ref,                     # (128, 256)  bf16
    w3_ref,                     # (256, 512)  bf16
    w4_ref,                     # (512, 1024) bf16
    w5_ref,                     # (1024, 896) bf16 (zero-padded cols 784..895)
    p_ref,                      # (1, 6400)   f32  packed biases / gamma / beta
    out_ref,                    # (B, 896)    f32
):
    def pk(name):
        off, sz = _PACK_OFFSETS[name]
        return p_ref[:, off:off + sz]           # static, lane-aligned slice

    x = x_ref[...]

    # linear_1: Linear(110->128 padded) + LeakyReLU(0.2)
    h = jnp.dot(x, w1_ref[...], preferred_element_type=jnp.float32) + pk("b1")
    h = _leaky_relu(h)

    # linear_2: Linear(128, 256) + LeakyReLU(0.2) + BatchNorm1d(256, eps=0.8)
    h = jnp.dot(h.astype(jnp.bfloat16), w2_ref[...],
                preferred_element_type=jnp.float32) + pk("b2")
    h = _batchnorm_train(_leaky_relu(h), pk("g2"), pk("be2"))

    # linear_3: Linear(256, 512) + LeakyReLU(0.2) + BatchNorm1d(512, eps=0.8)
    h = jnp.dot(h.astype(jnp.bfloat16), w3_ref[...],
                preferred_element_type=jnp.float32) + pk("b3")
    h = _batchnorm_train(_leaky_relu(h), pk("g3"), pk("be3"))

    # linear_4: Linear(512, 1024) + LeakyReLU(0.2) + BatchNorm1d(1024, eps=0.8)
    h = jnp.dot(h.astype(jnp.bfloat16), w4_ref[...],
                preferred_element_type=jnp.float32) + pk("b4")
    h = _batchnorm_train(_leaky_relu(h), pk("g4"), pk("be4"))

    # output_layer: Linear(1024, 784 padded to 896) + Tanh
    o = jnp.dot(h.astype(jnp.bfloat16), w5_ref[...],
                preferred_element_type=jnp.float32) + pk("b5")
    out_ref[...] = jnp.tanh(o)


def cgan_forward(noise, labels, params):
    """noise: (B, 100) f32; labels: (B,) int32 -> (B, 1, 28, 28) f32."""
    B = noise.shape[0]

    # Embedding lookup + concat + lane padding (glue; the matmul/BN/activation
    # hot path is in the Pallas kernel).
    emb = params["label_emb"][labels]                              # (B, 10)
    gen_input = jnp.concatenate(
        [emb, noise, jnp.zeros((B, 18), jnp.float32)], axis=-1)    # (B, 128)
    gen_input = gen_input.astype(jnp.bfloat16)

    kernel_args = (
        gen_input,
        params["w1"], params["w2"], params["w3"], params["w4"], params["w5"],
        params["packed"],
    )

    vmem_spec = pl.BlockSpec(memory_space=pltpu.MemorySpace.VMEM)
    flat = pl.pallas_call(
        cgan_kernel,
        out_shape=jax.ShapeDtypeStruct((B, 896), jnp.float32),
        in_specs=[vmem_spec] * len(kernel_args),
        out_specs=vmem_spec,
        compiler_params=pltpu.CompilerParams(vmem_limit_bytes=32 << 20),
    )(*kernel_args)

    # Drop the lane padding and reshape to NCHW (matches torch .view(B,1,28,28)).
    return flat[:, :28 * 28].reshape(B, 1, 28, 28)


def _cgan_reference(noise, labels, params):
    """Pure-JAX reference replicating the kernel's bf16-weight numerics."""
    B = noise.shape[0]
    emb = params["label_emb"][labels]
    x = jnp.concatenate([emb, noise, jnp.zeros((B, 18), jnp.float32)], axis=-1)
    x = x.astype(jnp.bfloat16)

    def pk(name):
        off, sz = _PACK_OFFSETS[name]
        return params["packed"][:, off:off + sz]

    h = jnp.dot(x, params["w1"], preferred_element_type=jnp.float32) + pk("b1")
    h = _leaky_relu(h)
    h = jnp.dot(h.astype(jnp.bfloat16), params["w2"],
                preferred_element_type=jnp.float32) + pk("b2")
    h = _batchnorm_train(_leaky_relu(h), pk("g2"), pk("be2"))
    h = jnp.dot(h.astype(jnp.bfloat16), params["w3"],
                preferred_element_type=jnp.float32) + pk("b3")
    h = _batchnorm_train(_leaky_relu(h), pk("g3"), pk("be3"))
    h = jnp.dot(h.astype(jnp.bfloat16), params["w4"],
                preferred_element_type=jnp.float32) + pk("b4")
    h = _batchnorm_train(_leaky_relu(h), pk("g4"), pk("be4"))
    o = jnp.dot(h.astype(jnp.bfloat16), params["w5"],
                preferred_element_type=jnp.float32) + pk("b5")
    o = jnp.tanh(o)
    return o[:, :28 * 28].reshape(B, 1, 28, 28)


def init_params(key):
    """Deterministic synthetic parameters with the CGAN module's shapes."""
    ks = jax.random.split(key, 16)

    def lin(kw, kb, fan_in, fan_out):
        # PyTorch-style uniform(-1/sqrt(fan_in), 1/sqrt(fan_in)); stored as
        # (in, out) so the kernel does x @ W.
        bound = 1.0 / jnp.sqrt(fan_in)
        w = jax.random.uniform(kw, (fan_in, fan_out), jnp.float32, -bound, bound)
        b = jax.random.uniform(kb, (1, fan_out), jnp.float32, -bound, bound)
        return w, b

    params = {}
    params["label_emb"] = jax.random.normal(ks[0], (10, 10), jnp.float32)

    w1, b1 = lin(ks[1], ks[2], 110, 128)
    w2, b2 = lin(ks[3], ks[4], 128, 256)
    w3, b3 = lin(ks[5], ks[6], 256, 512)
    w4, b4 = lin(ks[7], ks[8], 512, 1024)
    w5, b5 = lin(ks[9], ks[10], 1024, 28 * 28)

    # Lane-align: pad w1 K-dim 110 -> 128 (zero rows contribute nothing),
    # pad w5/b5 output dim 784 -> 896 (sliced off in the wrapper).
    w1 = jnp.concatenate([w1, jnp.zeros((18, 128), jnp.float32)], axis=0)
    w5 = jnp.concatenate([w5, jnp.zeros((1024, 896 - 784), jnp.float32)], axis=1)
    b5 = jnp.concatenate([b5, jnp.zeros((1, 896 - 784), jnp.float32)], axis=1)

    # Store matmul weights in bf16 (HBM-bound kernel: halves weight DMA bytes,
    # native MXU bf16 path).  Biases / BN params stay f32.
    params["w1"] = w1.astype(jnp.bfloat16)
    params["w2"] = w2.astype(jnp.bfloat16)
    params["w3"] = w3.astype(jnp.bfloat16)
    params["w4"] = w4.astype(jnp.bfloat16)
    params["w5"] = w5.astype(jnp.bfloat16)
    # TODO(synk): on v7x, w4/w5 could additionally be fp8-quantized with
    # per-channel scales (native fp8 MXU); skipped to keep one portable kernel.

    # BatchNorm affine params (PyTorch default init: gamma=1, beta=0).
    small = {
        "b1": b1, "b2": b2, "b3": b3, "b4": b4, "b5": b5,
        "g2": jnp.ones((1, 256), jnp.float32), "be2": jnp.zeros((1, 256), jnp.float32),
        "g3": jnp.ones((1, 512), jnp.float32), "be3": jnp.zeros((1, 512), jnp.float32),
        "g4": jnp.ones((1, 1024), jnp.float32), "be4": jnp.zeros((1, 1024), jnp.float32),
    }
    # Pack all tiny (1, N) vectors into a single f32 vector -> one DMA.
    params["packed"] = jnp.concatenate(
        [small[name] for name, _ in _PACK_SIZES], axis=-1)
    assert params["packed"].shape == (1, _PACK_TOTAL)
    return params


if __name__ == "__main__":
    key = jax.random.PRNGKey(0)
    k_param, k_noise, k_lab = jax.random.split(key, 3)

    B = 8
    params = init_params(k_param)
    noise = jax.random.normal(k_noise, (B, 100), jnp.float32)
    labels = jax.random.randint(k_lab, (B,), 0, 10, jnp.int32)

    out = jax.block_until_ready(jax.jit(cgan_forward)(noise, labels, params))
    assert out.shape == (B, 1, 28, 28), out.shape
    assert out.dtype == jnp.float32
    assert bool(jnp.all(jnp.isfinite(out)))
    assert bool(jnp.all(jnp.abs(out) <= 1.0 + 1e-5))   # tanh range

    ref = jax.block_until_ready(jax.jit(_cgan_reference)(noise, labels, params))
    max_err = float(jnp.max(jnp.abs(out - ref)))
    assert max_err < 3e-2, f"kernel vs reference max abs err {max_err}"

    print("KERNEL_OK")
</pallas_src>

<mosaic_0001>
module attributes {stable_mosaic.version = 11 : i64} {
  func.func @cgan_kernel(%arg0: memref<8x128xbf16, #tpu.memory_space<vmem>>, %arg1: memref<128x128xbf16, #tpu.memory_space<vmem>>, %arg2: memref<128x256xbf16, #tpu.memory_space<vmem>>, %arg3: memref<256x512xbf16, #tpu.memory_space<vmem>>, %arg4: memref<512x1024xbf16, #tpu.memory_space<vmem>>, %arg5: memref<1024x896xbf16, #tpu.memory_space<vmem>>, %arg6: memref<1x6400xf32, #tpu.memory_space<vmem>>, %arg7: memref<8x896xf32, #tpu.memory_space<vmem>>) attributes {dimension_semantics = [], scalar_prefetch = 0 : i64, scratch_operands = 0 : i64, tpu.core_type = #tpu.core_type<tc>} {
    %c0 = arith.constant 0 : index
    %c0_0 = arith.constant 0 : index
    %0 = vector.load %arg0[%c0, %c0_0] : memref<8x128xbf16, #tpu.memory_space<vmem>>, vector<8x128xbf16>
    %c0_1 = arith.constant 0 : index
    %c0_2 = arith.constant 0 : index
    %1 = vector.load %arg1[%c0_1, %c0_2] : memref<128x128xbf16, #tpu.memory_space<vmem>>, vector<128x128xbf16>
    %cst = arith.constant dense<0.000000e+00> : vector<8x128xf32>
    %2 = tpu.matmul %0, %1, %cst {dimension_numbers = #tpu.dot_dimension_numbers<[1], [0], [0], [1], [0, 0, 1, 1], [], []>} : vector<8x128xbf16>, vector<128x128xbf16>, vector<8x128xf32> -> vector<8x128xf32>
    %c0_3 = arith.constant 0 : index
    %c0_4 = arith.constant 0 : index
    %3 = vector.load %arg6[%c0_3, %c0_4] : memref<1x6400xf32, #tpu.memory_space<vmem>>, vector<1x128xf32>
    %4 = vector.broadcast %3 : vector<1x128xf32> to vector<8x128xf32>
    %5 = arith.addf %2, %4 : vector<8x128xf32>
    %cst_5 = arith.constant 0.000000e+00 : f32
    %6 = vector.broadcast %cst_5 : f32 to vector<8x128xf32>
    %7 = arith.cmpf ogt, %5, %6 : vector<8x128xf32>
    %cst_6 = arith.constant 2.000000e-01 : f32
    %8 = vector.broadcast %cst_6 : f32 to vector<8x128xf32>
    %9 = arith.mulf %8, %5 : vector<8x128xf32>
    %10 = arith.select %7, %5, %9 : vector<8x128xi1>, vector<8x128xf32>
    %11 = arith.truncf %10 : vector<8x128xf32> to vector<8x128xbf16>
    %c0_7 = arith.constant 0 : index
    %c0_8 = arith.constant 0 : index
    %12 = vector.load %arg2[%c0_7, %c0_8] : memref<128x256xbf16, #tpu.memory_space<vmem>>, vector<128x256xbf16>
    %cst_9 = arith.constant dense<0.000000e+00> : vector<8x256xf32>
    %13 = tpu.matmul %11, %12, %cst_9 {dimension_numbers = #tpu.dot_dimension_numbers<[1], [0], [0], [1], [0, 0, 1, 1], [], []>} : vector<8x128xbf16>, vector<128x256xbf16>, vector<8x256xf32> -> vector<8x256xf32>
    %c0_10 = arith.constant 0 : index
    %c128 = arith.constant 128 : index
    %14 = vector.load %arg6[%c0_10, %c128] : memref<1x6400xf32, #tpu.memory_space<vmem>>, vector<1x256xf32>
    %15 = vector.broadcast %14 : vector<1x256xf32> to vector<8x256xf32>
    %16 = arith.addf %13, %15 : vector<8x256xf32>
    %cst_11 = arith.constant 0.000000e+00 : f32
    %17 = vector.broadcast %cst_11 : f32 to vector<8x256xf32>
    %18 = arith.cmpf ogt, %16, %17 : vector<8x256xf32>
    %cst_12 = arith.constant 2.000000e-01 : f32
    %19 = vector.broadcast %cst_12 : f32 to vector<8x256xf32>
    %20 = arith.mulf %19, %16 : vector<8x256xf32>
    %21 = arith.select %18, %16, %20 : vector<8x256xi1>, vector<8x256xf32>
    %c0_13 = arith.constant 0 : index
    %c384 = arith.constant 384 : index
    %22 = vector.load %arg6[%c0_13, %c384] : memref<1x6400xf32, #tpu.memory_space<vmem>>, vector<1x256xf32>
    %c0_14 = arith.constant 0 : index
    %c640 = arith.constant 640 : index
    %23 = vector.load %arg6[%c0_14, %c640] : memref<1x6400xf32, #tpu.memory_space<vmem>>, vector<1x256xf32>
    %cst_15 = arith.constant dense<0.000000e+00> : vector<256xf32>
    %24 = vector.multi_reduction <add>, %21, %cst_15 [0] : vector<8x256xf32> to vector<256xf32>
    %25 = vector.shape_cast %24 : vector<256xf32> to vector<1x256xf32>
    %cst_16 = arith.constant 8.000000e+00 : f32
    %26 = vector.broadcast %cst_16 : f32 to vector<1x256xf32>
    %27 = arith.divf %25, %26 : vector<1x256xf32>
    %28 = vector.broadcast %27 : vector<1x256xf32> to vector<8x256xf32>
    %29 = arith.subf %21, %28 : vector<8x256xf32>
    %30 = vector.broadcast %27 : vector<1x256xf32> to vector<8x256xf32>
    %31 = arith.subf %21, %30 : vector<8x256xf32>
    %32 = arith.mulf %29, %31 : vector<8x256xf32>
    %cst_17 = arith.constant dense<0.000000e+00> : vector<256xf32>
    %33 = vector.multi_reduction <add>, %32, %cst_17 [0] : vector<8x256xf32> to vector<256xf32>
    %34 = vector.shape_cast %33 : vector<256xf32> to vector<1x256xf32>
    %cst_18 = arith.constant 8.000000e+00 : f32
    %35 = vector.broadcast %cst_18 : f32 to vector<1x256xf32>
    %36 = arith.divf %34, %35 : vector<1x256xf32>
    %37 = vector.broadcast %27 : vector<1x256xf32> to vector<8x256xf32>
    %38 = arith.subf %21, %37 : vector<8x256xf32>
    %cst_19 = arith.constant 8.000000e-01 : f32
    %39 = vector.broadcast %cst_19 : f32 to vector<1x256xf32>
    %40 = arith.addf %36, %39 : vector<1x256xf32>
    %41 = math.rsqrt %40 : vector<1x256xf32>
    %42 = vector.broadcast %41 : vector<1x256xf32> to vector<8x256xf32>
    %43 = arith.mulf %38, %42 : vector<8x256xf32>
    %44 = vector.broadcast %22 : vector<1x256xf32> to vector<8x256xf32>
    %45 = arith.mulf %43, %44 : vector<8x256xf32>
    %46 = vector.broadcast %23 : vector<1x256xf32> to vector<8x256xf32>
    %47 = arith.addf %45, %46 : vector<8x256xf32>
    %48 = arith.truncf %47 : vector<8x256xf32> to vector<8x256xbf16>
    %c0_20 = arith.constant 0 : index
    %c0_21 = arith.constant 0 : index
    %49 = vector.load %arg3[%c0_20, %c0_21] : memref<256x512xbf16, #tpu.memory_space<vmem>>, vector<256x512xbf16>
    %cst_22 = arith.constant dense<0.000000e+00> : vector<8x512xf32>
    %50 = tpu.matmul %48, %49, %cst_22 {dimension_numbers = #tpu.dot_dimension_numbers<[1], [0], [0], [1], [0, 0, 1, 1], [], []>} : vector<8x256xbf16>, vector<256x512xbf16>, vector<8x512xf32> -> vector<8x512xf32>
    %c0_23 = arith.constant 0 : index
    %c896 = arith.constant 896 : index
    %51 = vector.load %arg6[%c0_23, %c896] : memref<1x6400xf32, #tpu.memory_space<vmem>>, vector<1x512xf32>
    %52 = vector.broadcast %51 : vector<1x512xf32> to vector<8x512xf32>
    %53 = arith.addf %50, %52 : vector<8x512xf32>
    %cst_24 = arith.constant 0.000000e+00 : f32
    %54 = vector.broadcast %cst_24 : f32 to vector<8x512xf32>
    %55 = arith.cmpf ogt, %53, %54 : vector<8x512xf32>
    %cst_25 = arith.constant 2.000000e-01 : f32
    %56 = vector.broadcast %cst_25 : f32 to vector<8x512xf32>
    %57 = arith.mulf %56, %53 : vector<8x512xf32>
    %58 = arith.select %55, %53, %57 : vector<8x512xi1>, vector<8x512xf32>
    %c0_26 = arith.constant 0 : index
    %c1408 = arith.constant 1408 : index
    %59 = vector.load %arg6[%c0_26, %c1408] : memref<1x6400xf32, #tpu.memory_space<vmem>>, vector<1x512xf32>
    %c0_27 = arith.constant 0 : index
    %c1920 = arith.constant 1920 : index
    %60 = vector.load %arg6[%c0_27, %c1920] : memref<1x6400xf32, #tpu.memory_space<vmem>>, vector<1x512xf32>
    %cst_28 = arith.constant dense<0.000000e+00> : vector<512xf32>
    %61 = vector.multi_reduction <add>, %58, %cst_28 [0] : vector<8x512xf32> to vector<512xf32>
    %62 = vector.shape_cast %61 : vector<512xf32> to vector<1x512xf32>
    %cst_29 = arith.constant 8.000000e+00 : f32
    %63 = vector.broadcast %cst_29 : f32 to vector<1x512xf32>
    %64 = arith.divf %62, %63 : vector<1x512xf32>
    %65 = vector.broadcast %64 : vector<1x512xf32> to vector<8x512xf32>
    %66 = arith.subf %58, %65 : vector<8x512xf32>
    %67 = vector.broadcast %64 : vector<1x512xf32> to vector<8x512xf32>
    %68 = arith.subf %58, %67 : vector<8x512xf32>
    %69 = arith.mulf %66, %68 : vector<8x512xf32>
    %cst_30 = arith.constant dense<0.000000e+00> : vector<512xf32>
    %70 = vector.multi_reduction <add>, %69, %cst_30 [0] : vector<8x512xf32> to vector<512xf32>
    %71 = vector.shape_cast %70 : vector<512xf32> to vector<1x512xf32>
    %cst_31 = arith.constant 8.000000e+00 : f32
    %72 = vector.broadcast %cst_31 : f32 to vector<1x512xf32>
    %73 = arith.divf %71, %72 : vector<1x512xf32>
    %74 = vector.broadcast %64 : vector<1x512xf32> to vector<8x512xf32>
    %75 = arith.subf %58, %74 : vector<8x512xf32>
    %cst_32 = arith.constant 8.000000e-01 : f32
    %76 = vector.broadcast %cst_32 : f32 to vector<1x512xf32>
    %77 = arith.addf %73, %76 : vector<1x512xf32>
    %78 = math.rsqrt %77 : vector<1x512xf32>
    %79 = vector.broadcast %78 : vector<1x512xf32> to vector<8x512xf32>
    %80 = arith.mulf %75, %79 : vector<8x512xf32>
    %81 = vector.broadcast %59 : vector<1x512xf32> to vector<8x512xf32>
    %82 = arith.mulf %80, %81 : vector<8x512xf32>
    %83 = vector.broadcast %60 : vector<1x512xf32> to vector<8x512xf32>
    %84 = arith.addf %82, %83 : vector<8x512xf32>
    %85 = arith.truncf %84 : vector<8x512xf32> to vector<8x512xbf16>
    %c0_33 = arith.constant 0 : index
    %c0_34 = arith.constant 0 : index
    %86 = vector.load %arg4[%c0_33, %c0_34] : memref<512x1024xbf16, #tpu.memory_space<vmem>>, vector<512x1024xbf16>
    %cst_35 = arith.constant dense<0.000000e+00> : vector<8x1024xf32>
    %87 = tpu.matmul %85, %86, %cst_35 {dimension_numbers = #tpu.dot_dimension_numbers<[1], [0], [0], [1], [0, 0, 1, 1], [], []>} : vector<8x512xbf16>, vector<512x1024xbf16>, vector<8x1024xf32> -> vector<8x1024xf32>
    %c0_36 = arith.constant 0 : index
    %c2432 = arith.constant 2432 : index
    %88 = vector.load %arg6[%c0_36, %c2432] : memref<1x6400xf32, #tpu.memory_space<vmem>>, vector<1x1024xf32>
    %89 = vector.broadcast %88 : vector<1x1024xf32> to vector<8x1024xf32>
    %90 = arith.addf %87, %89 : vector<8x1024xf32>
    %cst_37 = arith.constant 0.000000e+00 : f32
    %91 = vector.broadcast %cst_37 : f32 to vector<8x1024xf32>
    %92 = arith.cmpf ogt, %90, %91 : vector<8x1024xf32>
    %cst_38 = arith.constant 2.000000e-01 : f32
    %93 = vector.broadcast %cst_38 : f32 to vector<8x1024xf32>
    %94 = arith.mulf %93, %90 : vector<8x1024xf32>
    %95 = arith.select %92, %90, %94 : vector<8x1024xi1>, vector<8x1024xf32>
    %c0_39 = arith.constant 0 : index
    %c3456 = arith.constant 3456 : index
    %96 = vector.load %arg6[%c0_39, %c3456] : memref<1x6400xf32, #tpu.memory_space<vmem>>, vector<1x1024xf32>
    %c0_40 = arith.constant 0 : index
    %c4480 = arith.constant 4480 : index
    %97 = vector.load %arg6[%c0_40, %c4480] : memref<1x6400xf32, #tpu.memory_space<vmem>>, vector<1x1024xf32>
    %cst_41 = arith.constant dense<0.000000e+00> : vector<1024xf32>
    %98 = vector.multi_reduction <add>, %95, %cst_41 [0] : vector<8x1024xf32> to vector<1024xf32>
    %99 = vector.shape_cast %98 : vector<1024xf32> to vector<1x1024xf32>
    %cst_42 = arith.constant 8.000000e+00 : f32
    %100 = vector.broadcast %cst_42 : f32 to vector<1x1024xf32>
    %101 = arith.divf %99, %100 : vector<1x1024xf32>
    %102 = vector.broadcast %101 : vector<1x1024xf32> to vector<8x1024xf32>
    %103 = arith.subf %95, %102 : vector<8x1024xf32>
    %104 = vector.broadcast %101 : vector<1x1024xf32> to vector<8x1024xf32>
    %105 = arith.subf %95, %104 : vector<8x1024xf32>
    %106 = arith.mulf %103, %105 : vector<8x1024xf32>
    %cst_43 = arith.constant dense<0.000000e+00> : vector<1024xf32>
    %107 = vector.multi_reduction <add>, %106, %cst_43 [0] : vector<8x1024xf32> to vector<1024xf32>
    %108 = vector.shape_cast %107 : vector<1024xf32> to vector<1x1024xf32>
    %cst_44 = arith.constant 8.000000e+00 : f32
    %109 = vector.broadcast %cst_44 : f32 to vector<1x1024xf32>
    %110 = arith.divf %108, %109 : vector<1x1024xf32>
    %111 = vector.broadcast %101 : vector<1x1024xf32> to vector<8x1024xf32>
    %112 = arith.subf %95, %111 : vector<8x1024xf32>
    %cst_45 = arith.constant 8.000000e-01 : f32
    %113 = vector.broadcast %cst_45 : f32 to vector<1x1024xf32>
    %114 = arith.addf %110, %113 : vector<1x1024xf32>
    %115 = math.rsqrt %114 : vector<1x1024xf32>
    %116 = vector.broadcast %115 : vector<1x1024xf32> to vector<8x1024xf32>
    %117 = arith.mulf %112, %116 : vector<8x1024xf32>
    %118 = vector.broadcast %96 : vector<1x1024xf32> to vector<8x1024xf32>
    %119 = arith.mulf %117, %118 : vector<8x1024xf32>
    %120 = vector.broadcast %97 : vector<1x1024xf32> to vector<8x1024xf32>
    %121 = arith.addf %119, %120 : vector<8x1024xf32>
    %122 = arith.truncf %121 : vector<8x1024xf32> to vector<8x1024xbf16>
    %c0_46 = arith.constant 0 : index
    %c0_47 = arith.constant 0 : index
    %123 = vector.load %arg5[%c0_46, %c0_47] : memref<1024x896xbf16, #tpu.memory_space<vmem>>, vector<1024x896xbf16>
    %cst_48 = arith.constant dense<0.000000e+00> : vector<8x896xf32>
    %124 = tpu.matmul %122, %123, %cst_48 {dimension_numbers = #tpu.dot_dimension_numbers<[1], [0], [0], [1], [0, 0, 1, 1], [], []>} : vector<8x1024xbf16>, vector<1024x896xbf16>, vector<8x896xf32> -> vector<8x896xf32>
    %c0_49 = arith.constant 0 : index
    %c5504 = arith.constant 5504 : index
    %125 = vector.load %arg6[%c0_49, %c5504] : memref<1x6400xf32, #tpu.memory_space<vmem>>, vector<1x896xf32>
    %126 = vector.broadcast %125 : vector<1x896xf32> to vector<8x896xf32>
    %127 = arith.addf %124, %126 : vector<8x896xf32>
    %128 = math.tanh %127 : vector<8x896xf32>
    %c0_50 = arith.constant 0 : index
    %c0_51 = arith.constant 0 : index
    %129 = vector.load %arg7[%c0_50, %c0_51] : memref<8x896xf32, #tpu.memory_space<vmem>>, vector<8x896xf32>
    tpu.vector_store %arg7[%c0_50, %c0_51], %128 {strides = array<i32>} : memref<8x896xf32, #tpu.memory_space<vmem>>, vector<8x896xf32>,
    return
  }
}

</mosaic_0001>

<llo_original>
// kernel: cgan_forward.1
$region0: #{cgan_forward.1}
  #allocation0 [shape = 'u32[]', space=smem, size = 0x4, offset = 0x4, fixed_abs, tag = 'smem constant byte address 0x4 - core index']
  #allocation1 [shape = 'u32[144,128]{1,0:T(1,128)}', space=vmem, size = 0x12000, scoped, tag = 'internal scratch']
  %s0 = inlined_call_operand.vmem [shape: bf16[8,128], index: 0, kind: input, shape index: {}]
  %s1 = inlined_call_operand.hbm [shape: bf16[128,128], index: 1, kind: input, shape index: {}]
  %s2 = inlined_call_operand.hbm [shape: bf16[128,256], index: 2, kind: input, shape index: {}]
  %s3 = inlined_call_operand.hbm [shape: bf16[256,512], index: 3, kind: input, shape index: {}]
  %s4 = inlined_call_operand.hbm [shape: bf16[512,1024], index: 4, kind: input, shape index: {}]
  %s5 = inlined_call_operand.hbm [shape: bf16[1024,896], index: 5, kind: input, shape index: {}]
  %s6 = inlined_call_operand.hbm [shape: f32[1,6400], index: 6, kind: input, shape index: {}]
  %s7 = inlined_call_operand.vmem [shape: f32[8,896], index: 7, kind: output, shape index: {}]
  %s8 = sld [smem:[#allocation0]]
  $region62: #{cgan_forward.1} parent=0
    _
  %s10 = ssub.s32 1, %s8
  %s11 = scalar_select 0, %s10, %s8
  $region1: #{cgan_forward.1} parent=0
    #allocation2 [shape = 'u8[32768]{0}', space=vmem, size = 0x8000, scoped, tag = 'input window, operand 1, single buffered']
    #allocation3 [shape = 's32[1]{0}', space=sflag, size = 0x4, scoped, tag = 'scoped memory for cgan_forward.1']
    #allocation4 [shape = 'u8[65536]{0}', space=vmem, size = 0x10000, scoped, tag = 'input window, operand 2, single buffered']
    #allocation5 [shape = 's32[1]{0}', space=sflag, size = 0x4, scoped, tag = 'scoped memory for cgan_forward.1']
    #allocation6 [shape = 'u8[262144]{0}', space=vmem, size = 0x40000, scoped, tag = 'input window, operand 3, single buffered']
    #allocation7 [shape = 'u8[1048576]{0}', space=vmem, size = 0x100000, scoped, tag = 'input window, operand 4, single buffered']
    #allocation8 [shape = 's32[1]{0}', space=sflag, size = 0x4, scoped, tag = 'scoped memory for cgan_forward.1']
    #allocation9 [shape = 'u8[1835008]{0}', space=vmem, size = 0x1c0000, scoped, tag = 'input window, operand 5, single buffered']
    #allocation10 [shape = 'u8[25600]{0}', space=vmem, size = 0x6400, scoped, tag = 'input window, operand 6, single buffered']
    #allocation11 [shape = 's32[1]{0}', space=sflag, size = 0x4, scoped, tag = 'scoped memory for cgan_forward.1']
    %12 = vsyncpa [#allocation3], 0
    %13 = vsyncpa [#allocation5], 0
    %14 = vsyncpa [#allocation8], 0
    %15 = vsyncpa [#allocation11], 0
    // Predicated region
    $region2: #{cgan_forward.1} parent=1 // pred_check
      _
    $region3: #{cgan_forward.1} parent=1 // pred_check_branch
      %17 = sbr.rel (0) target = $region5
    $region4: #{cgan_forward.1} parent=1 // pred_region
      _
    $region5: #{cgan_forward.1} parent=1 // pred_fallthru
      _
    // Predicated region
    $region6: #{cgan_forward.1} parent=1 // pred_check
      _
    $region7: #{cgan_forward.1} parent=1 // pred_check_branch
      %19 = sbr.rel (0) target = $region9
    $region8: #{cgan_forward.1} parent=1 // pred_region
      %s21 = ssub.s32 1024, 1024
      %22 = vsyncadd [#allocation3], %s21
      %s23 = sshll.u32 [#allocation2], 4
      %s24 = int_to_ptr.vmem [resolvable:$true] %s23
      %29 = dma.hbm_to_vmem [thread:$0]  %s1, 1024, %s24, [#allocation3], 64, 64, 4
    $region9: #{cgan_forward.1} parent=1 // pred_fallthru
      _
    // Predicated region
    $region10: #{cgan_forward.1} parent=1 // pred_check
      _
    $region11: #{cgan_forward.1} parent=1 // pred_check_branch
      %31 = sbr.rel (0) target = $region13
    $region12: #{cgan_forward.1} parent=1 // pred_region
      %s33 = ssub.s32 2048, 2048
      %34 = vsyncadd [#allocation5], %s33
      %s35 = sshll.u32 [#allocation4], 4
      %s36 = int_to_ptr.vmem [resolvable:$true] %s35
      %41 = dma.hbm_to_vmem [thread:$0]  %s2, 2048, %s36, [#allocation5], 128, 128, 8
    $region13: #{cgan_forward.1} parent=1 // pred_fallthru
      _
    // Predicated region
    $region14: #{cgan_forward.1} parent=1 // pred_check
      _
    $region15: #{cgan_forward.1} parent=1 // pred_check_branch
      %43 = sbr.rel (0) target = $region17
    $region16: #{cgan_forward.1} parent=1 // pred_region
      %s45 = ssub.s32 8192, 8192
      %46 = vsyncadd [#allocation5], %s45
      %s47 = sshll.u32 [#allocation6], 4
      %s48 = int_to_ptr.vmem [resolvable:$true] %s47
      %53 = dma.hbm_to_vmem [thread:$0]  %s3, 8192, %s48, [#allocation5], 256, 256, 16
    $region17: #{cgan_forward.1} parent=1 // pred_fallthru
      _
    // Predicated region
    $region18: #{cgan_forward.1} parent=1 // pred_check
      _
    $region19: #{cgan_forward.1} parent=1 // pred_check_branch
      %55 = sbr.rel (0) target = $region21
    $region20: #{cgan_forward.1} parent=1 // pred_region
      %s57 = ssub.s32 32768, 32768
      %58 = vsyncadd [#allocation8], %s57
      %s59 = sshll.u32 [#allocation7], 4
      %s60 = int_to_ptr.vmem [resolvable:$true] %s59
      %65 = dma.hbm_to_vmem [thread:$0]  %s4, 32768, %s60, [#allocation8], 512, 512, 32
    $region21: #{cgan_forward.1} parent=1 // pred_fallthru
      _
    // Predicated region
    $region22: #{cgan_forward.1} parent=1 // pred_check
      _
    $region23: #{cgan_forward.1} parent=1 // pred_check_branch
      %67 = sbr.rel (0) target = $region25
    $region24: #{cgan_forward.1} parent=1 // pred_region
      %s69 = ssub.s32 57344, 57344
      %70 = vsyncadd [#allocation8], %s69
      %s71 = sshll.u32 [#allocation9], 4
      %s72 = int_to_ptr.vmem [resolvable:$true] %s71
      %77 = dma.hbm_to_vmem [thread:$0]  %s5, 57344, %s72, [#allocation8], 448, 448, 28
    $region25: #{cgan_forward.1} parent=1 // pred_fallthru
      _
    // Predicated region
    $region26: #{cgan_forward.1} parent=1 // pred_check
      _
    $region27: #{cgan_forward.1} parent=1 // pred_check_branch
      %79 = sbr.rel (0) target = $region29
    $region28: #{cgan_forward.1} parent=1 // pred_region
      %s81 = ssub.s32 800, 800
      %82 = vsyncadd [#allocation11], %s81
      %s84 = sshll.u32 [#allocation10], 4
      %s85 = int_to_ptr.vmem [resolvable:$true] %s84
      %87 = dma.hbm_to_vmem [thread:$0]  %s6, 800, %s85, [#allocation11]
    $region29: #{cgan_forward.1} parent=1 // pred_fallthru
      _
    // Predicated region
    $region30: #{cgan_forward.1} parent=1 // pred_check
      _
    $region31: #{cgan_forward.1} parent=1 // pred_check_branch
      %89 = sbr.rel (0) target = $region33
    $region32: #{cgan_forward.1} parent=1 // pred_region
      %90 = dma.done [#allocation3], 1024
    $region33: #{cgan_forward.1} parent=1 // pred_fallthru
      _
    // Predicated region
    $region34: #{cgan_forward.1} parent=1 // pred_check
      _
    $region35: #{cgan_forward.1} parent=1 // pred_check_branch
      %92 = sbr.rel (0) target = $region37
    $region36: #{cgan_forward.1} parent=1 // pred_region
      %93 = dma.done [#allocation5], 2048
    $region37: #{cgan_forward.1} parent=1 // pred_fallthru
      _
    // Predicated region
    $region38: #{cgan_forward.1} parent=1 // pred_check
      _
    $region39: #{cgan_forward.1} parent=1 // pred_check_branch
      %95 = sbr.rel (0) target = $region41
    $region40: #{cgan_forward.1} parent=1 // pred_region
      %96 = dma.done [#allocation5], 8192
    $region41: #{cgan_forward.1} parent=1 // pred_fallthru
      _
    // Predicated region
    $region42: #{cgan_forward.1} parent=1 // pred_check
      _
    $region43: #{cgan_forward.1} parent=1 // pred_check_branch
      %98 = sbr.rel (0) target = $region45
    $region44: #{cgan_forward.1} parent=1 // pred_region
      %99 = dma.done [#allocation8], 32768
    $region45: #{cgan_forward.1} parent=1 // pred_fallthru
      _
    // Predicated region
    $region46: #{cgan_forward.1} parent=1 // pred_check
      _
    $region47: #{cgan_forward.1} parent=1 // pred_check_branch
      %101 = sbr.rel (0) target = $region49
    $region48: #{cgan_forward.1} parent=1 // pred_region
      %102 = dma.done [#allocation8], 57344
    $region49: #{cgan_forward.1} parent=1 // pred_fallthru
      _
    // Predicated region
    $region50: #{cgan_forward.1} parent=1 // pred_check
      _
    $region51: #{cgan_forward.1} parent=1 // pred_check_branch
      %104 = sbr.rel (0) target = $region53
    $region52: #{cgan_forward.1} parent=1 // pred_region
      %105 = dma.done [#allocation11], 800
    $region53: #{cgan_forward.1} parent=1 // pred_fallthru
      _
    %v107 = vld [vmem:[%s0] sm:$0xf]
    %v108 = vld [vmem:[#allocation2] sm:$0xf]
    %v109 = vld [vmem:[#allocation2 + $0x4] sm:$0xf]
    %v110 = vld [vmem:[#allocation2 + $0x8] sm:$0xf]
    %v111 = vld [vmem:[#allocation2 + $0xc] sm:$0xf]
    %v112 = vld [vmem:[#allocation2 + $0x10] sm:$0xf]
    %v113 = vld [vmem:[#allocation2 + $0x14] sm:$0xf]
    %v114 = vld [vmem:[#allocation2 + $0x18] sm:$0xf]
    %v115 = vld [vmem:[#allocation2 + $0x1c] sm:$0xf]
    %v116 = vld [vmem:[#allocation2 + $0x20] sm:$0xf]
    %v117 = vld [vmem:[#allocation2 + $0x24] sm:$0xf]
    %v118 = vld [vmem:[#allocation2 + $0x28] sm:$0xf]
    %v119 = vld [vmem:[#allocation2 + $0x2c] sm:$0xf]
    %v120 = vld [vmem:[#allocation2 + $0x30] sm:$0xf]
    %v121 = vld [vmem:[#allocation2 + $0x34] sm:$0xf]
    %v122 = vld [vmem:[#allocation2 + $0x38] sm:$0xf]
    %v123 = vld [vmem:[#allocation2 + $0x3c] sm:$0xf]
    %v124 = vld [vmem:[#allocation10] sm:$0x1]
    %v126 = vlaneseq
    %v127 = vshrl.u32 %v126, 7
    %v128 = vsub.s32 0, %v127
    %v129 = vrot.slane %v124, %v128
    %v147 = vunpack.c.l.b16 %v108
    %v148 = vunpack.c.l.b16 %v109
    %v149 = vunpack.c.l.b16 %v110
    %v150 = vunpack.c.l.b16 %v111
    %v151 = vunpack.c.l.b16 %v112
    %v152 = vunpack.c.l.b16 %v113
    %v153 = vunpack.c.l.b16 %v114
    %v154 = vunpack.c.l.b16 %v115
    %v155 = vunpack.c.l.b16 %v116
    %v156 = vunpack.c.l.b16 %v117
    %v157 = vunpack.c.l.b16 %v118
    %v158 = vunpack.c.l.b16 %v119
    %v159 = vunpack.c.l.b16 %v120
    %v160 = vunpack.c.l.b16 %v121
    %v161 = vunpack.c.l.b16 %v122
    %v162 = vunpack.c.l.b16 %v123
    %v163 = vpack.c.b16 %v148, %v147
    %v164 = vpack.c.b16 %v150, %v149
    %v165 = vpack.c.b16 %v152, %v151
    %v166 = vpack.c.b16 %v154, %v153
    %v167 = vpack.c.b16 %v156, %v155
    %v168 = vpack.c.b16 %v158, %v157
    %v169 = vpack.c.b16 %v160, %v159
    %v170 = vpack.c.b16 %v162, %v161
    %179 = vmatprep.subr.bf16.mxu0 0
    %180 = vmatpush1.bf16.msra.mxu0 %v163
    %181 = vmatprep.subr.bf16.mxu0 0
    %182 = vmatpush1.bf16.msra.mxu0 %v164
    %183 = vmatprep.subr.bf16.mxu0 0
    %184 = vmatpush1.bf16.msra.mxu0 %v165
    %185 = vmatprep.subr.bf16.mxu0 0
    %186 = vmatpush1.bf16.msra.mxu0 %v166
    %187 = vmatprep.subr.bf16.mxu0 0
    %188 = vmatpush1.bf16.msra.mxu0 %v167
    %189 = vmatprep.subr.bf16.mxu0 0
    %190 = vmatpush1.bf16.msra.mxu0 %v168
    %191 = vmatprep.subr.bf16.mxu0 0
    %192 = vmatpush1.bf16.msra.mxu0 %v169
    %193 = vmatprep.subr.bf16.mxu0 0
    %194 = vmatpush1.bf16.msra.mxu0 %v170
    %195 = vmatprep.subr.bf16.mxu0 0
    %196 = vmatpush1.bf16.msra.mxu0 0
    %197 = vmatprep.subr.bf16.mxu0 0
    %198 = vmatpush1.bf16.msra.mxu0 0
    %199 = vmatprep.subr.bf16.mxu0 0
    %200 = vmatpush1.bf16.msra.mxu0 0
    %201 = vmatprep.subr.bf16.mxu0 0
    %202 = vmatpush1.bf16.msra.mxu0 0
    %203 = vmatprep.subr.bf16.mxu0 0
    %204 = vmatpush1.bf16.msra.mxu0 0
    %205 = vmatprep.subr.bf16.mxu0 0
    %206 = vmatpush1.bf16.msra.mxu0 0
    %207 = vmatprep.subr.bf16.mxu0 0
    %208 = vmatpush1.bf16.msra.mxu0 0
    %209 = vmatprep.subr.bf16.mxu0 0
    %210 = vmatpush1.bf16.msra.mxu0 0
    %211 = vmatprep.mubr.bf16.mxu0 0
    %212 = vmatmul.mubr.bf16.gmra.mrb[0].mxu0 %v107
    %v213 = vpop.f32.mrb[0].mxu0
    %v214 = vadd.f32 %v129, %v213
    %v215 = vpop.f32.mrb[0].mxu0
    %v216 = vpop.f32.mrb[0].mxu0
    %v217 = vpop.f32.mrb[0].mxu0
    %218 = vdwg.mxu0
    %vm219 = vcmp.gt.f32.partialorder %v214, 0.0
    %v220 = vmul.f32 %v214, 0.2
    %v221 = vsel %vm219, %v214, %v220
    %v222 = vpack.c.bf16 %v221, %v221
    %v223 = vld [vmem:[#allocation4] sm:$0xff]
    %v224 = vld [vmem:[#allocation4 + $0x8] sm:$0xff]
    %v225 = vld [vmem:[#allocation4 + $0x10] sm:$0xff]
    %v226 = vld [vmem:[#allocation4 + $0x18] sm:$0xff]
    %v227 = vld [vmem:[#allocation4 + $0x20] sm:$0xff]
    %v228 = vld [vmem:[#allocation4 + $0x28] sm:$0xff]
    %v229 = vld [vmem:[#allocation4 + $0x30] sm:$0xff]
    %v230 = vld [vmem:[#allocation4 + $0x38] sm:$0xff]
    %v231 = vld [vmem:[#allocation4 + $0x40] sm:$0xff]
    %v232 = vld [vmem:[#allocation4 + $0x48] sm:$0xff]
    %v233 = vld [vmem:[#allocation4 + $0x50] sm:$0xff]
    %v234 = vld [vmem:[#allocation4 + $0x58] sm:$0xff]
    %v235 = vld [vmem:[#allocation4 + $0x60] sm:$0xff]
    %v236 = vld [vmem:[#allocation4 + $0x68] sm:$0xff]
    %v237 = vld [vmem:[#allocation4 + $0x70] sm:$0xff]
    %v238 = vld [vmem:[#allocation4 + $0x78] sm:$0xff]
    %v239 = vld [vmem:[#allocation10 + $0x1] sm:$0x3]
    %v241 = vlaneseq
    %v242 = vshrl.u32 %v241, 7
    %v243 = vsub.s32 0, %v242
    %v244 = vrot.slane %v239, %v243
    %v245 = vlaneseq
    %v246 = vshrl.u32 %v245, 7
    %v247 = vsub.s32 1, %v246
    %v248 = vrot.slane %v239, %v247
    %v267 = vunpack.c.l.b16 %v223
    %v268 = vunpack.c.h.b16 %v223
    %v269 = vunpack.c.l.b16 %v224
    %v270 = vunpack.c.h.b16 %v224
    %v271 = vunpack.c.l.b16 %v225
    %v272 = vunpack.c.h.b16 %v225
    %v273 = vunpack.c.l.b16 %v226
    %v274 = vunpack.c.h.b16 %v226
    %v275 = vunpack.c.l.b16 %v227
    %v276 = vunpack.c.h.b16 %v227
    %v277 = vunpack.c.l.b16 %v228
    %v278 = vunpack.c.h.b16 %v228
    %v279 = vunpack.c.l.b16 %v229
    %v280 = vunpack.c.h.b16 %v229
    %v281 = vunpack.c.l.b16 %v230
    %v282 = vunpack.c.h.b16 %v230
    %v283 = vunpack.c.l.b16 %v231
    %v284 = vunpack.c.h.b16 %v231
    %v285 = vunpack.c.l.b16 %v232
    %v286 = vunpack.c.h.b16 %v232
    %v287 = vunpack.c.l.b16 %v233
    %v288 = vunpack.c.h.b16 %v233
    %v289 = vunpack.c.l.b16 %v234
    %v290 = vunpack.c.h.b16 %v234
    %v291 = vunpack.c.l.b16 %v235
    %v292 = vunpack.c.h.b16 %v235
    %v293 = vunpack.c.l.b16 %v236
    %v294 = vunpack.c.h.b16 %v236
    %v295 = vunpack.c.l.b16 %v237
    %v296 = vunpack.c.h.b16 %v237
    %v297 = vunpack.c.l.b16 %v238
    %v298 = vunpack.c.h.b16 %v238
    %v299 = vpack.c.b16 %v269, %v267
    %v300 = vpack.c.b16 %v270, %v268
    %v301 = vpack.c.b16 %v273, %v271
    %v302 = vpack.c.b16 %v274, %v272
    %v303 = vpack.c.b16 %v277, %v275
    %v304 = vpack.c.b16 %v278, %v276
    %v305 = vpack.c.b16 %v281, %v279
    %v306 = vpack.c.b16 %v282, %v280
    %v307 = vpack.c.b16 %v285, %v283
    %v308 = vpack.c.b16 %v286, %v284
    %v309 = vpack.c.b16 %v289, %v287
    %v310 = vpack.c.b16 %v290, %v288
    %v311 = vpack.c.b16 %v293, %v291
    %v312 = vpack.c.b16 %v294, %v292
    %v313 = vpack.c.b16 %v297, %v295
    %v314 = vpack.c.b16 %v298, %v296
    %331 = vmatprep.subr.bf16.mxu0 %v300
    %332 = vmatpush1.bf16.msra.mxu0 %v299
    %333 = vmatprep.subr.bf16.mxu0 %v302
    %334 = vmatpush1.bf16.msra.mxu0 %v301
    %335 = vmatprep.subr.bf16.mxu0 %v304
    %336 = vmatpush1.bf16.msra.mxu0 %v303
    %337 = vmatprep.subr.bf16.mxu0 %v306
    %338 = vmatpush1.bf16.msra.mxu0 %v305
    %339 = vmatprep.subr.bf16.mxu0 %v308
    %340 = vmatpush1.bf16.msra.mxu0 %v307
    %341 = vmatprep.subr.bf16.mxu0 %v310
    %342 = vmatpush1.bf16.msra.mxu0 %v309
    %343 = vmatprep.subr.bf16.mxu0 %v312
    %344 = vmatpush1.bf16.msra.mxu0 %v311
    %345 = vmatprep.subr.bf16.mxu0 %v314
    %346 = vmatpush1.bf16.msra.mxu0 %v313
    %347 = vmatprep.subr.bf16.mxu0 0
    %348 = vmatpush1.bf16.msra.mxu0 0
    %349 = vmatprep.subr.bf16.mxu0 0
    %350 = vmatpush1.bf16.msra.mxu0 0
    %351 = vmatprep.subr.bf16.mxu0 0
    %352 = vmatpush1.bf16.msra.mxu0 0
    %353 = vmatprep.subr.bf16.mxu0 0
    %354 = vmatpush1.bf16.msra.mxu0 0
    %355 = vmatprep.subr.bf16.mxu0 0
    %356 = vmatpush1.bf16.msra.mxu0 0
    %357 = vmatprep.subr.bf16.mxu0 0
    %358 = vmatpush1.bf16.msra.mxu0 0
    %359 = vmatprep.subr.bf16.mxu0 0
    %360 = vmatpush1.bf16.msra.mxu0 0
    %361 = vmatprep.subr.bf16.mxu0 0
    %362 = vmatpush1.bf16.msra.mxu0 0
    %363 = vmatprep.mubr.bf16.mxu0 0
    %364 = vmatmul.mubr.bf16.gmra.mrb[0].mxu0 %v222
    %v365 = vpop.f32.mrb[0].mxu0
    %v366 = vadd.f32 %v244, %v365
    %v367 = vpop.f32.mrb[0].mxu0
    %v368 = vadd.f32 %v248, %v367
    %v369 = vpop.f32.mrb[0].mxu0
    %v370 = vpop.f32.mrb[0].mxu0
    %371 = vdwg.mxu0
    %vm372 = vcmp.gt.f32.partialorder %v366, 0.0
    %vm373 = vcmp.gt.f32.partialorder %v368, 0.0
    %v374 = vmul.f32 %v366, 0.2
    %v375 = vmul.f32 %v368, 0.2
    %v376 = vsel %vm372, %v366, %v374
    %v377 = vsel %vm373, %v368, %v375
    %v378 = vld [vmem:[#allocation10 + $0x3] sm:$0x3]
    %v379 = vld [vmem:[#allocation10 + $0x5] sm:$0x3]
    %v380 = vrot.slane %v376, 4
    %v381 = vadd.f32 %v376, %v380
    %v382 = vrot.slane %v381, 2
    %v383 = vadd.f32 %v381, %v382
    %v384 = vrot.slane %v383, 1
    %v385 = vadd.f32 %v383, %v384
    %v386 = vrot.slane %v377, 4
    %v387 = vadd.f32 %v377, %v386
    %v388 = vrot.slane %v387, 2
    %v389 = vadd.f32 %v387, %v388
    %v390 = vrot.slane %v389, 1
    %v391 = vadd.f32 %v389, %v390
    %v392 = vrcp.pop 8.0
    %v393 = vmul.f32 %v385, %v392
    %v394 = vmul.f32 %v391, %v392
    %v395 = vsub.f32 %v376, %v393
    %v396 = vsub.f32 %v377, %v394
    %v397 = vmul.f32 %v395, %v395
    %v398 = vmul.f32 %v396, %v396
    %v399 = vrot.slane %v397, 4
    %v400 = vadd.f32 %v397, %v399
    %v401 = vrot.slane %v400, 2
    %v402 = vadd.f32 %v400, %v401
    %v403 = vrot.slane %v402, 1
    %v404 = vadd.f32 %v402, %v403
    %v405 = vrot.slane %v398, 4
    %v406 = vadd.f32 %v398, %v405
    %v407 = vrot.slane %v406, 2
    %v408 = vadd.f32 %v406, %v407
    %v409 = vrot.slane %v408, 1
    %v410 = vadd.f32 %v408, %v409
    %v411 = vmul.f32 %v404, %v392
    %v412 = vmul.f32 %v410, %v392
    %v413 = vadd.f32 %v411, 0.8
    %v414 = vadd.f32 %v412, 0.8
    %v415 = vrsqrt.pop %v413
    %v416 = vrsqrt.pop %v414
    %v417 = vmul.f32 %v395, %v415
    %v418 = vmul.f32 %v396, %v416
    %v420 = vlaneseq
    %v421 = vshrl.u32 %v420, 7
    %v422 = vsub.s32 0, %v421
    %v423 = vrot.slane %v378, %v422
    %v424 = vlaneseq
    %v425 = vshrl.u32 %v424, 7
    %v426 = vsub.s32 1, %v425
    %v427 = vrot.slane %v378, %v426
    %v430 = vmul.f32 %v417, %v423
    %v431 = vmul.f32 %v418, %v427
    %v433 = vlaneseq
    %v434 = vshrl.u32 %v433, 7
    %v435 = vsub.s32 0, %v434
    %v436 = vrot.slane %v379, %v435
    %v437 = vlaneseq
    %v438 = vshrl.u32 %v437, 7
    %v439 = vsub.s32 1, %v438
    %v440 = vrot.slane %v379, %v439
    %v443 = vadd.f32 %v430, %v436
    %v444 = vadd.f32 %v431, %v440
    %v445 = vpack.c.bf16 %v443, %v443
    %v446 = vpack.c.bf16 %v444, %v444
    %v447 = vld [vmem:[#allocation6] sm:$0xff]
    %v448 = vld [vmem:[#allocation6 + $0x8] sm:$0xff]
    %v449 = vld [vmem:[#allocation6 + $0x10] sm:$0xff]
    %v450 = vld [vmem:[#allocation6 + $0x18] sm:$0xff]
    %v451 = vld [vmem:[#allocation6 + $0x20] sm:$0xff]
    %v452 = vld [vmem:[#allocation6 + $0x28] sm:$0xff]
    %v453 = vld [vmem:[#allocation6 + $0x30] sm:$0xff]
    %v454 = vld [vmem:[#allocation6 + $0x38] sm:$0xff]
    %v455 = vld [vmem:[#allocation6 + $0x40] sm:$0xff]
    %v456 = vld [vmem:[#allocation6 + $0x48] sm:$0xff]
    %v457 = vld [vmem:[#allocation6 + $0x50] sm:$0xff]
    %v458 = vld [vmem:[#allocation6 + $0x58] sm:$0xff]
    %v459 = vld [vmem:[#allocation6 + $0x60] sm:$0xff]
    %v460 = vld [vmem:[#allocation6 + $0x68] sm:$0xff]
    %v461 = vld [vmem:[#allocation6 + $0x70] sm:$0xff]
    %v462 = vld [vmem:[#allocation6 + $0x78] sm:$0xff]
    %v463 = vld [vmem:[#allocation6 + $0x80] sm:$0xff]
    %v464 = vld [vmem:[#allocation6 + $0x88] sm:$0xff]
    %v465 = vld [vmem:[#allocation6 + $0x90] sm:$0xff]
    %v466 = vld [vmem:[#allocation6 + $0x98] sm:$0xff]
    %v467 = vld [vmem:[#allocation6 + $0xa0] sm:$0xff]
    %v468 = vld [vmem:[#allocation6 + $0xa8] sm:$0xff]
    %v469 = vld [vmem:[#allocation6 + $0xb0] sm:$0xff]
    %v470 = vld [vmem:[#allocation6 + $0xb8] sm:$0xff]
    %v471 = vld [vmem:[#allocation6 + $0xc0] sm:$0xff]
    %v472 = vld [vmem:[#allocation6 + $0xc8] sm:$0xff]
    %v473 = vld [vmem:[#allocation6 + $0xd0] sm:$0xff]
    %v474 = vld [vmem:[#allocation6 + $0xd8] sm:$0xff]
    %v475 = vld [vmem:[#allocation6 + $0xe0] sm:$0xff]
    %v476 = vld [vmem:[#allocation6 + $0xe8] sm:$0xff]
    %v477 = vld [vmem:[#allocation6 + $0xf0] sm:$0xff]
    %v478 = vld [vmem:[#allocation6 + $0xf8] sm:$0xff]
    %v479 = vld [vmem:[#allocation6 + $0x100] sm:$0xff]
    %v480 = vld [vmem:[#allocation6 + $0x108] sm:$0xff]
    %v481 = vld [vmem:[#allocation6 + $0x110] sm:$0xff]
    %v482 = vld [vmem:[#allocation6 + $0x118] sm:$0xff]
    %v483 = vld [vmem:[#allocation6 + $0x120] sm:$0xff]
    %v484 = vld [vmem:[#allocation6 + $0x128] sm:$0xff]
    %v485 = vld [vmem:[#allocation6 + $0x130] sm:$0xff]
    %v486 = vld [vmem:[#allocation6 + $0x138] sm:$0xff]
    %v487 = vld [vmem:[#allocation6 + $0x140] sm:$0xff]
    %v488 = vld [vmem:[#allocation6 + $0x148] sm:$0xff]
    %v489 = vld [vmem:[#allocation6 + $0x150] sm:$0xff]
    %v490 = vld [vmem:[#allocation6 + $0x158] sm:$0xff]
    %v491 = vld [vmem:[#allocation6 + $0x160] sm:$0xff]
    %v492 = vld [vmem:[#allocation6 + $0x168] sm:$0xff]
    %v493 = vld [vmem:[#allocation6 + $0x170] sm:$0xff]
    %v494 = vld [vmem:[#allocation6 + $0x178] sm:$0xff]
    %v495 = vld [vmem:[#allocation6 + $0x180] sm:$0xff]
    %v496 = vld [vmem:[#allocation6 + $0x188] sm:$0xff]
    %v497 = vld [vmem:[#allocation6 + $0x190] sm:$0xff]
    %v498 = vld [vmem:[#allocation6 + $0x198] sm:$0xff]
    %v499 = vld [vmem:[#allocation6 + $0x1a0] sm:$0xff]
    %v500 = vld [vmem:[#allocation6 + $0x1a8] sm:$0xff]
    %v501 = vld [vmem:[#allocation6 + $0x1b0] sm:$0xff]
    %v502 = vld [vmem:[#allocation6 + $0x1b8] sm:$0xff]
    %v503 = vld [vmem:[#allocation6 + $0x1c0] sm:$0xff]
    %v504 = vld [vmem:[#allocation6 + $0x1c8] sm:$0xff]
    %v505 = vld [vmem:[#allocation6 + $0x1d0] sm:$0xff]
    %v506 = vld [vmem:[#allocation6 + $0x1d8] sm:$0xff]
    %v507 = vld [vmem:[#allocation6 + $0x1e0] sm:$0xff]
    %v508 = vld [vmem:[#allocation6 + $0x1e8] sm:$0xff]
    %v509 = vld [vmem:[#allocation6 + $0x1f0] sm:$0xff]
    %v510 = vld [vmem:[#allocation6 + $0x1f8] sm:$0xff]
    %v511 = vld [vmem:[#allocation10 + $0x7] sm:$0xf]
    %v513 = vlaneseq
    %v514 = vshrl.u32 %v513, 7
    %v515 = vsub.s32 0, %v514
    %v516 = vrot.slane %v511, %v515
    %v517 = vlaneseq
    %v518 = vshrl.u32 %v517, 7
    %v519 = vsub.s32 1, %v518
    %v520 = vrot.slane %v511, %v519
    %v521 = vlaneseq
    %v522 = vshrl.u32 %v521, 7
    %v523 = vsub.s32 2, %v522
    %v524 = vrot.slane %v511, %v523
    %v525 = vlaneseq
    %v526 = vshrl.u32 %v525, 7
    %v527 = vsub.s32 3, %v526
    %v528 = vrot.slane %v511, %v527
    %v597 = vunpack.c.l.b16 %v447
    %v598 = vunpack.c.h.b16 %v447
    %v599 = vunpack.c.l.b16 %v448
    %v600 = vunpack.c.h.b16 %v448
    %v601 = vunpack.c.l.b16 %v449
    %v602 = vunpack.c.h.b16 %v449
    %v603 = vunpack.c.l.b16 %v450
    %v604 = vunpack.c.h.b16 %v450
    %v605 = vunpack.c.l.b16 %v451
    %v606 = vunpack.c.h.b16 %v451
    %v607 = vunpack.c.l.b16 %v452
    %v608 = vunpack.c.h.b16 %v452
    %v609 = vunpack.c.l.b16 %v453
    %v610 = vunpack.c.h.b16 %v453
    %v611 = vunpack.c.l.b16 %v454
    %v612 = vunpack.c.h.b16 %v454
    %v613 = vunpack.c.l.b16 %v455
    %v614 = vunpack.c.h.b16 %v455
    %v615 = vunpack.c.l.b16 %v456
    %v616 = vunpack.c.h.b16 %v456
    %v617 = vunpack.c.l.b16 %v457
    %v618 = vunpack.c.h.b16 %v457
    %v619 = vunpack.c.l.b16 %v458
    %v620 = vunpack.c.h.b16 %v458
    %v621 = vunpack.c.l.b16 %v459
    %v622 = vunpack.c.h.b16 %v459
    %v623 = vunpack.c.l.b16 %v460
    %v624 = vunpack.c.h.b16 %v460
    %v625 = vunpack.c.l.b16 %v461
    %v626 = vunpack.c.h.b16 %v461
    %v627 = vunpack.c.l.b16 %v462
    %v628 = vunpack.c.h.b16 %v462
    %v629 = vunpack.c.l.b16 %v463
    %v630 = vunpack.c.h.b16 %v463
    %v631 = vunpack.c.l.b16 %v464
    %v632 = vunpack.c.h.b16 %v464
    %v633 = vunpack.c.l.b16 %v465
    %v634 = vunpack.c.h.b16 %v465
    %v635 = vunpack.c.l.b16 %v466
    %v636 = vunpack.c.h.b16 %v466
    %v637 = vunpack.c.l.b16 %v467
    %v638 = vunpack.c.h.b16 %v467
    %v639 = vunpack.c.l.b16 %v468
    %v640 = vunpack.c.h.b16 %v468
    %v641 = vunpack.c.l.b16 %v469
    %v642 = vunpack.c.h.b16 %v469
    %v643 = vunpack.c.l.b16 %v470
    %v644 = vunpack.c.h.b16 %v470
    %v645 = vunpack.c.l.b16 %v471
    %v646 = vunpack.c.h.b16 %v471
    %v647 = vunpack.c.l.b16 %v472
    %v648 = vunpack.c.h.b16 %v472
    %v649 = vunpack.c.l.b16 %v473
    %v650 = vunpack.c.h.b16 %v473
    %v651 = vunpack.c.l.b16 %v474
    %v652 = vunpack.c.h.b16 %v474
    %v653 = vunpack.c.l.b16 %v475
    %v654 = vunpack.c.h.b16 %v475
    %v655 = vunpack.c.l.b16 %v476
    %v656 = vunpack.c.h.b16 %v476
    %v657 = vunpack.c.l.b16 %v477
    %v658 = vunpack.c.h.b16 %v477
    %v659 = vunpack.c.l.b16 %v478
    %v660 = vunpack.c.h.b16 %v478
    %v661 = vunpack.c.l.b16 %v479
    %v662 = vunpack.c.h.b16 %v479
    %v663 = vunpack.c.l.b16 %v480
    %v664 = vunpack.c.h.b16 %v480
    %v665 = vunpack.c.l.b16 %v481
    %v666 = vunpack.c.h.b16 %v481
    %v667 = vunpack.c.l.b16 %v482
    %v668 = vunpack.c.h.b16 %v482
    %v669 = vunpack.c.l.b16 %v483
    %v670 = vunpack.c.h.b16 %v483
    %v671 = vunpack.c.l.b16 %v484
    %v672 = vunpack.c.h.b16 %v484
    %v673 = vunpack.c.l.b16 %v485
    %v674 = vunpack.c.h.b16 %v485
    %v675 = vunpack.c.l.b16 %v486
    %v676 = vunpack.c.h.b16 %v486
    %v677 = vunpack.c.l.b16 %v487
    %v678 = vunpack.c.h.b16 %v487
    %v679 = vunpack.c.l.b16 %v488
    %v680 = vunpack.c.h.b16 %v488
    %v681 = vunpack.c.l.b16 %v489
    %v682 = vunpack.c.h.b16 %v489
    %v683 = vunpack.c.l.b16 %v490
    %v684 = vunpack.c.h.b16 %v490
    %v685 = vunpack.c.l.b16 %v491
    %v686 = vunpack.c.h.b16 %v491
    %v687 = vunpack.c.l.b16 %v492
    %v688 = vunpack.c.h.b16 %v492
    %v689 = vunpack.c.l.b16 %v493
    %v690 = vunpack.c.h.b16 %v493
    %v691 = vunpack.c.l.b16 %v494
    %v692 = vunpack.c.h.b16 %v494
    %v693 = vunpack.c.l.b16 %v495
    %v694 = vunpack.c.h.b16 %v495
    %v695 = vunpack.c.l.b16 %v496
    %v696 = vunpack.c.h.b16 %v496
    %v697 = vunpack.c.l.b16 %v497
    %v698 = vunpack.c.h.b16 %v497
    %v699 = vunpack.c.l.b16 %v498
    %v700 = vunpack.c.h.b16 %v498
    %v701 = vunpack.c.l.b16 %v499
    %v702 = vunpack.c.h.b16 %v499
    %v703 = vunpack.c.l.b16 %v500
    %v704 = vunpack.c.h.b16 %v500
    %v705 = vunpack.c.l.b16 %v501
    %v706 = vunpack.c.h.b16 %v501
    %v707 = vunpack.c.l.b16 %v502
    %v708 = vunpack.c.h.b16 %v502
    %v709 = vunpack.c.l.b16 %v503
    %v710 = vunpack.c.h.b16 %v503
    %v711 = vunpack.c.l.b16 %v504
    %v712 = vunpack.c.h.b16 %v504
    %v713 = vunpack.c.l.b16 %v505
    %v714 = vunpack.c.h.b16 %v505
    %v715 = vunpack.c.l.b16 %v506
    %v716 = vunpack.c.h.b16 %v506
    %v717 = vunpack.c.l.b16 %v507
    %v718 = vunpack.c.h.b16 %v507
    %v719 = vunpack.c.l.b16 %v508
    %v720 = vunpack.c.h.b16 %v508
    %v721 = vunpack.c.l.b16 %v509
    %v722 = vunpack.c.h.b16 %v509
    %v723 = vunpack.c.l.b16 %v510
    %v724 = vunpack.c.h.b16 %v510
    %v725 = vpack.c.b16 %v601, %v597
    %v726 = vpack.c.b16 %v602, %v598
    %v727 = vpack.c.b16 %v603, %v599
    %v728 = vpack.c.b16 %v604, %v600
    %v729 = vpack.c.b16 %v609, %v605
    %v730 = vpack.c.b16 %v610, %v606
    %v731 = vpack.c.b16 %v611, %v607
    %v732 = vpack.c.b16 %v612, %v608
    %v733 = vpack.c.b16 %v617, %v613
    %v734 = vpack.c.b16 %v618, %v614
    %v735 = vpack.c.b16 %v619, %v615
    %v736 = vpack.c.b16 %v620, %v616
    %v737 = vpack.c.b16 %v625, %v621
    %v738 = vpack.c.b16 %v626, %v622
    %v739 = vpack.c.b16 %v627, %v623
    %v740 = vpack.c.b16 %v628, %v624
    %v741 = vpack.c.b16 %v633, %v629
    %v742 = vpack.c.b16 %v634, %v630
    %v743 = vpack.c.b16 %v635, %v631
    %v744 = vpack.c.b16 %v636, %v632
    %v745 = vpack.c.b16 %v641, %v637
    %v746 = vpack.c.b16 %v642, %v638
    %v747 = vpack.c.b16 %v643, %v639
    %v748 = vpack.c.b16 %v644, %v640
    %v749 = vpack.c.b16 %v649, %v645
    %v750 = vpack.c.b16 %v650, %v646
    %v751 = vpack.c.b16 %v651, %v647
    %v752 = vpack.c.b16 %v652, %v648
    %v753 = vpack.c.b16 %v657, %v653
    %v754 = vpack.c.b16 %v658, %v654
    %v755 = vpack.c.b16 %v659, %v655
    %v756 = vpack.c.b16 %v660, %v656
    %v757 = vpack.c.b16 %v665, %v661
    %v758 = vpack.c.b16 %v666, %v662
    %v759 = vpack.c.b16 %v667, %v663
    %v760 = vpack.c.b16 %v668, %v664
    %v761 = vpack.c.b16 %v673, %v669
    %v762 = vpack.c.b16 %v674, %v670
    %v763 = vpack.c.b16 %v675, %v671
    %v764 = vpack.c.b16 %v676, %v672
    %v765 = vpack.c.b16 %v681, %v677
    %v766 = vpack.c.b16 %v682, %v678
    %v767 = vpack.c.b16 %v683, %v679
    %v768 = vpack.c.b16 %v684, %v680
    %v769 = vpack.c.b16 %v689, %v685
    %v770 = vpack.c.b16 %v690, %v686
    %v771 = vpack.c.b16 %v691, %v687
    %v772 = vpack.c.b16 %v692, %v688
    %v773 = vpack.c.b16 %v697, %v693
    %v774 = vpack.c.b16 %v698, %v694
    %v775 = vpack.c.b16 %v699, %v695
    %v776 = vpack.c.b16 %v700, %v696
    %v777 = vpack.c.b16 %v705, %v701
    %v778 = vpack.c.b16 %v706, %v702
    %v779 = vpack.c.b16 %v707, %v703
    %v780 = vpack.c.b16 %v708, %v704
    %v781 = vpack.c.b16 %v713, %v709
    %v782 = vpack.c.b16 %v714, %v710
    %v783 = vpack.c.b16 %v715, %v711
    %v784 = vpack.c.b16 %v716, %v712
    %v785 = vpack.c.b16 %v721, %v717
    %v786 = vpack.c.b16 %v722, %v718
    %v787 = vpack.c.b16 %v723, %v719
    %v788 = vpack.c.b16 %v724, %v720
    %853 = vmatprep.subr.bf16.mxu0 %v726
    %854 = vmatpush1.bf16.msra.mxu0 %v725
    %855 = vmatprep.subr.bf16.mxu0 %v730
    %856 = vmatpush1.bf16.msra.mxu0 %v729
    %857 = vmatprep.subr.bf16.mxu0 %v734
    %858 = vmatpush1.bf16.msra.mxu0 %v733
    %859 = vmatprep.subr.bf16.mxu0 %v738
    %860 = vmatpush1.bf16.msra.mxu0 %v737
    %861 = vmatprep.subr.bf16.mxu0 %v742
    %862 = vmatpush1.bf16.msra.mxu0 %v741
    %863 = vmatprep.subr.bf16.mxu0 %v746
    %864 = vmatpush1.bf16.msra.mxu0 %v745
    %865 = vmatprep.subr.bf16.mxu0 %v750
    %866 = vmatpush1.bf16.msra.mxu0 %v749
    %867 = vmatprep.subr.bf16.mxu0 %v754
    %868 = vmatpush1.bf16.msra.mxu0 %v753
    %869 = vmatprep.subr.bf16.mxu0 %v758
    %870 = vmatpush1.bf16.msra.mxu0 %v757
    %871 = vmatprep.subr.bf16.mxu0 %v762
    %872 = vmatpush1.bf16.msra.mxu0 %v761
    %873 = vmatprep.subr.bf16.mxu0 %v766
    %874 = vmatpush1.bf16.msra.mxu0 %v765
    %875 = vmatprep.subr.bf16.mxu0 %v770
    %876 = vmatpush1.bf16.msra.mxu0 %v769
    %877 = vmatprep.subr.bf16.mxu0 %v774
    %878 = vmatpush1.bf16.msra.mxu0 %v773
    %879 = vmatprep.subr.bf16.mxu0 %v778
    %880 = vmatpush1.bf16.msra.mxu0 %v777
    %881 = vmatprep.subr.bf16.mxu0 %v782
    %882 = vmatpush1.bf16.msra.mxu0 %v781
    %883 = vmatprep.subr.bf16.mxu0 %v786
    %884 = vmatpush1.bf16.msra.mxu0 %v785
    %885 = vmatprep.mubr.bf16.mxu0 %v446
    %886 = vmatmul.mubr.bf16.gmra.mrb[0].mxu0 %v445
    %v887 = vpop.f32.mrb[0].mxu0
    %v888 = vadd.f32 %v516, %v887
    %v889 = vpop.f32.mrb[0].mxu0
    %v890 = vadd.f32 %v520, %v889
    %v891 = vpop.f32.mrb[0].mxu0
    %v892 = vpop.f32.mrb[0].mxu0
    %893 = vdwg.mxu0
    %894 = vmatprep.subr.bf16.mxu0 %v728
    %895 = vmatpush1.bf16.msra.mxu0 %v727
    %896 = vmatprep.subr.bf16.mxu0 %v732
    %897 = vmatpush1.bf16.msra.mxu0 %v731
    %898 = vmatprep.subr.bf16.mxu0 %v736
    %899 = vmatpush1.bf16.msra.mxu0 %v735
    %900 = vmatprep.subr.bf16.mxu0 %v740
    %901 = vmatpush1.bf16.msra.mxu0 %v739
    %902 = vmatprep.subr.bf16.mxu0 %v744
    %903 = vmatpush1.bf16.msra.mxu0 %v743
    %904 = vmatprep.subr.bf16.mxu0 %v748
    %905 = vmatpush1.bf16.msra.mxu0 %v747
    %906 = vmatprep.subr.bf16.mxu0 %v752
    %907 = vmatpush1.bf16.msra.mxu0 %v751
    %908 = vmatprep.subr.bf16.mxu0 %v756
    %909 = vmatpush1.bf16.msra.mxu0 %v755
    %910 = vmatprep.subr.bf16.mxu0 %v760
    %911 = vmatpush1.bf16.msra.mxu0 %v759
    %912 = vmatprep.subr.bf16.mxu0 %v764
    %913 = vmatpush1.bf16.msra.mxu0 %v763
    %914 = vmatprep.subr.bf16.mxu0 %v768
    %915 = vmatpush1.bf16.msra.mxu0 %v767
    %916 = vmatprep.subr.bf16.mxu0 %v772
    %917 = vmatpush1.bf16.msra.mxu0 %v771
    %918 = vmatprep.subr.bf16.mxu0 %v776
    %919 = vmatpush1.bf16.msra.mxu0 %v775
    %920 = vmatprep.subr.bf16.mxu0 %v780
    %921 = vmatpush1.bf16.msra.mxu0 %v779
    %922 = vmatprep.subr.bf16.mxu0 %v784
    %923 = vmatpush1.bf16.msra.mxu0 %v783
    %924 = vmatprep.subr.bf16.mxu0 %v788
    %925 = vmatpush1.bf16.msra.mxu0 %v787
    %926 = vmatprep.mubr.bf16.mxu0 %v446
    %927 = vmatmul.mubr.bf16.gmra.mrb[0].mxu0 %v445
    %v928 = vpop.f32.mrb[0].mxu0
    %v929 = vadd.f32 %v524, %v928
    %v930 = vpop.f32.mrb[0].mxu0
    %v931 = vadd.f32 %v528, %v930
    %v932 = vpop.f32.mrb[0].mxu0
    %v933 = vpop.f32.mrb[0].mxu0
    %934 = vdwg.mxu0
    %vm935 = vcmp.gt.f32.partialorder %v888, 0.0
    %vm936 = vcmp.gt.f32.partialorder %v890, 0.0
    %vm937 = vcmp.gt.f32.partialorder %v929, 0.0
    %vm938 = vcmp.gt.f32.partialorder %v931, 0.0
    %v939 = vmul.f32 %v888, 0.2
    %v940 = vmul.f32 %v890, 0.2
    %v941 = vmul.f32 %v929, 0.2
    %v942 = vmul.f32 %v931, 0.2
    %v943 = vsel %vm935, %v888, %v939
    %v944 = vsel %vm936, %v890, %v940
    %v945 = vsel %vm937, %v929, %v941
    %v946 = vsel %vm938, %v931, %v942
    %v947 = vld [vmem:[#allocation10 + $0xb] sm:$0xf]
    %v948 = vld [vmem:[#allocation10 + $0xf] sm:$0xf]
    %v949 = vrot.slane %v943, 4
    %v950 = vadd.f32 %v943, %v949
    %v951 = vrot.slane %v950, 2
    %v952 = vadd.f32 %v950, %v951
    %v953 = vrot.slane %v952, 1
    %v954 = vadd.f32 %v952, %v953
    %v955 = vrot.slane %v944, 4
    %v956 = vadd.f32 %v944, %v955
    %v957 = vrot.slane %v956, 2
    %v958 = vadd.f32 %v956, %v957
    %v959 = vrot.slane %v958, 1
    %v960 = vadd.f32 %v958, %v959
    %v961 = vrot.slane %v945, 4
    %v962 = vadd.f32 %v945, %v961
    %v963 = vrot.slane %v962, 2
    %v964 = vadd.f32 %v962, %v963
    %v965 = vrot.slane %v964, 1
    %v966 = vadd.f32 %v964, %v965
    %v967 = vrot.slane %v946, 4
    %v968 = vadd.f32 %v946, %v967
    %v969 = vrot.slane %v968, 2
    %v970 = vadd.f32 %v968, %v969
    %v971 = vrot.slane %v970, 1
    %v972 = vadd.f32 %v970, %v971
    %v973 = vmul.f32 %v954, %v392
    %v974 = vmul.f32 %v960, %v392
    %v975 = vmul.f32 %v966, %v392
    %v976 = vmul.f32 %v972, %v392
    %v977 = vsub.f32 %v943, %v973
    %v978 = vsub.f32 %v944, %v974
    %v979 = vsub.f32 %v945, %v975
    %v980 = vsub.f32 %v946, %v976
    %v981 = vmul.f32 %v977, %v977
    %v982 = vmul.f32 %v978, %v978
    %v983 = vmul.f32 %v979, %v979
    %v984 = vmul.f32 %v980, %v980
    %v985 = vrot.slane %v981, 4
    %v986 = vadd.f32 %v981, %v985
    %v987 = vrot.slane %v986, 2
    %v988 = vadd.f32 %v986, %v987
    %v989 = vrot.slane %v988, 1
    %v990 = vadd.f32 %v988, %v989
    %v991 = vrot.slane %v982, 4
    %v992 = vadd.f32 %v982, %v991
    %v993 = vrot.slane %v992, 2
    %v994 = vadd.f32 %v992, %v993
    %v995 = vrot.slane %v994, 1
    %v996 = vadd.f32 %v994, %v995
    %v997 = vrot.slane %v983, 4
    %v998 = vadd.f32 %v983, %v997
    %v999 = vrot.slane %v998, 2
    %v1000 = vadd.f32 %v998, %v999
    %v1001 = vrot.slane %v1000, 1
    %v1002 = vadd.f32 %v1000, %v1001
    %v1003 = vrot.slane %v984, 4
    %v1004 = vadd.f32 %v984, %v1003
    %v1005 = vrot.slane %v1004, 2
    %v1006 = vadd.f32 %v1004, %v1005
    %v1007 = vrot.slane %v1006, 1
    %v1008 = vadd.f32 %v1006, %v1007
    %v1009 = vmul.f32 %v990, %v392
    %v1010 = vmul.f32 %v996, %v392
    %v1011 = vmul.f32 %v1002, %v392
    %v1012 = vmul.f32 %v1008, %v392
    %v1013 = vadd.f32 %v1009, 0.8
    %v1014 = vadd.f32 %v1010, 0.8
    %v1015 = vadd.f32 %v1011, 0.8
    %v1016 = vadd.f32 %v1012, 0.8
    %v1017 = vrsqrt.pop %v1013
    %v1018 = vrsqrt.pop %v1014
    %v1019 = vrsqrt.pop %v1015
    %v1020 = vrsqrt.pop %v1016
    %v1021 = vmul.f32 %v977, %v1017
    %v1022 = vmul.f32 %v978, %v1018
    %v1023 = vmul.f32 %v979, %v1019
    %v1024 = vmul.f32 %v980, %v1020
    %v1026 = vlaneseq
    %v1027 = vshrl.u32 %v1026, 7
    %v1028 = vsub.s32 0, %v1027
    %v1029 = vrot.slane %v947, %v1028
    %v1030 = vlaneseq
    %v1031 = vshrl.u32 %v1030, 7
    %v1032 = vsub.s32 1, %v1031
    %v1033 = vrot.slane %v947, %v1032
    %v1034 = vlaneseq
    %v1035 = vshrl.u32 %v1034, 7
    %v1036 = vsub.s32 2, %v1035
    %v1037 = vrot.slane %v947, %v1036
    %v1038 = vlaneseq
    %v1039 = vshrl.u32 %v1038, 7
    %v1040 = vsub.s32 3, %v1039
    %v1041 = vrot.slane %v947, %v1040
    %v1046 = vmul.f32 %v1021, %v1029
    %v1047 = vmul.f32 %v1022, %v1033
    %v1048 = vmul.f32 %v1023, %v1037
    %v1049 = vmul.f32 %v1024, %v1041
    %v1051 = vlaneseq
    %v1052 = vshrl.u32 %v1051, 7
    %v1053 = vsub.s32 0, %v1052
    %v1054 = vrot.slane %v948, %v1053
    %v1055 = vlaneseq
    %v1056 = vshrl.u32 %v1055, 7
    %v1057 = vsub.s32 1, %v1056
    %v1058 = vrot.slane %v948, %v1057
    %v1059 = vlaneseq
    %v1060 = vshrl.u32 %v1059, 7
    %v1061 = vsub.s32 2, %v1060
    %v1062 = vrot.slane %v948, %v1061
    %v1063 = vlaneseq
    %v1064 = vshrl.u32 %v1063, 7
    %v1065 = vsub.s32 3, %v1064
    %v1066 = vrot.slane %v948, %v1065
    %v1071 = vadd.f32 %v1046, %v1054
    %v1072 = vadd.f32 %v1047, %v1058
    %v1073 = vadd.f32 %v1048, %v1062
    %v1074 = vadd.f32 %v1049, %v1066
    %v1075 = vpack.c.bf16 %v1071, %v1071
    %v1076 = vpack.c.bf16 %v1072, %v1072
    %v1077 = vpack.c.bf16 %v1073, %v1073
    %v1078 = vpack.c.bf16 %v1074, %v1074
    %v1079 = vld [vmem:[#allocation7] sm:$0xff]
    %v1080 = vld [vmem:[#allocation7 + $0x8] sm:$0xff]
    %v1081 = vld [vmem:[#allocation7 + $0x10] sm:$0xff]
    %v1082 = vld [vmem:[#allocation7 + $0x18] sm:$0xff]
    %v1083 = vld [vmem:[#allocation7 + $0x20] sm:$0xff]
    %v1084 = vld [vmem:[#allocation7 + $0x28] sm:$0xff]
    %v1085 = vld [vmem:[#allocation7 + $0x30] sm:$0xff]
    %v1086 = vld [vmem:[#allocation7 + $0x38] sm:$0xff]
    %v1087 = vld [vmem:[#allocation7 + $0x40] sm:$0xff]
    %v1088 = vld [vmem:[#allocation7 + $0x48] sm:$0xff]
    %v1089 = vld [vmem:[#allocation7 + $0x50] sm:$0xff]
    %v1090 = vld [vmem:[#allocation7 + $0x58] sm:$0xff]
    %v1091 = vld [vmem:[#allocation7 + $0x60] sm:$0xff]
    %v1092 = vld [vmem:[#allocation7 + $0x68] sm:$0xff]
    %v1093 = vld [vmem:[#allocation7 + $0x70] sm:$0xff]
    %v1094 = vld [vmem:[#allocation7 + $0x78] sm:$0xff]
    %v1095 = vld [vmem:[#allocation7 + $0x80] sm:$0xff]
    %v1096 = vld [vmem:[#allocation7 + $0x88] sm:$0xff]
    %v1097 = vld [vmem:[#allocation7 + $0x90] sm:$0xff]
    %v1098 = vld [vmem:[#allocation7 + $0x98] sm:$0xff]
    %v1099 = vld [vmem:[#allocation7 + $0xa0] sm:$0xff]
    %v1100 = vld [vmem:[#allocation7 + $0xa8] sm:$0xff]
    %v1101 = vld [vmem:[#allocation7 + $0xb0] sm:$0xff]
    %v1102 = vld [vmem:[#allocation7 + $0xb8] sm:$0xff]
    %v1103 = vld [vmem:[#allocation7 + $0xc0] sm:$0xff]
    %v1104 = vld [vmem:[#allocation7 + $0xc8] sm:$0xff]
    %v1105 = vld [vmem:[#allocation7 + $0xd0] sm:$0xff]
    %v1106 = vld [vmem:[#allocation7 + $0xd8] sm:$0xff]
    %v1107 = vld [vmem:[#allocation7 + $0xe0] sm:$0xff]
    %v1108 = vld [vmem:[#allocation7 + $0xe8] sm:$0xff]
    %v1109 = vld [vmem:[#allocation7 + $0xf0] sm:$0xff]
    %v1110 = vld [vmem:[#allocation7 + $0xf8] sm:$0xff]
    %v1111 = vld [vmem:[#allocation7 + $0x100] sm:$0xff]
    %v1112 = vld [vmem:[#allocation7 + $0x108] sm:$0xff]
    %v1113 = vld [vmem:[#allocation7 + $0x110] sm:$0xff]
    %v1114 = vld [vmem:[#allocation7 + $0x118] sm:$0xff]
    %v1115 = vld [vmem:[#allocation7 + $0x120] sm:$0xff]
    %v1116 = vld [vmem:[#allocation7 + $0x128] sm:$0xff]
    %v1117 = vld [vmem:[#allocation7 + $0x130] sm:$0xff]
    %v1118 = vld [vmem:[#allocation7 + $0x138] sm:$0xff]
    %v1119 = vld [vmem:[#allocation7 + $0x140] sm:$0xff]
    %v1120 = vld [vmem:[#allocation7 + $0x148] sm:$0xff]
    %v1121 = vld [vmem:[#allocation7 + $0x150] sm:$0xff]
    %v1122 = vld [vmem:[#allocation7 + $0x158] sm:$0xff]
    %v1123 = vld [vmem:[#allocation7 + $0x160] sm:$0xff]
    %v1124 = vld [vmem:[#allocation7 + $0x168] sm:$0xff]
    %v1125 = vld [vmem:[#allocation7 + $0x170] sm:$0xff]
    %v1126 = vld [vmem:[#allocation7 + $0x178] sm:$0xff]
    %v1127 = vld [vmem:[#allocation7 + $0x180] sm:$0xff]
    %v1128 = vld [vmem:[#allocation7 + $0x188] sm:$0xff]
    %v1129 = vld [vmem:[#allocation7 + $0x190] sm:$0xff]
    %v1130 = vld [vmem:[#allocation7 + $0x198] sm:$0xff]
    %v1131 = vld [vmem:[#allocation7 + $0x1a0] sm:$0xff]
    %v1132 = vld [vmem:[#allocation7 + $0x1a8] sm:$0xff]
    %v1133 = vld [vmem:[#allocation7 + $0x1b0] sm:$0xff]
    %v1134 = vld [vmem:[#allocation7 + $0x1b8] sm:$0xff]
    %v1135 = vld [vmem:[#allocation7 + $0x1c0] sm:$0xff]
    %v1136 = vld [vmem:[#allocation7 + $0x1c8] sm:$0xff]
    %v1137 = vld [vmem:[#allocation7 + $0x1d0] sm:$0xff]
    %v1138 = vld [vmem:[#allocation7 + $0x1d8] sm:$0xff]
    %v1139 = vld [vmem:[#allocation7 + $0x1e0] sm:$0xff]
    %v1140 = vld [vmem:[#allocation7 + $0x1e8] sm:$0xff]
    %v1141 = vld [vmem:[#allocation7 + $0x1f0] sm:$0xff]
    %v1142 = vld [vmem:[#allocation7 + $0x1f8] sm:$0xff]
    %v1143 = vld [vmem:[#allocation7 + $0x200] sm:$0xff]
    %v1144 = vld [vmem:[#allocation7 + $0x208] sm:$0xff]
    %v1145 = vld [vmem:[#allocation7 + $0x210] sm:$0xff]
    %v1146 = vld [vmem:[#allocation7 + $0x218] sm:$0xff]
    %v1147 = vld [vmem:[#allocation7 + $0x220] sm:$0xff]
    %v1148 = vld [vmem:[#allocation7 + $0x228] sm:$0xff]
    %v1149 = vld [vmem:[#allocation7 + $0x230] sm:$0xff]
    %v1150 = vld [vmem:[#allocation7 + $0x238] sm:$0xff]
    %v1151 = vld [vmem:[#allocation7 + $0x240] sm:$0xff]
    %v1152 = vld [vmem:[#allocation7 + $0x248] sm:$0xff]
    %v1153 = vld [vmem:[#allocation7 + $0x250] sm:$0xff]
    %v1154 = vld [vmem:[#allocation7 + $0x258] sm:$0xff]
    %v1155 = vld [vmem:[#allocation7 + $0x260] sm:$0xff]
    %v1156 = vld [vmem:[#allocation7 + $0x268] sm:$0xff]
    %v1157 = vld [vmem:[#allocation7 + $0x270] sm:$0xff]
    %v1158 = vld [vmem:[#allocation7 + $0x278] sm:$0xff]
    %v1159 = vld [vmem:[#allocation7 + $0x280] sm:$0xff]
    %v1160 = vld [vmem:[#allocation7 + $0x288] sm:$0xff]
    %v1161 = vld [vmem:[#allocation7 + $0x290] sm:$0xff]
    %v1162 = vld [vmem:[#allocation7 + $0x298] sm:$0xff]
    %v1163 = vld [vmem:[#allocation7 + $0x2a0] sm:$0xff]
    %v1164 = vld [vmem:[#allocation7 + $0x2a8] sm:$0xff]
    %v1165 = vld [vmem:[#allocation7 + $0x2b0] sm:$0xff]
    %v1166 = vld [vmem:[#allocation7 + $0x2b8] sm:$0xff]
    %v1167 = vld [vmem:[#allocation7 + $0x2c0] sm:$0xff]
    %v1168 = vld [vmem:[#allocation7 + $0x2c8] sm:$0xff]
    %v1169 = vld [vmem:[#allocation7 + $0x2d0] sm:$0xff]
    %v1170 = vld [vmem:[#allocation7 + $0x2d8] sm:$0xff]
    %v1171 = vld [vmem:[#allocation7 + $0x2e0] sm:$0xff]
    %v1172 = vld [vmem:[#allocation7 + $0x2e8] sm:$0xff]
    %v1173 = vld [vmem:[#allocation7 + $0x2f0] sm:$0xff]
    %v1174 = vld [vmem:[#allocation7 + $0x2f8] sm:$0xff]
    %v1175 = vld [vmem:[#allocation7 + $0x300] sm:$0xff]
    %v1176 = vld [vmem:[#allocation7 + $0x308] sm:$0xff]
    %v1177 = vld [vmem:[#allocation7 + $0x310] sm:$0xff]
    %v1178 = vld [vmem:[#allocation7 + $0x318] sm:$0xff]
    %v1179 = vld [vmem:[#allocation7 + $0x320] sm:$0xff]
    %v1180 = vld [vmem:[#allocation7 + $0x328] sm:$0xff]
    %v1181 = vld [vmem:[#allocation7 + $0x330] sm:$0xff]
    %v1182 = vld [vmem:[#allocation7 + $0x338] sm:$0xff]
    %v1183 = vld [vmem:[#allocation7 + $0x340] sm:$0xff]
    %v1184 = vld [vmem:[#allocation7 + $0x348] sm:$0xff]
    %v1185 = vld [vmem:[#allocation7 + $0x350] sm:$0xff]
    %v1186 = vld [vmem:[#allocation7 + $0x358] sm:$0xff]
    %v1187 = vld [vmem:[#allocation7 + $0x360] sm:$0xff]
    %v1188 = vld [vmem:[#allocation7 + $0x368] sm:$0xff]
    %v1189 = vld [vmem:[#allocation7 + $0x370] sm:$0xff]
    %v1190 = vld [vmem:[#allocation7 + $0x378] sm:$0xff]
    %v1191 = vld [vmem:[#allocation7 + $0x380] sm:$0xff]
    %v1192 = vld [vmem:[#allocation7 + $0x388] sm:$0xff]
    %v1193 = vld [vmem:[#allocation7 + $0x390] sm:$0xff]
    %v1194 = vld [vmem:[#allocation7 + $0x398] sm:$0xff]
    %v1195 = vld [vmem:[#allocation7 + $0x3a0] sm:$0xff]
    %v1196 = vld [vmem:[#allocation7 + $0x3a8] sm:$0xff]
    %v1197 = vld [vmem:[#allocation7 + $0x3b0] sm:$0xff]
    %v1198 = vld [vmem:[#allocation7 + $0x3b8] sm:$0xff]
    %v1199 = vld [vmem:[#allocation7 + $0x3c0] sm:$0xff]
    %v1200 = vld [vmem:[#allocation7 + $0x3c8] sm:$0xff]
    %v1201 = vld [vmem:[#allocation7 + $0x3d0] sm:$0xff]
    %v1202 = vld [vmem:[#allocation7 + $0x3d8] sm:$0xff]
    %v1203 = vld [vmem:[#allocation7 + $0x3e0] sm:$0xff]
    %v1204 = vld [vmem:[#allocation7 + $0x3e8] sm:$0xff]
    %v1205 = vld [vmem:[#allocation7 + $0x3f0] sm:$0xff]
    %v1206 = vld [vmem:[#allocation7 + $0x3f8] sm:$0xff]
    %v1207 = vld [vmem:[#allocation7 + $0x400] sm:$0xff]
    %v1208 = vld [vmem:[#allocation7 + $0x408] sm:$0xff]
    %v1209 = vld [vmem:[#allocation7 + $0x410] sm:$0xff]
    %v1210 = vld [vmem:[#allocation7 + $0x418] sm:$0xff]
    %v1211 = vld [vmem:[#allocation7 + $0x420] sm:$0xff]
    %v1212 = vld [vmem:[#allocation7 + $0x428] sm:$0xff]
    %v1213 = vld [vmem:[#allocation7 + $0x430] sm:$0xff]
    %v1214 = vld [vmem:[#allocation7 + $0x438] sm:$0xff]
    %v1215 = vld [vmem:[#allocation7 + $0x440] sm:$0xff]
    %v1216 = vld [vmem:[#allocation7 + $0x448] sm:$0xff]
    %v1217 = vld [vmem:[#allocation7 + $0x450] sm:$0xff]
    %v1218 = vld [vmem:[#allocation7 + $0x458] sm:$0xff]
    %v1219 = vld [vmem:[#allocation7 + $0x460] sm:$0xff]
    %v1220 = vld [vmem:[#allocation7 + $0x468] sm:$0xff]
    %v1221 = vld [vmem:[#allocation7 + $0x470] sm:$0xff]
    %v1222 = vld [vmem:[#allocation7 + $0x478] sm:$0xff]
    %v1223 = vld [vmem:[#allocation7 + $0x480] sm:$0xff]
    %v1224 = vld [vmem:[#allocation7 + $0x488] sm:$0xff]
    %v1225 = vld [vmem:[#allocation7 + $0x490] sm:$0xff]
    %v1226 = vld [vmem:[#allocation7 + $0x498] sm:$0xff]
    %v1227 = vld [vmem:[#allocation7 + $0x4a0] sm:$0xff]
    %v1228 = vld [vmem:[#allocation7 + $0x4a8] sm:$0xff]
    %v1229 = vld [vmem:[#allocation7 + $0x4b0] sm:$0xff]
    %v1230 = vld [vmem:[#allocation7 + $0x4b8] sm:$0xff]
    %v1231 = vld [vmem:[#allocation7 + $0x4c0] sm:$0xff]
    %v1232 = vld [vmem:[#allocation7 + $0x4c8] sm:$0xff]
    %v1233 = vld [vmem:[#allocation7 + $0x4d0] sm:$0xff]
    %v1234 = vld [vmem:[#allocation7 + $0x4d8] sm:$0xff]
    %v1235 = vld [vmem:[#allocation7 + $0x4e0] sm:$0xff]
    %v1236 = vld [vmem:[#allocation7 + $0x4e8] sm:$0xff]
    %v1237 = vld [vmem:[#allocation7 + $0x4f0] sm:$0xff]
    %v1238 = vld [vmem:[#allocation7 + $0x4f8] sm:$0xff]
    %v1239 = vld [vmem:[#allocation7 + $0x500] sm:$0xff]
    %v1240 = vld [vmem:[#allocation7 + $0x508] sm:$0xff]
    %v1241 = vld [vmem:[#allocation7 + $0x510] sm:$0xff]
    %v1242 = vld [vmem:[#allocation7 + $0x518] sm:$0xff]
    %v1243 = vld [vmem:[#allocation7 + $0x520] sm:$0xff]
    %v1244 = vld [vmem:[#allocation7 + $0x528] sm:$0xff]
    %v1245 = vld [vmem:[#allocation7 + $0x530] sm:$0xff]
    %v1246 = vld [vmem:[#allocation7 + $0x538] sm:$0xff]
    %v1247 = vld [vmem:[#allocation7 + $0x540] sm:$0xff]
    %v1248 = vld [vmem:[#allocation7 + $0x548] sm:$0xff]
    %v1249 = vld [vmem:[#allocation7 + $0x550] sm:$0xff]
    %v1250 = vld [vmem:[#allocation7 + $0x558] sm:$0xff]
    %v1251 = vld [vmem:[#allocation7 + $0x560] sm:$0xff]
    %v1252 = vld [vmem:[#allocation7 + $0x568] sm:$0xff]
    %v1253 = vld [vmem:[#allocation7 + $0x570] sm:$0xff]
    %v1254 = vld [vmem:[#allocation7 + $0x578] sm:$0xff]
    %v1255 = vld [vmem:[#allocation7 + $0x580] sm:$0xff]
    %v1256 = vld [vmem:[#allocation7 + $0x588] sm:$0xff]
    %v1257 = vld [vmem:[#allocation7 + $0x590] sm:$0xff]
    %v1258 = vld [vmem:[#allocation7 + $0x598] sm:$0xff]
    %v1259 = vld [vmem:[#allocation7 + $0x5a0] sm:$0xff]
    %v1260 = vld [vmem:[#allocation7 + $0x5a8] sm:$0xff]
    %v1261 = vld [vmem:[#allocation7 + $0x5b0] sm:$0xff]
    %v1262 = vld [vmem:[#allocation7 + $0x5b8] sm:$0xff]
    %v1263 = vld [vmem:[#allocation7 + $0x5c0] sm:$0xff]
    %v1264 = vld [vmem:[#allocation7 + $0x5c8] sm:$0xff]
    %v1265 = vld [vmem:[#allocation7 + $0x5d0] sm:$0xff]
    %v1266 = vld [vmem:[#allocation7 + $0x5d8] sm:$0xff]
    %v1267 = vld [vmem:[#allocation7 + $0x5e0] sm:$0xff]
    %v1268 = vld [vmem:[#allocation7 + $0x5e8] sm:$0xff]
    %v1269 = vld [vmem:[#allocation7 + $0x5f0] sm:$0xff]
    %v1270 = vld [vmem:[#allocation7 + $0x5f8] sm:$0xff]
    %v1271 = vld [vmem:[#allocation7 + $0x600] sm:$0xff]
    %v1272 = vld [vmem:[#allocation7 + $0x608] sm:$0xff]
    %v1273 = vld [vmem:[#allocation7 + $0x610] sm:$0xff]
    %v1274 = vld [vmem:[#allocation7 + $0x618] sm:$0xff]
    %v1275 = vld [vmem:[#allocation7 + $0x620] sm:$0xff]
    %v1276 = vld [vmem:[#allocation7 + $0x628] sm:$0xff]
    %v1277 = vld [vmem:[#allocation7 + $0x630] sm:$0xff]
    %v1278 = vld [vmem:[#allocation7 + $0x638] sm:$0xff]
    %v1279 = vld [vmem:[#allocation7 + $0x640] sm:$0xff]
    %v1280 = vld [vmem:[#allocation7 + $0x648] sm:$0xff]
    %v1281 = vld [vmem:[#allocation7 + $0x650] sm:$0xff]
    %v1282 = vld [vmem:[#allocation7 + $0x658] sm:$0xff]
    %v1283 = vld [vmem:[#allocation7 + $0x660] sm:$0xff]
    %v1284 = vld [vmem:[#allocation7 + $0x668] sm:$0xff]
    %v1285 = vld [vmem:[#allocation7 + $0x670] sm:$0xff]
    %v1286 = vld [vmem:[#allocation7 + $0x678] sm:$0xff]
    %v1287 = vld [vmem:[#allocation7 + $0x680] sm:$0xff]
    %v1288 = vld [vmem:[#allocation7 + $0x688] sm:$0xff]
    %v1289 = vld [vmem:[#allocation7 + $0x690] sm:$0xff]
    %v1290 = vld [vmem:[#allocation7 + $0x698] sm:$0xff]
    %v1291 = vld [vmem:[#allocation7 + $0x6a0] sm:$0xff]
    %v1292 = vld [vmem:[#allocation7 + $0x6a8] sm:$0xff]
    %v1293 = vld [vmem:[#allocation7 + $0x6b0] sm:$0xff]
    %v1294 = vld [vmem:[#allocation7 + $0x6b8] sm:$0xff]
    %v1295 = vld [vmem:[#allocation7 + $0x6c0] sm:$0xff]
    %v1296 = vld [vmem:[#allocation7 + $0x6c8] sm:$0xff]
    %v1297 = vld [vmem:[#allocation7 + $0x6d0] sm:$0xff]
    %v1298 = vld [vmem:[#allocation7 + $0x6d8] sm:$0xff]
    %v1299 = vld [vmem:[#allocation7 + $0x6e0] sm:$0xff]
    %v1300 = vld [vmem:[#allocation7 + $0x6e8] sm:$0xff]
    %v1301 = vld [vmem:[#allocation7 + $0x6f0] sm:$0xff]
    %v1302 = vld [vmem:[#allocation7 + $0x6f8] sm:$0xff]
    %v1303 = vld [vmem:[#allocation7 + $0x700] sm:$0xff]
    %v1304 = vld [vmem:[#allocation7 + $0x708] sm:$0xff]
    %v1305 = vld [vmem:[#allocation7 + $0x710] sm:$0xff]
    %v1306 = vld [vmem:[#allocation7 + $0x718] sm:$0xff]
    %v1307 = vld [vmem:[#allocation7 + $0x720] sm:$0xff]
    %v1308 = vld [vmem:[#allocation7 + $0x728] sm:$0xff]
    %v1309 = vld [vmem:[#allocation7 + $0x730] sm:$0xff]
    %v1310 = vld [vmem:[#allocation7 + $0x738] sm:$0xff]
    %v1311 = vld [vmem:[#allocation7 + $0x740] sm:$0xff]
    %v1312 = vld [vmem:[#allocation7 + $0x748] sm:$0xff]
    %v1313 = vld [vmem:[#allocation7 + $0x750] sm:$0xff]
    %v1314 = vld [vmem:[#allocation7 + $0x758] sm:$0xff]
    %v1315 = vld [vmem:[#allocation7 + $0x760] sm:$0xff]
    %v1316 = vld [vmem:[#allocation7 + $0x768] sm:$0xff]
    %v1317 = vld [vmem:[#allocation7 + $0x770] sm:$0xff]
    %v1318 = vld [vmem:[#allocation7 + $0x778] sm:$0xff]
    %v1319 = vld [vmem:[#allocation7 + $0x780] sm:$0xff]
    %v1320 = vld [vmem:[#allocation7 + $0x788] sm:$0xff]
    %v1321 = vld [vmem:[#allocation7 + $0x790] sm:$0xff]
    %v1322 = vld [vmem:[#allocation7 + $0x798] sm:$0xff]
    %v1323 = vld [vmem:[#allocation7 + $0x7a0] sm:$0xff]
    %v1324 = vld [vmem:[#allocation7 + $0x7a8] sm:$0xff]
    %v1325 = vld [vmem:[#allocation7 + $0x7b0] sm:$0xff]
    %v1326 = vld [vmem:[#allocation7 + $0x7b8] sm:$0xff]
    %v1327 = vld [vmem:[#allocation7 + $0x7c0] sm:$0xff]
    %v1328 = vld [vmem:[#allocation7 + $0x7c8] sm:$0xff]
    %v1329 = vld [vmem:[#allocation7 + $0x7d0] sm:$0xff]
    %v1330 = vld [vmem:[#allocation7 + $0x7d8] sm:$0xff]
    %v1331 = vld [vmem:[#allocation7 + $0x7e0] sm:$0xff]
    %v1332 = vld [vmem:[#allocation7 + $0x7e8] sm:$0xff]
    %v1333 = vld [vmem:[#allocation7 + $0x7f0] sm:$0xff]
    %v1334 = vld [vmem:[#allocation7 + $0x7f8] sm:$0xff]
    %v1335 = vld [vmem:[#allocation10 + $0x13] sm:$0xff]
    %v1337 = vlaneseq
    %v1338 = vshrl.u32 %v1337, 7
    %v1339 = vsub.s32 0, %v1338
    %v1340 = vrot.slane %v1335, %v1339
    %v1341 = vlaneseq
    %v1342 = vshrl.u32 %v1341, 7
    %v1343 = vsub.s32 1, %v1342
    %v1344 = vrot.slane %v1335, %v1343
    %v1345 = vlaneseq
    %v1346 = vshrl.u32 %v1345, 7
    %v1347 = vsub.s32 2, %v1346
    %v1348 = vrot.slane %v1335, %v1347
    %v1349 = vlaneseq
    %v1350 = vshrl.u32 %v1349, 7
    %v1351 = vsub.s32 3, %v1350
    %v1352 = vrot.slane %v1335, %v1351
    %v1353 = vlaneseq
    %v1354 = vshrl.u32 %v1353, 7
    %v1355 = vsub.s32 4, %v1354
    %v1356 = vrot.slane %v1335, %v1355
    %v1357 = vlaneseq
    %v1358 = vshrl.u32 %v1357, 7
    %v1359 = vsub.s32 5, %v1358
    %v1360 = vrot.slane %v1335, %v1359
    %v1361 = vlaneseq
    %v1362 = vshrl.u32 %v1361, 7
    %v1363 = vsub.s32 6, %v1362
    %v1364 = vrot.slane %v1335, %v1363
    %v1365 = vlaneseq
    %v1366 = vshrl.u32 %v1365, 7
    %v1367 = vsub.s32 7, %v1366
    %v1368 = vrot.slane %v1335, %v1367
    %v1633 = vunpack.c.l.b16 %v1079
    %v1634 = vunpack.c.h.b16 %v1079
    %v1635 = vunpack.c.l.b16 %v1080
    %v1636 = vunpack.c.h.b16 %v1080
    %v1637 = vunpack.c.l.b16 %v1081
    %v1638 = vunpack.c.h.b16 %v1081
    %v1639 = vunpack.c.l.b16 %v1082
    %v1640 = vunpack.c.h.b16 %v1082
    %v1641 = vunpack.c.l.b16 %v1083
    %v1642 = vunpack.c.h.b16 %v1083
    %v1643 = vunpack.c.l.b16 %v1084
    %v1644 = vunpack.c.h.b16 %v1084
    %v1645 = vunpack.c.l.b16 %v1085
    %v1646 = vunpack.c.h.b16 %v1085
    %v1647 = vunpack.c.l.b16 %v1086
    %v1648 = vunpack.c.h.b16 %v1086
    %v1649 = vunpack.c.l.b16 %v1087
    %v1650 = vunpack.c.h.b16 %v1087
    %v1651 = vunpack.c.l.b16 %v1088
    %v1652 = vunpack.c.h.b16 %v1088
    %v1653 = vunpack.c.l.b16 %v1089
    %v1654 = vunpack.c.h.b16 %v1089
    %v1655 = vunpack.c.l.b16 %v1090
    %v1656 = vunpack.c.h.b16 %v1090
    %v1657 = vunpack.c.l.b16 %v1091
    %v1658 = vunpack.c.h.b16 %v1091
    %v1659 = vunpack.c.l.b16 %v1092
    %v1660 = vunpack.c.h.b16 %v1092
    %v1661 = vunpack.c.l.b16 %v1093
    %v1662 = vunpack.c.h.b16 %v1093
    %v1663 = vunpack.c.l.b16 %v1094
    %v1664 = vunpack.c.h.b16 %v1094
    %v1665 = vunpack.c.l.b16 %v1095
    %v1666 = vunpack.c.h.b16 %v1095
    %v1667 = vunpack.c.l.b16 %v1096
    %v1668 = vunpack.c.h.b16 %v1096
    %v1669 = vunpack.c.l.b16 %v1097
    %v1670 = vunpack.c.h.b16 %v1097
    %v1671 = vunpack.c.l.b16 %v1098
    %v1672 = vunpack.c.h.b16 %v1098
    %v1673 = vunpack.c.l.b16 %v1099
    %v1674 = vunpack.c.h.b16 %v1099
    %v1675 = vunpack.c.l.b16 %v1100
    %v1676 = vunpack.c.h.b16 %v1100
    %v1677 = vunpack.c.l.b16 %v1101
    %v1678 = vunpack.c.h.b16 %v1101
    %v1679 = vunpack.c.l.b16 %v1102
    %v1680 = vunpack.c.h.b16 %v1102
    %v1681 = vunpack.c.l.b16 %v1103
    %v1682 = vunpack.c.h.b16 %v1103
    %v1683 = vunpack.c.l.b16 %v1104
    %v1684 = vunpack.c.h.b16 %v1104
    %v1685 = vunpack.c.l.b16 %v1105
    %v1686 = vunpack.c.h.b16 %v1105
    %v1687 = vunpack.c.l.b16 %v1106
    %v1688 = vunpack.c.h.b16 %v1106
    %v1689 = vunpack.c.l.b16 %v1107
    %v1690 = vunpack.c.h.b16 %v1107
    %v1691 = vunpack.c.l.b16 %v1108
    %v1692 = vunpack.c.h.b16 %v1108
    %v1693 = vunpack.c.l.b16 %v1109
    %v1694 = vunpack.c.h.b16 %v1109
    %v1695 = vunpack.c.l.b16 %v1110
    %v1696 = vunpack.c.h.b16 %v1110
    %v1697 = vunpack.c.l.b16 %v1111
    %v1698 = vunpack.c.h.b16 %v1111
    %v1699 = vunpack.c.l.b16 %v1112
    %v1700 = vunpack.c.h.b16 %v1112
    %v1701 = vunpack.c.l.b16 %v1113
    %v1702 = vunpack.c.h.b16 %v1113
    %v1703 = vunpack.c.l.b16 %v1114
    %v1704 = vunpack.c.h.b16 %v1114
    %v1705 = vunpack.c.l.b16 %v1115
    %v1706 = vunpack.c.h.b16 %v1115
    %v1707 = vunpack.c.l.b16 %v1116
    %v1708 = vunpack.c.h.b16 %v1116
    %v1709 = vunpack.c.l.b16 %v1117
    %v1710 = vunpack.c.h.b16 %v1117
    %v1711 = vunpack.c.l.b16 %v1118
    %v1712 = vunpack.c.h.b16 %v1118
    %v1713 = vunpack.c.l.b16 %v1119
    %v1714 = vunpack.c.h.b16 %v1119
    %v1715 = vunpack.c.l.b16 %v1120
    %v1716 = vunpack.c.h.b16 %v1120
    %v1717 = vunpack.c.l.b16 %v1121
    %v1718 = vunpack.c.h.b16 %v1121
    %v1719 = vunpack.c.l.b16 %v1122
    %v1720 = vunpack.c.h.b16 %v1122
    %v1721 = vunpack.c.l.b16 %v1123
    %v1722 = vunpack.c.h.b16 %v1123
    %v1723 = vunpack.c.l.b16 %v1124
    %v1724 = vunpack.c.h.b16 %v1124
    %v1725 = vunpack.c.l.b16 %v1125
    %v1726 = vunpack.c.h.b16 %v1125
    %v1727 = vunpack.c.l.b16 %v1126
    %v1728 = vunpack.c.h.b16 %v1126
    %v1729 = vunpack.c.l.b16 %v1127
    %v1730 = vunpack.c.h.b16 %v1127
    %v1731 = vunpack.c.l.b16 %v1128
    %v1732 = vunpack.c.h.b16 %v1128
    %v1733 = vunpack.c.l.b16 %v1129
    %v1734 = vunpack.c.h.b16 %v1129
    %v1735 = vunpack.c.l.b16 %v1130
    %v1736 = vunpack.c.h.b16 %v1130
    %v1737 = vunpack.c.l.b16 %v1131
    %v1738 = vunpack.c.h.b16 %v1131
    %v1739 = vunpack.c.l.b16 %v1132
    %v1740 = vunpack.c.h.b16 %v1132
    %v1741 = vunpack.c.l.b16 %v1133
    %v1742 = vunpack.c.h.b16 %v1133
    %v1743 = vunpack.c.l.b16 %v1134
    %v1744 = vunpack.c.h.b16 %v1134
    %v1745 = vunpack.c.l.b16 %v1135
    %v1746 = vunpack.c.h.b16 %v1135
    %v1747 = vunpack.c.l.b16 %v1136
    %v1748 = vunpack.c.h.b16 %v1136
    %v1749 = vunpack.c.l.b16 %v1137
    %v1750 = vunpack.c.h.b16 %v1137
    %v1751 = vunpack.c.l.b16 %v1138
    %v1752 = vunpack.c.h.b16 %v1138
    %v1753 = vunpack.c.l.b16 %v1139
    %v1754 = vunpack.c.h.b16 %v1139
    %v1755 = vunpack.c.l.b16 %v1140
    %v1756 = vunpack.c.h.b16 %v1140
    %v1757 = vunpack.c.l.b16 %v1141
    %v1758 = vunpack.c.h.b16 %v1141
    %v1759 = vunpack.c.l.b16 %v1142
    %v1760 = vunpack.c.h.b16 %v1142
    %v1761 = vunpack.c.l.b16 %v1143
    %v1762 = vunpack.c.h.b16 %v1143
    %v1763 = vunpack.c.l.b16 %v1144
    %v1764 = vunpack.c.h.b16 %v1144
    %v1765 = vunpack.c.l.b16 %v1145
    %v1766 = vunpack.c.h.b16 %v1145
    %v1767 = vunpack.c.l.b16 %v1146
    %v1768 = vunpack.c.h.b16 %v1146
    %v1769 = vunpack.c.l.b16 %v1147
    %v1770 = vunpack.c.h.b16 %v1147
    %v1771 = vunpack.c.l.b16 %v1148
    %v1772 = vunpack.c.h.b16 %v1148
    %v1773 = vunpack.c.l.b16 %v1149
    %v1774 = vunpack.c.h.b16 %v1149
    %v1775 = vunpack.c.l.b16 %v1150
    %v1776 = vunpack.c.h.b16 %v1150
    %v1777 = vunpack.c.l.b16 %v1151
    %v1778 = vunpack.c.h.b16 %v1151
    %v1779 = vunpack.c.l.b16 %v1152
    %v1780 = vunpack.c.h.b16 %v1152
    %v1781 = vunpack.c.l.b16 %v1153
    %v1782 = vunpack.c.h.b16 %v1153
    %v1783 = vunpack.c.l.b16 %v1154
    %v1784 = vunpack.c.h.b16 %v1154
    %v1785 = vunpack.c.l.b16 %v1155
    %v1786 = vunpack.c.h.b16 %v1155
    %v1787 = vunpack.c.l.b16 %v1156
    %v1788 = vunpack.c.h.b16 %v1156
    %v1789 = vunpack.c.l.b16 %v1157
    %v1790 = vunpack.c.h.b16 %v1157
    %v1791 = vunpack.c.l.b16 %v1158
    %v1792 = vunpack.c.h.b16 %v1158
    %v1793 = vunpack.c.l.b16 %v1159
    %v1794 = vunpack.c.h.b16 %v1159
    %v1795 = vunpack.c.l.b16 %v1160
    %v1796 = vunpack.c.h.b16 %v1160
    %v1797 = vunpack.c.l.b16 %v1161
    %v1798 = vunpack.c.h.b16 %v1161
    %v1799 = vunpack.c.l.b16 %v1162
    %v1800 = vunpack.c.h.b16 %v1162
    %v1801 = vunpack.c.l.b16 %v1163
    %v1802 = vunpack.c.h.b16 %v1163
    %v1803 = vunpack.c.l.b16 %v1164
    %v1804 = vunpack.c.h.b16 %v1164
    %v1805 = vunpack.c.l.b16 %v1165
    %v1806 = vunpack.c.h.b16 %v1165
    %v1807 = vunpack.c.l.b16 %v1166
    %v1808 = vunpack.c.h.b16 %v1166
    %v1809 = vunpack.c.l.b16 %v1167
    %v1810 = vunpack.c.h.b16 %v1167
    %v1811 = vunpack.c.l.b16 %v1168
    %v1812 = vunpack.c.h.b16 %v1168
    %v1813 = vunpack.c.l.b16 %v1169
    %v1814 = vunpack.c.h.b16 %v1169
    %v1815 = vunpack.c.l.b16 %v1170
    %v1816 = vunpack.c.h.b16 %v1170
    %v1817 = vunpack.c.l.b16 %v1171
    %v1818 = vunpack.c.h.b16 %v1171
    %v1819 = vunpack.c.l.b16 %v1172
    %v1820 = vunpack.c.h.b16 %v1172
    %v1821 = vunpack.c.l.b16 %v1173
    %v1822 = vunpack.c.h.b16 %v1173
    %v1823 = vunpack.c.l.b16 %v1174
    %v1824 = vunpack.c.h.b16 %v1174
    %v1825 = vunpack.c.l.b16 %v1175
    %v1826 = vunpack.c.h.b16 %v1175
    %v1827 = vunpack.c.l.b16 %v1176
    %v1828 = vunpack.c.h.b16 %v1176
    %v1829 = vunpack.c.l.b16 %v1177
    %v1830 = vunpack.c.h.b16 %v1177
    %v1831 = vunpack.c.l.b16 %v1178
    %v1832 = vunpack.c.h.b16 %v1178
    %v1833 = vunpack.c.l.b16 %v1179
    %v1834 = vunpack.c.h.b16 %v1179
    %v1835 = vunpack.c.l.b16 %v1180
    %v1836 = vunpack.c.h.b16 %v1180
    %v1837 = vunpack.c.l.b16 %v1181
    %v1838 = vunpack.c.h.b16 %v1181
    %v1839 = vunpack.c.l.b16 %v1182
    %v1840 = vunpack.c.h.b16 %v1182
    %v1841 = vunpack.c.l.b16 %v1183
    %v1842 = vunpack.c.h.b16 %v1183
    %v1843 = vunpack.c.l.b16 %v1184
    %v1844 = vunpack.c.h.b16 %v1184
    %v1845 = vunpack.c.l.b16 %v1185
    %v1846 = vunpack.c.h.b16 %v1185
    %v1847 = vunpack.c.l.b16 %v1186
    %v1848 = vunpack.c.h.b16 %v1186
    %v1849 = vunpack.c.l.b16 %v1187
    %v1850 = vunpack.c.h.b16 %v1187
    %v1851 = vunpack.c.l.b16 %v1188
    %v1852 = vunpack.c.h.b16 %v1188
    %v1853 = vunpack.c.l.b16 %v1189
    %v1854 = vunpack.c.h.b16 %v1189
    %v1855 = vunpack.c.l.b16 %v1190
    %v1856 = vunpack.c.h.b16 %v1190
    %v1857 = vunpack.c.l.b16 %v1191
    %v1858 = vunpack.c.h.b16 %v1191
    %v1859 = vunpack.c.l.b16 %v1192
    %v1860 = vunpack.c.h.b16 %v1192
    %v1861 = vunpack.c.l.b16 %v1193
    %v1862 = vunpack.c.h.b16 %v1193
    %v1863 = vunpack.c.l.b16 %v1194
    %v1864 = vunpack.c.h.b16 %v1194
    %v1865 = vunpack.c.l.b16 %v1195
    %v1866 = vunpack.c.h.b16 %v1195
    %v1867 = vunpack.c.l.b16 %v1196
    %v1868 = vunpack.c.h.b16 %v1196
    %v1869 = vunpack.c.l.b16 %v1197
    %v1870 = vunpack.c.h.b16 %v1197
    %v1871 = vunpack.c.l.b16 %v1198
    %v1872 = vunpack.c.h.b16 %v1198
    %v1873 = vunpack.c.l.b16 %v1199
    %v1874 = vunpack.c.h.b16 %v1199
    %v1875 = vunpack.c.l.b16 %v1200
    %v1876 = vunpack.c.h.b16 %v1200
    %v1877 = vunpack.c.l.b16 %v1201
    %v1878 = vunpack.c.h.b16 %v1201
    %v1879 = vunpack.c.l.b16 %v1202
    %v1880 = vunpack.c.h.b16 %v1202
    %v1881 = vunpack.c.l.b16 %v1203
    %v1882 = vunpack.c.h.b16 %v1203
    %v1883 = vunpack.c.l.b16 %v1204
    %v1884 = vunpack.c.h.b16 %v1204
    %v1885 = vunpack.c.l.b16 %v1205
    %v1886 = vunpack.c.h.b16 %v1205
    %v1887 = vunpack.c.l.b16 %v1206
    %v1888 = vunpack.c.h.b16 %v1206
    %v1889 = vunpack.c.l.b16 %v1207
    %v1890 = vunpack.c.h.b16 %v1207
    %v1891 = vunpack.c.l.b16 %v1208
    %v1892 = vunpack.c.h.b16 %v1208
    %v1893 = vunpack.c.l.b16 %v1209
    %v1894 = vunpack.c.h.b16 %v1209
    %v1895 = vunpack.c.l.b16 %v1210
    %v1896 = vunpack.c.h.b16 %v1210
    %v1897 = vunpack.c.l.b16 %v1211
    %v1898 = vunpack.c.h.b16 %v1211
    %v1899 = vunpack.c.l.b16 %v1212
    %v1900 = vunpack.c.h.b16 %v1212
    %v1901 = vunpack.c.l.b16 %v1213
    %v1902 = vunpack.c.h.b16 %v1213
    %v1903 = vunpack.c.l.b16 %v1214
    %v1904 = vunpack.c.h.b16 %v1214
    %v1905 = vunpack.c.l.b16 %v1215
    %v1906 = vunpack.c.h.b16 %v1215
    %v1907 = vunpack.c.l.b16 %v1216
    %v1908 = vunpack.c.h.b16 %v1216
    %v1909 = vunpack.c.l.b16 %v1217
    %v1910 = vunpack.c.h.b16 %v1217
    %v1911 = vunpack.c.l.b16 %v1218
    %v1912 = vunpack.c.h.b16 %v1218
    %v1913 = vunpack.c.l.b16 %v1219
    %v1914 = vunpack.c.h.b16 %v1219
    %v1915 = vunpack.c.l.b16 %v1220
    %v1916 = vunpack.c.h.b16 %v1220
    %v1917 = vunpack.c.l.b16 %v1221
    %v1918 = vunpack.c.h.b16 %v1221
    %v1919 = vunpack.c.l.b16 %v1222
    %v1920 = vunpack.c.h.b16 %v1222
    %v1921 = vunpack.c.l.b16 %v1223
    %v1922 = vunpack.c.h.b16 %v1223
    %v1923 = vunpack.c.l.b16 %v1224
    %v1924 = vunpack.c.h.b16 %v1224
    %v1925 = vunpack.c.l.b16 %v1225
    %v1926 = vunpack.c.h.b16 %v1225
    %v1927 = vunpack.c.l.b16 %v1226
    %v1928 = vunpack.c.h.b16 %v1226
    %v1929 = vunpack.c.l.b16 %v1227
    %v1930 = vunpack.c.h.b16 %v1227
    %v1931 = vunpack.c.l.b16 %v1228
    %v1932 = vunpack.c.h.b16 %v1228
    %v1933 = vunpack.c.l.b16 %v1229
    %v1934 = vunpack.c.h.b16 %v1229
    %v1935 = vunpack.c.l.b16 %v1230
    %v1936 = vunpack.c.h.b16 %v1230
    %v1937 = vunpack.c.l.b16 %v1231
    %v1938 = vunpack.c.h.b16 %v1231
    %v1939 = vunpack.c.l.b16 %v1232
    %v1940 = vunpack.c.h.b16 %v1232
    %v1941 = vunpack.c.l.b16 %v1233
    %v1942 = vunpack.c.h.b16 %v1233
    %v1943 = vunpack.c.l.b16 %v1234
    %v1944 = vunpack.c.h.b16 %v1234
    %v1945 = vunpack.c.l.b16 %v1235
    %v1946 = vunpack.c.h.b16 %v1235
    %v1947 = vunpack.c.l.b16 %v1236
    %v1948 = vunpack.c.h.b16 %v1236
    %v1949 = vunpack.c.l.b16 %v1237
    %v1950 = vunpack.c.h.b16 %v1237
    %v1951 = vunpack.c.l.b16 %v1238
    %v1952 = vunpack.c.h.b16 %v1238
    %v1953 = vunpack.c.l.b16 %v1239
    %v1954 = vunpack.c.h.b16 %v1239
    %v1955 = vunpack.c.l.b16 %v1240
    %v1956 = vunpack.c.h.b16 %v1240
    %v1957 = vunpack.c.l.b16 %v1241
    %v1958 = vunpack.c.h.b16 %v1241
    %v1959 = vunpack.c.l.b16 %v1242
    %v1960 = vunpack.c.h.b16 %v1242
    %v1961 = vunpack.c.l.b16 %v1243
    %v1962 = vunpack.c.h.b16 %v1243
    %v1963 = vunpack.c.l.b16 %v1244
    %v1964 = vunpack.c.h.b16 %v1244
    %v1965 = vunpack.c.l.b16 %v1245
    %v1966 = vunpack.c.h.b16 %v1245
    %v1967 = vunpack.c.l.b16 %v1246
    %v1968 = vunpack.c.h.b16 %v1246
    %v1969 = vunpack.c.l.b16 %v1247
    %v1970 = vunpack.c.h.b16 %v1247
    %v1971 = vunpack.c.l.b16 %v1248
    %v1972 = vunpack.c.h.b16 %v1248
    %v1973 = vunpack.c.l.b16 %v1249
    %v1974 = vunpack.c.h.b16 %v1249
    %v1975 = vunpack.c.l.b16 %v1250
    %v1976 = vunpack.c.h.b16 %v1250
    %v1977 = vunpack.c.l.b16 %v1251
    %v1978 = vunpack.c.h.b16 %v1251
    %v1979 = vunpack.c.l.b16 %v1252
    %v1980 = vunpack.c.h.b16 %v1252
    %v1981 = vunpack.c.l.b16 %v1253
    %v1982 = vunpack.c.h.b16 %v1253
    %v1983 = vunpack.c.l.b16 %v1254
    %v1984 = vunpack.c.h.b16 %v1254
    %v1985 = vunpack.c.l.b16 %v1255
    %v1986 = vunpack.c.h.b16 %v1255
    %v1987 = vunpack.c.l.b16 %v1256
    %v1988 = vunpack.c.h.b16 %v1256
    %v1989 = vunpack.c.l.b16 %v1257
    %v1990 = vunpack.c.h.b16 %v1257
    %v1991 = vunpack.c.l.b16 %v1258
    %v1992 = vunpack.c.h.b16 %v1258
    %v1993 = vunpack.c.l.b16 %v1259
    %v1994 = vunpack.c.h.b16 %v1259
    %v1995 = vunpack.c.l.b16 %v1260
    %v1996 = vunpack.c.h.b16 %v1260
    %v1997 = vunpack.c.l.b16 %v1261
    %v1998 = vunpack.c.h.b16 %v1261
    %v1999 = vunpack.c.l.b16 %v1262
    %v2000 = vunpack.c.h.b16 %v1262
    %v2001 = vunpack.c.l.b16 %v1263
    %v2002 = vunpack.c.h.b16 %v1263
    %v2003 = vunpack.c.l.b16 %v1264
    %v2004 = vunpack.c.h.b16 %v1264
    %v2005 = vunpack.c.l.b16 %v1265
    %v2006 = vunpack.c.h.b16 %v1265
    %v2007 = vunpack.c.l.b16 %v1266
    %v2008 = vunpack.c.h.b16 %v1266
    %v2009 = vunpack.c.l.b16 %v1267
    %v2010 = vunpack.c.h.b16 %v1267
    %v2011 = vunpack.c.l.b16 %v1268
    %v2012 = vunpack.c.h.b16 %v1268
    %v2013 = vunpack.c.l.b16 %v1269
    %v2014 = vunpack.c.h.b16 %v1269
    %v2015 = vunpack.c.l.b16 %v1270
    %v2016 = vunpack.c.h.b16 %v1270
    %v2017 = vunpack.c.l.b16 %v1271
    %v2018 = vunpack.c.h.b16 %v1271
    %v2019 = vunpack.c.l.b16 %v1272
    %v2020 = vunpack.c.h.b16 %v1272
    %v2021 = vunpack.c.l.b16 %v1273
    %v2022 = vunpack.c.h.b16 %v1273
    %v2023 = vunpack.c.l.b16 %v1274
    %v2024 = vunpack.c.h.b16 %v1274
    %v2025 = vunpack.c.l.b16 %v1275
    %v2026 = vunpack.c.h.b16 %v1275
    %v2027 = vunpack.c.l.b16 %v1276
    %v2028 = vunpack.c.h.b16 %v1276
    %v2029 = vunpack.c.l.b16 %v1277
    %v2030 = vunpack.c.h.b16 %v1277
    %v2031 = vunpack.c.l.b16 %v1278
    %v2032 = vunpack.c.h.b16 %v1278
    %v2033 = vunpack.c.l.b16 %v1279
    %v2034 = vunpack.c.h.b16 %v1279
    %v2035 = vunpack.c.l.b16 %v1280
    %v2036 = vunpack.c.h.b16 %v1280
    %v2037 = vunpack.c.l.b16 %v1281
    %v2038 = vunpack.c.h.b16 %v1281
    %v2039 = vunpack.c.l.b16 %v1282
    %v2040 = vunpack.c.h.b16 %v1282
    %v2041 = vunpack.c.l.b16 %v1283
    %v2042 = vunpack.c.h.b16 %v1283
    %v2043 = vunpack.c.l.b16 %v1284
    %v2044 = vunpack.c.h.b16 %v1284
    %v2045 = vunpack.c.l.b16 %v1285
    %v2046 = vunpack.c.h.b16 %v1285
    %v2047 = vunpack.c.l.b16 %v1286
    %v2048 = vunpack.c.h.b16 %v1286
    %v2049 = vunpack.c.l.b16 %v1287
    %v2050 = vunpack.c.h.b16 %v1287
    %v2051 = vunpack.c.l.b16 %v1288
    %v2052 = vunpack.c.h.b16 %v1288
    %v2053 = vunpack.c.l.b16 %v1289
    %v2054 = vunpack.c.h.b16 %v1289
    %v2055 = vunpack.c.l.b16 %v1290
    %v2056 = vunpack.c.h.b16 %v1290
    %v2057 = vunpack.c.l.b16 %v1291
    %v2058 = vunpack.c.h.b16 %v1291
    %v2059 = vunpack.c.l.b16 %v1292
    %v2060 = vunpack.c.h.b16 %v1292
    %v2061 = vunpack.c.l.b16 %v1293
    %v2062 = vunpack.c.h.b16 %v1293
    %v2063 = vunpack.c.l.b16 %v1294
    %v2064 = vunpack.c.h.b16 %v1294
    %v2065 = vunpack.c.l.b16 %v1295
    %v2066 = vunpack.c.h.b16 %v1295
    %v2067 = vunpack.c.l.b16 %v1296
    %v2068 = vunpack.c.h.b16 %v1296
    %v2069 = vunpack.c.l.b16 %v1297
    %v2070 = vunpack.c.h.b16 %v1297
    %v2071 = vunpack.c.l.b16 %v1298
    %v2072 = vunpack.c.h.b16 %v1298
    %v2073 = vunpack.c.l.b16 %v1299
    %v2074 = vunpack.c.h.b16 %v1299
    %v2075 = vunpack.c.l.b16 %v1300
    %v2076 = vunpack.c.h.b16 %v1300
    %v2077 = vunpack.c.l.b16 %v1301
    %v2078 = vunpack.c.h.b16 %v1301
    %v2079 = vunpack.c.l.b16 %v1302
    %v2080 = vunpack.c.h.b16 %v1302
    %v2081 = vunpack.c.l.b16 %v1303
    %v2082 = vunpack.c.h.b16 %v1303
    %v2083 = vunpack.c.l.b16 %v1304
    %v2084 = vunpack.c.h.b16 %v1304
    %v2085 = vunpack.c.l.b16 %v1305
    %v2086 = vunpack.c.h.b16 %v1305
    %v2087 = vunpack.c.l.b16 %v1306
    %v2088 = vunpack.c.h.b16 %v1306
    %v2089 = vunpack.c.l.b16 %v1307
    %v2090 = vunpack.c.h.b16 %v1307
    %v2091 = vunpack.c.l.b16 %v1308
    %v2092 = vunpack.c.h.b16 %v1308
    %v2093 = vunpack.c.l.b16 %v1309
    %v2094 = vunpack.c.h.b16 %v1309
    %v2095 = vunpack.c.l.b16 %v1310
    %v2096 = vunpack.c.h.b16 %v1310
    %v2097 = vunpack.c.l.b16 %v1311
    %v2098 = vunpack.c.h.b16 %v1311
    %v2099 = vunpack.c.l.b16 %v1312
    %v2100 = vunpack.c.h.b16 %v1312
    %v2101 = vunpack.c.l.b16 %v1313
    %v2102 = vunpack.c.h.b16 %v1313
    %v2103 = vunpack.c.l.b16 %v1314
    %v2104 = vunpack.c.h.b16 %v1314
    %v2105 = vunpack.c.l.b16 %v1315
    %v2106 = vunpack.c.h.b16 %v1315
    %v2107 = vunpack.c.l.b16 %v1316
    %v2108 = vunpack.c.h.b16 %v1316
    %v2109 = vunpack.c.l.b16 %v1317
    %v2110 = vunpack.c.h.b16 %v1317
    %v2111 = vunpack.c.l.b16 %v1318
    %v2112 = vunpack.c.h.b16 %v1318
    %v2113 = vunpack.c.l.b16 %v1319
    %v2114 = vunpack.c.h.b16 %v1319
    %v2115 = vunpack.c.l.b16 %v1320
    %v2116 = vunpack.c.h.b16 %v1320
    %v2117 = vunpack.c.l.b16 %v1321
    %v2118 = vunpack.c.h.b16 %v1321
    %v2119 = vunpack.c.l.b16 %v1322
    %v2120 = vunpack.c.h.b16 %v1322
    %v2121 = vunpack.c.l.b16 %v1323
    %v2122 = vunpack.c.h.b16 %v1323
    %v2123 = vunpack.c.l.b16 %v1324
    %v2124 = vunpack.c.h.b16 %v1324
    %v2125 = vunpack.c.l.b16 %v1325
    %v2126 = vunpack.c.h.b16 %v1325
    %v2127 = vunpack.c.l.b16 %v1326
    %v2128 = vunpack.c.h.b16 %v1326
    %v2129 = vunpack.c.l.b16 %v1327
    %v2130 = vunpack.c.h.b16 %v1327
    %v2131 = vunpack.c.l.b16 %v1328
    %v2132 = vunpack.c.h.b16 %v1328
    %v2133 = vunpack.c.l.b16 %v1329
    %v2134 = vunpack.c.h.b16 %v1329
    %v2135 = vunpack.c.l.b16 %v1330
    %v2136 = vunpack.c.h.b16 %v1330
    %v2137 = vunpack.c.l.b16 %v1331
    %v2138 = vunpack.c.h.b16 %v1331
    %v2139 = vunpack.c.l.b16 %v1332
    %v2140 = vunpack.c.h.b16 %v1332
    %v2141 = vunpack.c.l.b16 %v1333
    %v2142 = vunpack.c.h.b16 %v1333
    %v2143 = vunpack.c.l.b16 %v1334
    %v2144 = vunpack.c.h.b16 %v1334
    %v2145 = vpack.c.b16 %v1641, %v1633
    %v2146 = vpack.c.b16 %v1642, %v1634
    %v2147 = vpack.c.b16 %v1643, %v1635
    %v2148 = vpack.c.b16 %v1644, %v1636
    %v2149 = vpack.c.b16 %v1645, %v1637
    %v2150 = vpack.c.b16 %v1646, %v1638
    %v2151 = vpack.c.b16 %v1647, %v1639
    %v2152 = vpack.c.b16 %v1648, %v1640
    %v2153 = vpack.c.b16 %v1657, %v1649
    %v2154 = vpack.c.b16 %v1658, %v1650
    %v2155 = vpack.c.b16 %v1659, %v1651
    %v2156 = vpack.c.b16 %v1660, %v1652
    %v2157 = vpack.c.b16 %v1661, %v1653
    %v2158 = vpack.c.b16 %v1662, %v1654
    %v2159 = vpack.c.b16 %v1663, %v1655
    %v2160 = vpack.c.b16 %v1664, %v1656
    %v2161 = vpack.c.b16 %v1673, %v1665
    %v2162 = vpack.c.b16 %v1674, %v1666
    %v2163 = vpack.c.b16 %v1675, %v1667
    %v2164 = vpack.c.b16 %v1676, %v1668
    %v2165 = vpack.c.b16 %v1677, %v1669
    %v2166 = vpack.c.b16 %v1678, %v1670
    %v2167 = vpack.c.b16 %v1679, %v1671
    %v2168 = vpack.c.b16 %v1680, %v1672
    %v2169 = vpack.c.b16 %v1689, %v1681
    %v2170 = vpack.c.b16 %v1690, %v1682
    %v2171 = vpack.c.b16 %v1691, %v1683
    %v2172 = vpack.c.b16 %v1692, %v1684
    %v2173 = vpack.c.b16 %v1693, %v1685
    %v2174 = vpack.c.b16 %v1694, %v1686
    %v2175 = vpack.c.b16 %v1695, %v1687
    %v2176 = vpack.c.b16 %v1696, %v1688
    %v2177 = vpack.c.b16 %v1705, %v1697
    %v2178 = vpack.c.b16 %v1706, %v1698
    %v2179 = vpack.c.b16 %v1707, %v1699
    %v2180 = vpack.c.b16 %v1708, %v1700
    %v2181 = vpack.c.b16 %v1709, %v1701
    %v2182 = vpack.c.b16 %v1710, %v1702
    %v2183 = vpack.c.b16 %v1711, %v1703
    %v2184 = vpack.c.b16 %v1712, %v1704
    %v2185 = vpack.c.b16 %v1721, %v1713
    %v2186 = vpack.c.b16 %v1722, %v1714
    %v2187 = vpack.c.b16 %v1723, %v1715
    %v2188 = vpack.c.b16 %v1724, %v1716
    %v2189 = vpack.c.b16 %v1725, %v1717
    %v2190 = vpack.c.b16 %v1726, %v1718
    %v2191 = vpack.c.b16 %v1727, %v1719
    %v2192 = vpack.c.b16 %v1728, %v1720
    %v2193 = vpack.c.b16 %v1737, %v1729
    %v2194 = vpack.c.b16 %v1738, %v1730
    %v2195 = vpack.c.b16 %v1739, %v1731
    %v2196 = vpack.c.b16 %v1740, %v1732
    %v2197 = vpack.c.b16 %v1741, %v1733
    %v2198 = vpack.c.b16 %v1742, %v1734
    %v2199 = vpack.c.b16 %v1743, %v1735
    %v2200 = vpack.c.b16 %v1744, %v1736
    %v2201 = vpack.c.b16 %v1753, %v1745
    %v2202 = vpack.c.b16 %v1754, %v1746
    %v2203 = vpack.c.b16 %v1755, %v1747
    %v2204 = vpack.c.b16 %v1756, %v1748
    %v2205 = vpack.c.b16 %v1757, %v1749
    %v2206 = vpack.c.b16 %v1758, %v1750
    %v2207 = vpack.c.b16 %v1759, %v1751
    %v2208 = vpack.c.b16 %v1760, %v1752
    %v2209 = vpack.c.b16 %v1769, %v1761
    %v2210 = vpack.c.b16 %v1770, %v1762
    %v2211 = vpack.c.b16 %v1771, %v1763
    %v2212 = vpack.c.b16 %v1772, %v1764
    %v2213 = vpack.c.b16 %v1773, %v1765
    %v2214 = vpack.c.b16 %v1774, %v1766
    %v2215 = vpack.c.b16 %v1775, %v1767
    %v2216 = vpack.c.b16 %v1776, %v1768
    %v2217 = vpack.c.b16 %v1785, %v1777
    %v2218 = vpack.c.b16 %v1786, %v1778
    %v2219 = vpack.c.b16 %v1787, %v1779
    %v2220 = vpack.c.b16 %v1788, %v1780
    %v2221 = vpack.c.b16 %v1789, %v1781
    %v2222 = vpack.c.b16 %v1790, %v1782
    %v2223 = vpack.c.b16 %v1791, %v1783
    %v2224 = vpack.c.b16 %v1792, %v1784
    %v2225 = vpack.c.b16 %v1801, %v1793
    %v2226 = vpack.c.b16 %v1802, %v1794
    %v2227 = vpack.c.b16 %v1803, %v1795
    %v2228 = vpack.c.b16 %v1804, %v1796
    %v2229 = vpack.c.b16 %v1805, %v1797
    %v2230 = vpack.c.b16 %v1806, %v1798
    %v2231 = vpack.c.b16 %v1807, %v1799
    %v2232 = vpack.c.b16 %v1808, %v1800
    %v2233 = vpack.c.b16 %v1817, %v1809
    %v2234 = vpack.c.b16 %v1818, %v1810
    %v2235 = vpack.c.b16 %v1819, %v1811
    %v2236 = vpack.c.b16 %v1820, %v1812
    %v2237 = vpack.c.b16 %v1821, %v1813
    %v2238 = vpack.c.b16 %v1822, %v1814
    %v2239 = vpack.c.b16 %v1823, %v1815
    %v2240 = vpack.c.b16 %v1824, %v1816
    %v2241 = vpack.c.b16 %v1833, %v1825
    %v2242 = vpack.c.b16 %v1834, %v1826
    %v2243 = vpack.c.b16 %v1835, %v1827
    %v2244 = vpack.c.b16 %v1836, %v1828
    %v2245 = vpack.c.b16 %v1837, %v1829
    %v2246 = vpack.c.b16 %v1838, %v1830
    %v2247 = vpack.c.b16 %v1839, %v1831
    %v2248 = vpack.c.b16 %v1840, %v1832
    %v2249 = vpack.c.b16 %v1849, %v1841
    %v2250 = vpack.c.b16 %v1850, %v1842
    %v2251 = vpack.c.b16 %v1851, %v1843
    %v2252 = vpack.c.b16 %v1852, %v1844
    %v2253 = vpack.c.b16 %v1853, %v1845
    %v2254 = vpack.c.b16 %v1854, %v1846
    %v2255 = vpack.c.b16 %v1855, %v1847
    %v2256 = vpack.c.b16 %v1856, %v1848
    %v2257 = vpack.c.b16 %v1865, %v1857
    %v2258 = vpack.c.b16 %v1866, %v1858
    %v2259 = vpack.c.b16 %v1867, %v1859
    %v2260 = vpack.c.b16 %v1868, %v1860
    %v2261 = vpack.c.b16 %v1869, %v1861
    %v2262 = vpack.c.b16 %v1870, %v1862
    %v2263 = vpack.c.b16 %v1871, %v1863
    %v2264 = vpack.c.b16 %v1872, %v1864
    %v2265 = vpack.c.b16 %v1881, %v1873
    %v2266 = vpack.c.b16 %v1882, %v1874
    %v2267 = vpack.c.b16 %v1883, %v1875
    %v2268 = vpack.c.b16 %v1884, %v1876
    %v2269 = vpack.c.b16 %v1885, %v1877
    %v2270 = vpack.c.b16 %v1886, %v1878
    %v2271 = vpack.c.b16 %v1887, %v1879
    %v2272 = vpack.c.b16 %v1888, %v1880
    %v2273 = vpack.c.b16 %v1897, %v1889
    %v2274 = vpack.c.b16 %v1898, %v1890
    %v2275 = vpack.c.b16 %v1899, %v1891
    %v2276 = vpack.c.b16 %v1900, %v1892
    %v2277 = vpack.c.b16 %v1901, %v1893
    %v2278 = vpack.c.b16 %v1902, %v1894
    %v2279 = vpack.c.b16 %v1903, %v1895
    %v2280 = vpack.c.b16 %v1904, %v1896
    %v2281 = vpack.c.b16 %v1913, %v1905
    %v2282 = vpack.c.b16 %v1914, %v1906
    %v2283 = vpack.c.b16 %v1915, %v1907
    %v2284 = vpack.c.b16 %v1916, %v1908
    %v2285 = vpack.c.b16 %v1917, %v1909
    %v2286 = vpack.c.b16 %v1918, %v1910
    %v2287 = vpack.c.b16 %v1919, %v1911
    %v2288 = vpack.c.b16 %v1920, %v1912
    %v2289 = vpack.c.b16 %v1929, %v1921
    %v2290 = vpack.c.b16 %v1930, %v1922
    %v2291 = vpack.c.b16 %v1931, %v1923
    %v2292 = vpack.c.b16 %v1932, %v1924
    %v2293 = vpack.c.b16 %v1933, %v1925
    %v2294 = vpack.c.b16 %v1934, %v1926
    %v2295 = vpack.c.b16 %v1935, %v1927
    %v2296 = vpack.c.b16 %v1936, %v1928
    %v2297 = vpack.c.b16 %v1945, %v1937
    %v2298 = vpack.c.b16 %v1946, %v1938
    %v2299 = vpack.c.b16 %v1947, %v1939
    %v2300 = vpack.c.b16 %v1948, %v1940
    %v2301 = vpack.c.b16 %v1949, %v1941
    %v2302 = vpack.c.b16 %v1950, %v1942
    %v2303 = vpack.c.b16 %v1951, %v1943
    %v2304 = vpack.c.b16 %v1952, %v1944
    %v2305 = vpack.c.b16 %v1961, %v1953
    %v2306 = vpack.c.b16 %v1962, %v1954
    %v2307 = vpack.c.b16 %v1963, %v1955
    %v2308 = vpack.c.b16 %v1964, %v1956
    %v2309 = vpack.c.b16 %v1965, %v1957
    %v2310 = vpack.c.b16 %v1966, %v1958
    %v2311 = vpack.c.b16 %v1967, %v1959
    %v2312 = vpack.c.b16 %v1968, %v1960
    %v2313 = vpack.c.b16 %v1977, %v1969
    %v2314 = vpack.c.b16 %v1978, %v1970
    %v2315 = vpack.c.b16 %v1979, %v1971
    %v2316 = vpack.c.b16 %v1980, %v1972
    %v2317 = vpack.c.b16 %v1981, %v1973
    %v2318 = vpack.c.b16 %v1982, %v1974
    %v2319 = vpack.c.b16 %v1983, %v1975
    %v2320 = vpack.c.b16 %v1984, %v1976
    %v2321 = vpack.c.b16 %v1993, %v1985
    %v2322 = vpack.c.b16 %v1994, %v1986
    %v2323 = vpack.c.b16 %v1995, %v1987
    %v2324 = vpack.c.b16 %v1996, %v1988
    %v2325 = vpack.c.b16 %v1997, %v1989
    %v2326 = vpack.c.b16 %v1998, %v1990
    %v2327 = vpack.c.b16 %v1999, %v1991
    %v2328 = vpack.c.b16 %v2000, %v1992
    %v2329 = vpack.c.b16 %v2009, %v2001
    %v2330 = vpack.c.b16 %v2010, %v2002
    %v2331 = vpack.c.b16 %v2011, %v2003
    %v2332 = vpack.c.b16 %v2012, %v2004
    %v2333 = vpack.c.b16 %v2013, %v2005
    %v2334 = vpack.c.b16 %v2014, %v2006
    %v2335 = vpack.c.b16 %v2015, %v2007
    %v2336 = vpack.c.b16 %v2016, %v2008
    %v2337 = vpack.c.b16 %v2025, %v2017
    %v2338 = vpack.c.b16 %v2026, %v2018
    %v2339 = vpack.c.b16 %v2027, %v2019
    %v2340 = vpack.c.b16 %v2028, %v2020
    %v2341 = vpack.c.b16 %v2029, %v2021
    %v2342 = vpack.c.b16 %v2030, %v2022
    %v2343 = vpack.c.b16 %v2031, %v2023
    %v2344 = vpack.c.b16 %v2032, %v2024
    %v2345 = vpack.c.b16 %v2041, %v2033
    %v2346 = vpack.c.b16 %v2042, %v2034
    %v2347 = vpack.c.b16 %v2043, %v2035
    %v2348 = vpack.c.b16 %v2044, %v2036
    %v2349 = vpack.c.b16 %v2045, %v2037
    %v2350 = vpack.c.b16 %v2046, %v2038
    %v2351 = vpack.c.b16 %v2047, %v2039
    %v2352 = vpack.c.b16 %v2048, %v2040
    %v2353 = vpack.c.b16 %v2057, %v2049
    %v2354 = vpack.c.b16 %v2058, %v2050
    %v2355 = vpack.c.b16 %v2059, %v2051
    %v2356 = vpack.c.b16 %v2060, %v2052
    %v2357 = vpack.c.b16 %v2061, %v2053
    %v2358 = vpack.c.b16 %v2062, %v2054
    %v2359 = vpack.c.b16 %v2063, %v2055
    %v2360 = vpack.c.b16 %v2064, %v2056
    %v2361 = vpack.c.b16 %v2073, %v2065
    %v2362 = vpack.c.b16 %v2074, %v2066
    %v2363 = vpack.c.b16 %v2075, %v2067
    %v2364 = vpack.c.b16 %v2076, %v2068
    %v2365 = vpack.c.b16 %v2077, %v2069
    %v2366 = vpack.c.b16 %v2078, %v2070
    %v2367 = vpack.c.b16 %v2079, %v2071
    %v2368 = vpack.c.b16 %v2080, %v2072
    %v2369 = vpack.c.b16 %v2089, %v2081
    %v2370 = vpack.c.b16 %v2090, %v2082
    %v2371 = vpack.c.b16 %v2091, %v2083
    %v2372 = vpack.c.b16 %v2092, %v2084
    %v2373 = vpack.c.b16 %v2093, %v2085
    %v2374 = vpack.c.b16 %v2094, %v2086
    %v2375 = vpack.c.b16 %v2095, %v2087
    %v2376 = vpack.c.b16 %v2096, %v2088
    %v2377 = vpack.c.b16 %v2105, %v2097
    %v2378 = vpack.c.b16 %v2106, %v2098
    %v2379 = vpack.c.b16 %v2107, %v2099
    %v2380 = vpack.c.b16 %v2108, %v2100
    %v2381 = vpack.c.b16 %v2109, %v2101
    %v2382 = vpack.c.b16 %v2110, %v2102
    %v2383 = vpack.c.b16 %v2111, %v2103
    %v2384 = vpack.c.b16 %v2112, %v2104
    %v2385 = vpack.c.b16 %v2121, %v2113
    %v2386 = vpack.c.b16 %v2122, %v2114
    %v2387 = vpack.c.b16 %v2123, %v2115
    %v2388 = vpack.c.b16 %v2124, %v2116
    %v2389 = vpack.c.b16 %v2125, %v2117
    %v2390 = vpack.c.b16 %v2126, %v2118
    %v2391 = vpack.c.b16 %v2127, %v2119
    %v2392 = vpack.c.b16 %v2128, %v2120
    %v2393 = vpack.c.b16 %v2137, %v2129
    %v2394 = vpack.c.b16 %v2138, %v2130
    %v2395 = vpack.c.b16 %v2139, %v2131
    %v2396 = vpack.c.b16 %v2140, %v2132
    %v2397 = vpack.c.b16 %v2141, %v2133
    %v2398 = vpack.c.b16 %v2142, %v2134
    %v2399 = vpack.c.b16 %v2143, %v2135
    %v2400 = vpack.c.b16 %v2144, %v2136
    %2657 = vmatprep.subr.bf16.mxu0 %v2146
    %2658 = vmatpush1.bf16.msra.mxu0 %v2145
    %2659 = vmatprep.subr.bf16.mxu0 %v2154
    %2660 = vmatpush1.bf16.msra.mxu0 %v2153
    %2661 = vmatprep.subr.bf16.mxu0 %v2162
    %2662 = vmatpush1.bf16.msra.mxu0 %v2161
    %2663 = vmatprep.subr.bf16.mxu0 %v2170
    %2664 = vmatpush1.bf16.msra.mxu0 %v2169
    %2665 = vmatprep.subr.bf16.mxu0 %v2178
    %2666 = vmatpush1.bf16.msra.mxu0 %v2177
    %2667 = vmatprep.subr.bf16.mxu0 %v2186
    %2668 = vmatpush1.bf16.msra.mxu0 %v2185
    %2669 = vmatprep.subr.bf16.mxu0 %v2194
    %2670 = vmatpush1.bf16.msra.mxu0 %v2193
    %2671 = vmatprep.subr.bf16.mxu0 %v2202
    %2672 = vmatpush1.bf16.msra.mxu0 %v2201
    %2673 = vmatprep.subr.bf16.mxu0 %v2210
    %2674 = vmatpush1.bf16.msra.mxu0 %v2209
    %2675 = vmatprep.subr.bf16.mxu0 %v2218
    %2676 = vmatpush1.bf16.msra.mxu0 %v2217
    %2677 = vmatprep.subr.bf16.mxu0 %v2226
    %2678 = vmatpush1.bf16.msra.mxu0 %v2225
    %2679 = vmatprep.subr.bf16.mxu0 %v2234
    %2680 = vmatpush1.bf16.msra.mxu0 %v2233
    %2681 = vmatprep.subr.bf16.mxu0 %v2242
    %2682 = vmatpush1.bf16.msra.mxu0 %v2241
    %2683 = vmatprep.subr.bf16.mxu0 %v2250
    %2684 = vmatpush1.bf16.msra.mxu0 %v2249
    %2685 = vmatprep.subr.bf16.mxu0 %v2258
    %2686 = vmatpush1.bf16.msra.mxu0 %v2257
    %2687 = vmatprep.subr.bf16.mxu0 %v2266
    %2688 = vmatpush1.bf16.msra.mxu0 %v2265
    %2689 = vmatprep.mubr.bf16.mxu0 %v1076
    %2690 = vmatmul.mubr.bf16.gmra.mrb[0].mxu0 %v1075
    %v2691 = vpop.f32.mrb[0].mxu0
    %v2692 = vadd.f32 %v1340, %v2691
    %v2693 = vpop.f32.mrb[0].mxu0
    %v2694 = vadd.f32 %v1344, %v2693
    %v2695 = vpop.f32.mrb[0].mxu0
    %v2696 = vpop.f32.mrb[0].mxu0
    %2697 = vdwg.mxu0
    %2698 = vmatprep.subr.bf16.mxu0 %v2274
    %2699 = vmatpush1.bf16.msra.mxu0 %v2273
    %2700 = vmatprep.subr.bf16.mxu0 %v2282
    %2701 = vmatpush1.bf16.msra.mxu0 %v2281
    %2702 = vmatprep.subr.bf16.mxu0 %v2290
    %2703 = vmatpush1.bf16.msra.mxu0 %v2289
    %2704 = vmatprep.subr.bf16.mxu0 %v2298
    %2705 = vmatpush1.bf16.msra.mxu0 %v2297
    %2706 = vmatprep.subr.bf16.mxu0 %v2306
    %2707 = vmatpush1.bf16.msra.mxu0 %v2305
    %2708 = vmatprep.subr.bf16.mxu0 %v2314
    %2709 = vmatpush1.bf16.msra.mxu0 %v2313
    %2710 = vmatprep.subr.bf16.mxu0 %v2322
    %2711 = vmatpush1.bf16.msra.mxu0 %v2321
    %2712 = vmatprep.subr.bf16.mxu0 %v2330
    %2713 = vmatpush1.bf16.msra.mxu0 %v2329
    %2714 = vmatprep.subr.bf16.mxu0 %v2338
    %2715 = vmatpush1.bf16.msra.mxu0 %v2337
    %2716 = vmatprep.subr.bf16.mxu0 %v2346
    %2717 = vmatpush1.bf16.msra.mxu0 %v2345
    %2718 = vmatprep.subr.bf16.mxu0 %v2354
    %2719 = vmatpush1.bf16.msra.mxu0 %v2353
    %2720 = vmatprep.subr.bf16.mxu0 %v2362
    %2721 = vmatpush1.bf16.msra.mxu0 %v2361
    %2722 = vmatprep.subr.bf16.mxu0 %v2370
    %2723 = vmatpush1.bf16.msra.mxu0 %v2369
    %2724 = vmatprep.subr.bf16.mxu0 %v2378
    %2725 = vmatpush1.bf16.msra.mxu0 %v2377
    %2726 = vmatprep.subr.bf16.mxu0 %v2386
    %2727 = vmatpush1.bf16.msra.mxu0 %v2385
    %2728 = vmatprep.subr.bf16.mxu0 %v2394
    %2729 = vmatpush1.bf16.msra.mxu0 %v2393
    %2730 = vmatprep.mubr.bf16.mxu0 %v1078
    %2731 = vmatmul.mubr.bf16.gmra.mrb[0].mxu0 %v1077
    %v2732 = vpop.f32.mrb[0].mxu0
    %v2733 = vadd.f32 %v2692, %v2732
    %v2734 = vpop.f32.mrb[0].mxu0
    %v2735 = vadd.f32 %v2694, %v2734
    %v2736 = vpop.f32.mrb[0].mxu0
    %v2737 = vpop.f32.mrb[0].mxu0
    %2738 = vdwg.mxu0
    %2739 = vmatprep.subr.bf16.mxu0 %v2148
    %2740 = vmatpush1.bf16.msra.mxu0 %v2147
    %2741 = vmatprep.subr.bf16.mxu0 %v2156
    %2742 = vmatpush1.bf16.msra.mxu0 %v2155
    %2743 = vmatprep.subr.bf16.mxu0 %v2164
    %2744 = vmatpush1.bf16.msra.mxu0 %v2163
    %2745 = vmatprep.subr.bf16.mxu0 %v2172
    %2746 = vmatpush1.bf16.msra.mxu0 %v2171
    %2747 = vmatprep.subr.bf16.mxu0 %v2180
    %2748 = vmatpush1.bf16.msra.mxu0 %v2179
    %2749 = vmatprep.subr.bf16.mxu0 %v2188
    %2750 = vmatpush1.bf16.msra.mxu0 %v2187
    %2751 = vmatprep.subr.bf16.mxu0 %v2196
    %2752 = vmatpush1.bf16.msra.mxu0 %v2195
    %2753 = vmatprep.subr.bf16.mxu0 %v2204
    %2754 = vmatpush1.bf16.msra.mxu0 %v2203
    %2755 = vmatprep.subr.bf16.mxu0 %v2212
    %2756 = vmatpush1.bf16.msra.mxu0 %v2211
    %2757 = vmatprep.subr.bf16.mxu0 %v2220
    %2758 = vmatpush1.bf16.msra.mxu0 %v2219
    %2759 = vmatprep.subr.bf16.mxu0 %v2228
    %2760 = vmatpush1.bf16.msra.mxu0 %v2227
    %2761 = vmatprep.subr.bf16.mxu0 %v2236
    %2762 = vmatpush1.bf16.msra.mxu0 %v2235
    %2763 = vmatprep.subr.bf16.mxu0 %v2244
    %2764 = vmatpush1.bf16.msra.mxu0 %v2243
    %2765 = vmatprep.subr.bf16.mxu0 %v2252
    %2766 = vmatpush1.bf16.msra.mxu0 %v2251
    %2767 = vmatprep.subr.bf16.mxu0 %v2260
    %2768 = vmatpush1.bf16.msra.mxu0 %v2259
    %2769 = vmatprep.subr.bf16.mxu0 %v2268
    %2770 = vmatpush1.bf16.msra.mxu0 %v2267
    %2771 = vmatprep.mubr.bf16.mxu0 %v1076
    %2772 = vmatmul.mubr.bf16.gmra.mrb[0].mxu0 %v1075
    %v2773 = vpop.f32.mrb[0].mxu0
    %v2774 = vadd.f32 %v1348, %v2773
    %v2775 = vpop.f32.mrb[0].mxu0
    %v2776 = vadd.f32 %v1352, %v2775
    %v2777 = vpop.f32.mrb[0].mxu0
    %v2778 = vpop.f32.mrb[0].mxu0
    %2779 = vdwg.mxu0
    %2780 = vmatprep.subr.bf16.mxu0 %v2276
    %2781 = vmatpush1.bf16.msra.mxu0 %v2275
    %2782 = vmatprep.subr.bf16.mxu0 %v2284
    %2783 = vmatpush1.bf16.msra.mxu0 %v2283
    %2784 = vmatprep.subr.bf16.mxu0 %v2292
    %2785 = vmatpush1.bf16.msra.mxu0 %v2291
    %2786 = vmatprep.subr.bf16.mxu0 %v2300
    %2787 = vmatpush1.bf16.msra.mxu0 %v2299
    %2788 = vmatprep.subr.bf16.mxu0 %v2308
    %2789 = vmatpush1.bf16.msra.mxu0 %v2307
    %2790 = vmatprep.subr.bf16.mxu0 %v2316
    %2791 = vmatpush1.bf16.msra.mxu0 %v2315
    %2792 = vmatprep.subr.bf16.mxu0 %v2324
    %2793 = vmatpush1.bf16.msra.mxu0 %v2323
    %2794 = vmatprep.subr.bf16.mxu0 %v2332
    %2795 = vmatpush1.bf16.msra.mxu0 %v2331
    %2796 = vmatprep.subr.bf16.mxu0 %v2340
    %2797 = vmatpush1.bf16.msra.mxu0 %v2339
    %2798 = vmatprep.subr.bf16.mxu0 %v2348
    %2799 = vmatpush1.bf16.msra.mxu0 %v2347
    %2800 = vmatprep.subr.bf16.mxu0 %v2356
    %2801 = vmatpush1.bf16.msra.mxu0 %v2355
    %2802 = vmatprep.subr.bf16.mxu0 %v2364
    %2803 = vmatpush1.bf16.msra.mxu0 %v2363
    %2804 = vmatprep.subr.bf16.mxu0 %v2372
    %2805 = vmatpush1.bf16.msra.mxu0 %v2371
    %2806 = vmatprep.subr.bf16.mxu0 %v2380
    %2807 = vmatpush1.bf16.msra.mxu0 %v2379
    %2808 = vmatprep.subr.bf16.mxu0 %v2388
    %2809 = vmatpush1.bf16.msra.mxu0 %v2387
    %2810 = vmatprep.subr.bf16.mxu0 %v2396
    %2811 = vmatpush1.bf16.msra.mxu0 %v2395
    %2812 = vmatprep.mubr.bf16.mxu0 %v1078
    %2813 = vmatmul.mubr.bf16.gmra.mrb[0].mxu0 %v1077
    %v2814 = vpop.f32.mrb[0].mxu0
    %v2815 = vadd.f32 %v2774, %v2814
    %v2816 = vpop.f32.mrb[0].mxu0
    %v2817 = vadd.f32 %v2776, %v2816
    %v2818 = vpop.f32.mrb[0].mxu0
    %v2819 = vpop.f32.mrb[0].mxu0
    %2820 = vdwg.mxu0
    %2821 = vmatprep.subr.bf16.mxu0 %v2150
    %2822 = vmatpush1.bf16.msra.mxu0 %v2149
    %2823 = vmatprep.subr.bf16.mxu0 %v2158
    %2824 = vmatpush1.bf16.msra.mxu0 %v2157
    %2825 = vmatprep.subr.bf16.mxu0 %v2166
    %2826 = vmatpush1.bf16.msra.mxu0 %v2165
    %2827 = vmatprep.subr.bf16.mxu0 %v2174
    %2828 = vmatpush1.bf16.msra.mxu0 %v2173
    %2829 = vmatprep.subr.bf16.mxu0 %v2182
    %2830 = vmatpush1.bf16.msra.mxu0 %v2181
    %2831 = vmatprep.subr.bf16.mxu0 %v2190
    %2832 = vmatpush1.bf16.msra.mxu0 %v2189
    %2833 = vmatprep.subr.bf16.mxu0 %v2198
    %2834 = vmatpush1.bf16.msra.mxu0 %v2197
    %2835 = vmatprep.subr.bf16.mxu0 %v2206
    %2836 = vmatpush1.bf16.msra.mxu0 %v2205
    %2837 = vmatprep.subr.bf16.mxu0 %v2214
    %2838 = vmatpush1.bf16.msra.mxu0 %v2213
    %2839 = vmatprep.subr.bf16.mxu0 %v2222
    %2840 = vmatpush1.bf16.msra.mxu0 %v2221
    %2841 = vmatprep.subr.bf16.mxu0 %v2230
    %2842 = vmatpush1.bf16.msra.mxu0 %v2229
    %2843 = vmatprep.subr.bf16.mxu0 %v2238
    %2844 = vmatpush1.bf16.msra.mxu0 %v2237
    %2845 = vmatprep.subr.bf16.mxu0 %v2246
    %2846 = vmatpush1.bf16.msra.mxu0 %v2245
    %2847 = vmatprep.subr.bf16.mxu0 %v2254
    %2848 = vmatpush1.bf16.msra.mxu0 %v2253
    %2849 = vmatprep.subr.bf16.mxu0 %v2262
    %2850 = vmatpush1.bf16.msra.mxu0 %v2261
    %2851 = vmatprep.subr.bf16.mxu0 %v2270
    %2852 = vmatpush1.bf16.msra.mxu0 %v2269
    %2853 = vmatprep.mubr.bf16.mxu0 %v1076
    %2854 = vmatmul.mubr.bf16.gmra.mrb[0].mxu0 %v1075
    %v2855 = vpop.f32.mrb[0].mxu0
    %v2856 = vadd.f32 %v1356, %v2855
    %v2857 = vpop.f32.mrb[0].mxu0
    %v2858 = vadd.f32 %v1360, %v2857
    %v2859 = vpop.f32.mrb[0].mxu0
    %v2860 = vpop.f32.mrb[0].mxu0
    %2861 = vdwg.mxu0
    %2862 = vmatprep.subr.bf16.mxu0 %v2278
    %2863 = vmatpush1.bf16.msra.mxu0 %v2277
    %2864 = vmatprep.subr.bf16.mxu0 %v2286
    %2865 = vmatpush1.bf16.msra.mxu0 %v2285
    %2866 = vmatprep.subr.bf16.mxu0 %v2294
    %2867 = vmatpush1.bf16.msra.mxu0 %v2293
    %2868 = vmatprep.subr.bf16.mxu0 %v2302
    %2869 = vmatpush1.bf16.msra.mxu0 %v2301
    %2870 = vmatprep.subr.bf16.mxu0 %v2310
    %2871 = vmatpush1.bf16.msra.mxu0 %v2309
    %2872 = vmatprep.subr.bf16.mxu0 %v2318
    %2873 = vmatpush1.bf16.msra.mxu0 %v2317
    %2874 = vmatprep.subr.bf16.mxu0 %v2326
    %2875 = vmatpush1.bf16.msra.mxu0 %v2325
    %2876 = vmatprep.subr.bf16.mxu0 %v2334
    %2877 = vmatpush1.bf16.msra.mxu0 %v2333
    %2878 = vmatprep.subr.bf16.mxu0 %v2342
    %2879 = vmatpush1.bf16.msra.mxu0 %v2341
    %2880 = vmatprep.subr.bf16.mxu0 %v2350
    %2881 = vmatpush1.bf16.msra.mxu0 %v2349
    %2882 = vmatprep.subr.bf16.mxu0 %v2358
    %2883 = vmatpush1.bf16.msra.mxu0 %v2357
    %2884 = vmatprep.subr.bf16.mxu0 %v2366
    %2885 = vmatpush1.bf16.msra.mxu0 %v2365
    %2886 = vmatprep.subr.bf16.mxu0 %v2374
    %2887 = vmatpush1.bf16.msra.mxu0 %v2373
    %2888 = vmatprep.subr.bf16.mxu0 %v2382
    %2889 = vmatpush1.bf16.msra.mxu0 %v2381
    %2890 = vmatprep.subr.bf16.mxu0 %v2390
    %2891 = vmatpush1.bf16.msra.mxu0 %v2389
    %2892 = vmatprep.subr.bf16.mxu0 %v2398
    %2893 = vmatpush1.bf16.msra.mxu0 %v2397
    %2894 = vmatprep.mubr.bf16.mxu0 %v1078
    %2895 = vmatmul.mubr.bf16.gmra.mrb[0].mxu0 %v1077
    %v2896 = vpop.f32.mrb[0].mxu0
    %v2897 = vadd.f32 %v2856, %v2896
    %v2898 = vpop.f32.mrb[0].mxu0
    %v2899 = vadd.f32 %v2858, %v2898
    %v2900 = vpop.f32.mrb[0].mxu0
    %v2901 = vpop.f32.mrb[0].mxu0
    %2902 = vdwg.mxu0
    %2903 = vmatprep.subr.bf16.mxu0 %v2152
    %2904 = vmatpush1.bf16.msra.mxu0 %v2151
    %2905 = vmatprep.subr.bf16.mxu0 %v2160
    %2906 = vmatpush1.bf16.msra.mxu0 %v2159
    %2907 = vmatprep.subr.bf16.mxu0 %v2168
    %2908 = vmatpush1.bf16.msra.mxu0 %v2167
    %2909 = vmatprep.subr.bf16.mxu0 %v2176
    %2910 = vmatpush1.bf16.msra.mxu0 %v2175
    %2911 = vmatprep.subr.bf16.mxu0 %v2184
    %2912 = vmatpush1.bf16.msra.mxu0 %v2183
    %2913 = vmatprep.subr.bf16.mxu0 %v2192
    %2914 = vmatpush1.bf16.msra.mxu0 %v2191
    %2915 = vmatprep.subr.bf16.mxu0 %v2200
    %2916 = vmatpush1.bf16.msra.mxu0 %v2199
    %2917 = vmatprep.subr.bf16.mxu0 %v2208
    %2918 = vmatpush1.bf16.msra.mxu0 %v2207
    %2919 = vmatprep.subr.bf16.mxu0 %v2216
    %2920 = vmatpush1.bf16.msra.mxu0 %v2215
    %2921 = vmatprep.subr.bf16.mxu0 %v2224
    %2922 = vmatpush1.bf16.msra.mxu0 %v2223
    %2923 = vmatprep.subr.bf16.mxu0 %v2232
    %2924 = vmatpush1.bf16.msra.mxu0 %v2231
    %2925 = vmatprep.subr.bf16.mxu0 %v2240
    %2926 = vmatpush1.bf16.msra.mxu0 %v2239
    %2927 = vmatprep.subr.bf16.mxu0 %v2248
    %2928 = vmatpush1.bf16.msra.mxu0 %v2247
    %2929 = vmatprep.subr.bf16.mxu0 %v2256
    %2930 = vmatpush1.bf16.msra.mxu0 %v2255
    %2931 = vmatprep.subr.bf16.mxu0 %v2264
    %2932 = vmatpush1.bf16.msra.mxu0 %v2263
    %2933 = vmatprep.subr.bf16.mxu0 %v2272
    %2934 = vmatpush1.bf16.msra.mxu0 %v2271
    %2935 = vmatprep.mubr.bf16.mxu0 %v1076
    %2936 = vmatmul.mubr.bf16.gmra.mrb[0].mxu0 %v1075
    %v2937 = vpop.f32.mrb[0].mxu0
    %v2938 = vadd.f32 %v1364, %v2937
    %v2939 = vpop.f32.mrb[0].mxu0
    %v2940 = vadd.f32 %v1368, %v2939
    %v2941 = vpop.f32.mrb[0].mxu0
    %v2942 = vpop.f32.mrb[0].mxu0
    %2943 = vdwg.mxu0
    %2944 = vmatprep.subr.bf16.mxu0 %v2280
    %2945 = vmatpush1.bf16.msra.mxu0 %v2279
    %2946 = vmatprep.subr.bf16.mxu0 %v2288
    %2947 = vmatpush1.bf16.msra.mxu0 %v2287
    %2948 = vmatprep.subr.bf16.mxu0 %v2296
    %2949 = vmatpush1.bf16.msra.mxu0 %v2295
    %2950 = vmatprep.subr.bf16.mxu0 %v2304
    %2951 = vmatpush1.bf16.msra.mxu0 %v2303
    %2952 = vmatprep.subr.bf16.mxu0 %v2312
    %2953 = vmatpush1.bf16.msra.mxu0 %v2311
    %2954 = vmatprep.subr.bf16.mxu0 %v2320
    %2955 = vmatpush1.bf16.msra.mxu0 %v2319
    %2956 = vmatprep.subr.bf16.mxu0 %v2328
    %2957 = vmatpush1.bf16.msra.mxu0 %v2327
    %2958 = vmatprep.subr.bf16.mxu0 %v2336
    %2959 = vmatpush1.bf16.msra.mxu0 %v2335
    %2960 = vmatprep.subr.bf16.mxu0 %v2344
    %2961 = vmatpush1.bf16.msra.mxu0 %v2343
    %2962 = vmatprep.subr.bf16.mxu0 %v2352
    %2963 = vmatpush1.bf16.msra.mxu0 %v2351
    %2964 = vmatprep.subr.bf16.mxu0 %v2360
    %2965 = vmatpush1.bf16.msra.mxu0 %v2359
    %2966 = vmatprep.subr.bf16.mxu0 %v2368
    %2967 = vmatpush1.bf16.msra.mxu0 %v2367
    %2968 = vmatprep.subr.bf16.mxu0 %v2376
    %2969 = vmatpush1.bf16.msra.mxu0 %v2375
    %2970 = vmatprep.subr.bf16.mxu0 %v2384
    %2971 = vmatpush1.bf16.msra.mxu0 %v2383
    %2972 = vmatprep.subr.bf16.mxu0 %v2392
    %2973 = vmatpush1.bf16.msra.mxu0 %v2391
    %2974 = vmatprep.subr.bf16.mxu0 %v2400
    %2975 = vmatpush1.bf16.msra.mxu0 %v2399
    %2976 = vmatprep.mubr.bf16.mxu0 %v1078
    %2977 = vmatmul.mubr.bf16.gmra.mrb[0].mxu0 %v1077
    %v2978 = vpop.f32.mrb[0].mxu0
    %v2979 = vadd.f32 %v2938, %v2978
    %v2980 = vpop.f32.mrb[0].mxu0
    %v2981 = vadd.f32 %v2940, %v2980
    %v2982 = vpop.f32.mrb[0].mxu0
    %v2983 = vpop.f32.mrb[0].mxu0
    %2984 = vdwg.mxu0
    %vm2985 = vcmp.gt.f32.partialorder %v2733, 0.0
    %vm2986 = vcmp.gt.f32.partialorder %v2735, 0.0
    %vm2987 = vcmp.gt.f32.partialorder %v2815, 0.0
    %vm2988 = vcmp.gt.f32.partialorder %v2817, 0.0
    %vm2989 = vcmp.gt.f32.partialorder %v2897, 0.0
    %vm2990 = vcmp.gt.f32.partialorder %v2899, 0.0
    %vm2991 = vcmp.gt.f32.partialorder %v2979, 0.0
    %vm2992 = vcmp.gt.f32.partialorder %v2981, 0.0
    %v2993 = vmul.f32 %v2733, 0.2
    %v2994 = vmul.f32 %v2735, 0.2
    %v2995 = vmul.f32 %v2815, 0.2
    %v2996 = vmul.f32 %v2817, 0.2
    %v2997 = vmul.f32 %v2897, 0.2
    %v2998 = vmul.f32 %v2899, 0.2
    %v2999 = vmul.f32 %v2979, 0.2
    %v3000 = vmul.f32 %v2981, 0.2
    %v3001 = vsel %vm2985, %v2733, %v2993
    %v3002 = vsel %vm2986, %v2735, %v2994
    %v3003 = vsel %vm2987, %v2815, %v2995
    %v3004 = vsel %vm2988, %v2817, %v2996
    %v3005 = vsel %vm2989, %v2897, %v2997
    %v3006 = vsel %vm2990, %v2899, %v2998
    %v3007 = vsel %vm2991, %v2979, %v2999
    %v3008 = vsel %vm2992, %v2981, %v3000
    %v3009 = vld [vmem:[#allocation10 + $0x1b] sm:$0xff]
    %v3010 = vld [vmem:[#allocation10 + $0x23] sm:$0xff]
    %v3011 = vrot.slane %v3001, 4
    %v3012 = vadd.f32 %v3001, %v3011
    %v3013 = vrot.slane %v3012, 2
    %v3014 = vadd.f32 %v3012, %v3013
    %v3015 = vrot.slane %v3014, 1
    %v3016 = vadd.f32 %v3014, %v3015
    %v3017 = vrot.slane %v3002, 4
    %v3018 = vadd.f32 %v3002, %v3017
    %v3019 = vrot.slane %v3018, 2
    %v3020 = vadd.f32 %v3018, %v3019
    %v3021 = vrot.slane %v3020, 1
    %v3022 = vadd.f32 %v3020, %v3021
    %v3023 = vrot.slane %v3003, 4
    %v3024 = vadd.f32 %v3003, %v3023
    %v3025 = vrot.slane %v3024, 2
    %v3026 = vadd.f32 %v3024, %v3025
    %v3027 = vrot.slane %v3026, 1
    %v3028 = vadd.f32 %v3026, %v3027
    %v3029 = vrot.slane %v3004, 4
    %v3030 = vadd.f32 %v3004, %v3029
    %v3031 = vrot.slane %v3030, 2
    %v3032 = vadd.f32 %v3030, %v3031
    %v3033 = vrot.slane %v3032, 1
    %v3034 = vadd.f32 %v3032, %v3033
    %v3035 = vrot.slane %v3005, 4
    %v3036 = vadd.f32 %v3005, %v3035
    %v3037 = vrot.slane %v3036, 2
    %v3038 = vadd.f32 %v3036, %v3037
    %v3039 = vrot.slane %v3038, 1
    %v3040 = vadd.f32 %v3038, %v3039
    %v3041 = vrot.slane %v3006, 4
    %v3042 = vadd.f32 %v3006, %v3041
    %v3043 = vrot.slane %v3042, 2
    %v3044 = vadd.f32 %v3042, %v3043
    %v3045 = vrot.slane %v3044, 1
    %v3046 = vadd.f32 %v3044, %v3045
    %v3047 = vrot.slane %v3007, 4
    %v3048 = vadd.f32 %v3007, %v3047
    %v3049 = vrot.slane %v3048, 2
    %v3050 = vadd.f32 %v3048, %v3049
    %v3051 = vrot.slane %v3050, 1
    %v3052 = vadd.f32 %v3050, %v3051
    %v3053 = vrot.slane %v3008, 4
    %v3054 = vadd.f32 %v3008, %v3053
    %v3055 = vrot.slane %v3054, 2
    %v3056 = vadd.f32 %v3054, %v3055
    %v3057 = vrot.slane %v3056, 1
    %v3058 = vadd.f32 %v3056, %v3057
    %v3059 = vmul.f32 %v3016, %v392
    %v3060 = vmul.f32 %v3022, %v392
    %v3061 = vmul.f32 %v3028, %v392
    %v3062 = vmul.f32 %v3034, %v392
    %v3063 = vmul.f32 %v3040, %v392
    %v3064 = vmul.f32 %v3046, %v392
    %v3065 = vmul.f32 %v3052, %v392
    %v3066 = vmul.f32 %v3058, %v392
    %v3067 = vsub.f32 %v3001, %v3059
    %v3068 = vsub.f32 %v3002, %v3060
    %v3069 = vsub.f32 %v3003, %v3061
    %v3070 = vsub.f32 %v3004, %v3062
    %v3071 = vsub.f32 %v3005, %v3063
    %v3072 = vsub.f32 %v3006, %v3064
    %v3073 = vsub.f32 %v3007, %v3065
    %v3074 = vsub.f32 %v3008, %v3066
    %v3075 = vmul.f32 %v3067, %v3067
    %v3076 = vmul.f32 %v3068, %v3068
    %v3077 = vmul.f32 %v3069, %v3069
    %v3078 = vmul.f32 %v3070, %v3070
    %v3079 = vmul.f32 %v3071, %v3071
    %v3080 = vmul.f32 %v3072, %v3072
    %v3081 = vmul.f32 %v3073, %v3073
    %v3082 = vmul.f32 %v3074, %v3074
    %v3083 = vrot.slane %v3075, 4
    %v3084 = vadd.f32 %v3075, %v3083
    %v3085 = vrot.slane %v3084, 2
    %v3086 = vadd.f32 %v3084, %v3085
    %v3087 = vrot.slane %v3086, 1
    %v3088 = vadd.f32 %v3086, %v3087
    %v3089 = vrot.slane %v3076, 4
    %v3090 = vadd.f32 %v3076, %v3089
    %v3091 = vrot.slane %v3090, 2
    %v3092 = vadd.f32 %v3090, %v3091
    %v3093 = vrot.slane %v3092, 1
    %v3094 = vadd.f32 %v3092, %v3093
    %v3095 = vrot.slane %v3077, 4
    %v3096 = vadd.f32 %v3077, %v3095
    %v3097 = vrot.slane %v3096, 2
    %v3098 = vadd.f32 %v3096, %v3097
    %v3099 = vrot.slane %v3098, 1
    %v3100 = vadd.f32 %v3098, %v3099
    %v3101 = vrot.slane %v3078, 4
    %v3102 = vadd.f32 %v3078, %v3101
    %v3103 = vrot.slane %v3102, 2
    %v3104 = vadd.f32 %v3102, %v3103
    %v3105 = vrot.slane %v3104, 1
    %v3106 = vadd.f32 %v3104, %v3105
    %v3107 = vrot.slane %v3079, 4
    %v3108 = vadd.f32 %v3079, %v3107
    %v3109 = vrot.slane %v3108, 2
    %v3110 = vadd.f32 %v3108, %v3109
    %v3111 = vrot.slane %v3110, 1
    %v3112 = vadd.f32 %v3110, %v3111
    %v3113 = vrot.slane %v3080, 4
    %v3114 = vadd.f32 %v3080, %v3113
    %v3115 = vrot.slane %v3114, 2
    %v3116 = vadd.f32 %v3114, %v3115
    %v3117 = vrot.slane %v3116, 1
    %v3118 = vadd.f32 %v3116, %v3117
    %v3119 = vrot.slane %v3081, 4
    %v3120 = vadd.f32 %v3081, %v3119
    %v3121 = vrot.slane %v3120, 2
    %v3122 = vadd.f32 %v3120, %v3121
    %v3123 = vrot.slane %v3122, 1
    %v3124 = vadd.f32 %v3122, %v3123
    %v3125 = vrot.slane %v3082, 4
    %v3126 = vadd.f32 %v3082, %v3125
    %v3127 = vrot.slane %v3126, 2
    %v3128 = vadd.f32 %v3126, %v3127
    %v3129 = vrot.slane %v3128, 1
    %v3130 = vadd.f32 %v3128, %v3129
    %v3131 = vmul.f32 %v3088, %v392
    %v3132 = vmul.f32 %v3094, %v392
    %v3133 = vmul.f32 %v3100, %v392
    %v3134 = vmul.f32 %v3106, %v392
    %v3135 = vmul.f32 %v3112, %v392
    %v3136 = vmul.f32 %v3118, %v392
    %v3137 = vmul.f32 %v3124, %v392
    %v3138 = vmul.f32 %v3130, %v392
    %v3139 = vadd.f32 %v3131, 0.8
    %v3140 = vadd.f32 %v3132, 0.8
    %v3141 = vadd.f32 %v3133, 0.8
    %v3142 = vadd.f32 %v3134, 0.8
    %v3143 = vadd.f32 %v3135, 0.8
    %v3144 = vadd.f32 %v3136, 0.8
    %v3145 = vadd.f32 %v3137, 0.8
    %v3146 = vadd.f32 %v3138, 0.8
    %v3147 = vrsqrt.pop %v3139
    %v3148 = vrsqrt.pop %v3140
    %v3149 = vrsqrt.pop %v3141
    %v3150 = vrsqrt.pop %v3142
    %v3151 = vrsqrt.pop %v3143
    %v3152 = vrsqrt.pop %v3144
    %v3153 = vrsqrt.pop %v3145
    %v3154 = vrsqrt.pop %v3146
    %v3155 = vmul.f32 %v3067, %v3147
    %v3156 = vmul.f32 %v3068, %v3148
    %v3157 = vmul.f32 %v3069, %v3149
    %v3158 = vmul.f32 %v3070, %v3150
    %v3159 = vmul.f32 %v3071, %v3151
    %v3160 = vmul.f32 %v3072, %v3152
    %v3161 = vmul.f32 %v3073, %v3153
    %v3162 = vmul.f32 %v3074, %v3154
    %v3164 = vlaneseq
    %v3165 = vshrl.u32 %v3164, 7
    %v3166 = vsub.s32 0, %v3165
    %v3167 = vrot.slane %v3009, %v3166
    %v3168 = vlaneseq
    %v3169 = vshrl.u32 %v3168, 7
    %v3170 = vsub.s32 1, %v3169
    %v3171 = vrot.slane %v3009, %v3170
    %v3172 = vlaneseq
    %v3173 = vshrl.u32 %v3172, 7
    %v3174 = vsub.s32 2, %v3173
    %v3175 = vrot.slane %v3009, %v3174
    %v3176 = vlaneseq
    %v3177 = vshrl.u32 %v3176, 7
    %v3178 = vsub.s32 3, %v3177
    %v3179 = vrot.slane %v3009, %v3178
    %v3180 = vlaneseq
    %v3181 = vshrl.u32 %v3180, 7
    %v3182 = vsub.s32 4, %v3181
    %v3183 = vrot.slane %v3009, %v3182
    %v3184 = vlaneseq
    %v3185 = vshrl.u32 %v3184, 7
    %v3186 = vsub.s32 5, %v3185
    %v3187 = vrot.slane %v3009, %v3186
    %v3188 = vlaneseq
    %v3189 = vshrl.u32 %v3188, 7
    %v3190 = vsub.s32 6, %v3189
    %v3191 = vrot.slane %v3009, %v3190
    %v3192 = vlaneseq
    %v3193 = vshrl.u32 %v3192, 7
    %v3194 = vsub.s32 7, %v3193
    %v3195 = vrot.slane %v3009, %v3194
    %v3204 = vmul.f32 %v3155, %v3167
    %v3205 = vmul.f32 %v3156, %v3171
    %v3206 = vmul.f32 %v3157, %v3175
    %v3207 = vmul.f32 %v3158, %v3179
    %v3208 = vmul.f32 %v3159, %v3183
    %v3209 = vmul.f32 %v3160, %v3187
    %v3210 = vmul.f32 %v3161, %v3191
    %v3211 = vmul.f32 %v3162, %v3195
    %v3213 = vlaneseq
    %v3214 = vshrl.u32 %v3213, 7
    %v3215 = vsub.s32 0, %v3214
    %v3216 = vrot.slane %v3010, %v3215
    %v3217 = vlaneseq
    %v3218 = vshrl.u32 %v3217, 7
    %v3219 = vsub.s32 1, %v3218
    %v3220 = vrot.slane %v3010, %v3219
    %v3221 = vlaneseq
    %v3222 = vshrl.u32 %v3221, 7
    %v3223 = vsub.s32 2, %v3222
    %v3224 = vrot.slane %v3010, %v3223
    %v3225 = vlaneseq
    %v3226 = vshrl.u32 %v3225, 7
    %v3227 = vsub.s32 3, %v3226
    %v3228 = vrot.slane %v3010, %v3227
    %v3229 = vlaneseq
    %v3230 = vshrl.u32 %v3229, 7
    %v3231 = vsub.s32 4, %v3230
    %v3232 = vrot.slane %v3010, %v3231
    %v3233 = vlaneseq
    %v3234 = vshrl.u32 %v3233, 7
    %v3235 = vsub.s32 5, %v3234
    %v3236 = vrot.slane %v3010, %v3235
    %v3237 = vlaneseq
    %v3238 = vshrl.u32 %v3237, 7
    %v3239 = vsub.s32 6, %v3238
    %v3240 = vrot.slane %v3010, %v3239
    %v3241 = vlaneseq
    %v3242 = vshrl.u32 %v3241, 7
    %v3243 = vsub.s32 7, %v3242
    %v3244 = vrot.slane %v3010, %v3243
    %v3253 = vadd.f32 %v3204, %v3216
    %v3254 = vadd.f32 %v3205, %v3220
    %v3255 = vadd.f32 %v3206, %v3224
    %v3256 = vadd.f32 %v3207, %v3228
    %v3257 = vadd.f32 %v3208, %v3232
    %v3258 = vadd.f32 %v3209, %v3236
    %v3259 = vadd.f32 %v3210, %v3240
    %v3260 = vadd.f32 %v3211, %v3244
    %v3261 = vpack.c.bf16 %v3253, %v3253
    %v3262 = vpack.c.bf16 %v3254, %v3254
    %v3263 = vpack.c.bf16 %v3255, %v3255
    %v3264 = vpack.c.bf16 %v3256, %v3256
    %v3265 = vpack.c.bf16 %v3257, %v3257
    %v3266 = vpack.c.bf16 %v3258, %v3258
    %v3267 = vpack.c.bf16 %v3259, %v3259
    %v3268 = vpack.c.bf16 %v3260, %v3260
    %v3269 = vld [vmem:[#allocation9] sm:$0xff]
    %v3270 = vld [vmem:[#allocation9 + $0x8] sm:$0xff]
    %v3271 = vld [vmem:[#allocation9 + $0x10] sm:$0xff]
    %v3272 = vld [vmem:[#allocation9 + $0x18] sm:$0xf]
    %v3273 = vld [vmem:[#allocation9 + $0x1c] sm:$0xff]
    %v3274 = vld [vmem:[#allocation9 + $0x24] sm:$0xff]
    %v3275 = vld [vmem:[#allocation9 + $0x2c] sm:$0xff]
    %v3276 = vld [vmem:[#allocation9 + $0x34] sm:$0xf]
    %v3277 = vld [vmem:[#allocation9 + $0x38] sm:$0xff]
    %v3278 = vld [vmem:[#allocation9 + $0x40] sm:$0xff]
    %v3279 = vld [vmem:[#allocation9 + $0x48] sm:$0xff]
    %v3280 = vld [vmem:[#allocation9 + $0x50] sm:$0xf]
    %v3281 = vld [vmem:[#allocation9 + $0x54] sm:$0xff]
    %v3282 = vld [vmem:[#allocation9 + $0x5c] sm:$0xff]
    %v3283 = vld [vmem:[#allocation9 + $0x64] sm:$0xff]
    %v3284 = vld [vmem:[#allocation9 + $0x6c] sm:$0xf]
    %v3285 = vld [vmem:[#allocation9 + $0x70] sm:$0xff]
    %v3286 = vld [vmem:[#allocation9 + $0x78] sm:$0xff]
    %v3287 = vld [vmem:[#allocation9 + $0x80] sm:$0xff]
    %v3288 = vld [vmem:[#allocation9 + $0x88] sm:$0xf]
    %v3289 = vld [vmem:[#allocation9 + $0x8c] sm:$0xff]
    %v3290 = vld [vmem:[#allocation9 + $0x94] sm:$0xff]
    %v3291 = vld [vmem:[#allocation9 + $0x9c] sm:$0xff]
    %v3292 = vld [vmem:[#allocation9 + $0xa4] sm:$0xf]
    %v3293 = vld [vmem:[#allocation9 + $0xa8] sm:$0xff]
    %v3294 = vld [vmem:[#allocation9 + $0xb0] sm:$0xff]
    %v3295 = vld [vmem:[#allocation9 + $0xb8] sm:$0xff]
    %v3296 = vld [vmem:[#allocation9 + $0xc0] sm:$0xf]
    %v3297 = vld [vmem:[#allocation9 + $0xc4] sm:$0xff]
    %v3298 = vld [vmem:[#allocation9 + $0xcc] sm:$0xff]
    %v3299 = vld [vmem:[#allocation9 + $0xd4] sm:$0xff]
    %v3300 = vld [vmem:[#allocation9 + $0xdc] sm:$0xf]
    %v3301 = vld [vmem:[#allocation9 + $0xe0] sm:$0xff]
    %v3302 = vld [vmem:[#allocation9 + $0xe8] sm:$0xff]
    %v3303 = vld [vmem:[#allocation9 + $0xf0] sm:$0xff]
    %v3304 = vld [vmem:[#allocation9 + $0xf8] sm:$0xf]
    %v3305 = vld [vmem:[#allocation9 + $0xfc] sm:$0xff]
    %v3306 = vld [vmem:[#allocation9 + $0x104] sm:$0xff]
    %v3307 = vld [vmem:[#allocation9 + $0x10c] sm:$0xff]
    %v3308 = vld [vmem:[#allocation9 + $0x114] sm:$0xf]
    %v3309 = vld [vmem:[#allocation9 + $0x118] sm:$0xff]
    %v3310 = vld [vmem:[#allocation9 + $0x120] sm:$0xff]
    %v3311 = vld [vmem:[#allocation9 + $0x128] sm:$0xff]
    %v3312 = vld [vmem:[#allocation9 + $0x130] sm:$0xf]
    %v3313 = vld [vmem:[#allocation9 + $0x134] sm:$0xff]
    %v3314 = vld [vmem:[#allocation9 + $0x13c] sm:$0xff]
    %v3315 = vld [vmem:[#allocation9 + $0x144] sm:$0xff]
    %v3316 = vld [vmem:[#allocation9 + $0x14c] sm:$0xf]
    %v3317 = vld [vmem:[#allocation9 + $0x150] sm:$0xff]
    %v3318 = vld [vmem:[#allocation9 + $0x158] sm:$0xff]
    %v3319 = vld [vmem:[#allocation9 + $0x160] sm:$0xff]
    %v3320 = vld [vmem:[#allocation9 + $0x168] sm:$0xf]
    %v3321 = vld [vmem:[#allocation9 + $0x16c] sm:$0xff]
    %v3322 = vld [vmem:[#allocation9 + $0x174] sm:$0xff]
    %v3323 = vld [vmem:[#allocation9 + $0x17c] sm:$0xff]
    %v3324 = vld [vmem:[#allocation9 + $0x184] sm:$0xf]
    %v3325 = vld [vmem:[#allocation9 + $0x188] sm:$0xff]
    %v3326 = vld [vmem:[#allocation9 + $0x190] sm:$0xff]
    %v3327 = vld [vmem:[#allocation9 + $0x198] sm:$0xff]
    %v3328 = vld [vmem:[#allocation9 + $0x1a0] sm:$0xf]
    %v3329 = vld [vmem:[#allocation9 + $0x1a4] sm:$0xff]
    %v3330 = vld [vmem:[#allocation9 + $0x1ac] sm:$0xff]
    %v3331 = vld [vmem:[#allocation9 + $0x1b4] sm:$0xff]
    %v3332 = vld [vmem:[#allocation9 + $0x1bc] sm:$0xf]
    %v3333 = vld [vmem:[#allocation9 + $0x1c0] sm:$0xff]
    %v3334 = vld [vmem:[#allocation9 + $0x1c8] sm:$0xff]
    %v3335 = vld [vmem:[#allocation9 + $0x1d0] sm:$0xff]
    %v3336 = vld [vmem:[#allocation9 + $0x1d8] sm:$0xf]
    %v3337 = vld [vmem:[#allocation9 + $0x1dc] sm:$0xff]
    %v3338 = vld [vmem:[#allocation9 + $0x1e4] sm:$0xff]
    %v3339 = vld [vmem:[#allocation9 + $0x1ec] sm:$0xff]
    %v3340 = vld [vmem:[#allocation9 + $0x1f4] sm:$0xf]
    %v3341 = vld [vmem:[#allocation9 + $0x1f8] sm:$0xff]
    %v3342 = vld [vmem:[#allocation9 + $0x200] sm:$0xff]
    %v3343 = vld [vmem:[#allocation9 + $0x208] sm:$0xff]
    %v3344 = vld [vmem:[#allocation9 + $0x210] sm:$0xf]
    %v3345 = vld [vmem:[#allocation9 + $0x214] sm:$0xff]
    %v3346 = vld [vmem:[#allocation9 + $0x21c] sm:$0xff]
    %v3347 = vld [vmem:[#allocation9 + $0x224] sm:$0xff]
    %v3348 = vld [vmem:[#allocation9 + $0x22c] sm:$0xf]
    %v3349 = vld [vmem:[#allocation9 + $0x230] sm:$0xff]
    %v3350 = vld [vmem:[#allocation9 + $0x238] sm:$0xff]
    %v3351 = vld [vmem:[#allocation9 + $0x240] sm:$0xff]
    %v3352 = vld [vmem:[#allocation9 + $0x248] sm:$0xf]
    %v3353 = vld [vmem:[#allocation9 + $0x24c] sm:$0xff]
    %v3354 = vld [vmem:[#allocation9 + $0x254] sm:$0xff]
    %v3355 = vld [vmem:[#allocation9 + $0x25c] sm:$0xff]
    %v3356 = vld [vmem:[#allocation9 + $0x264] sm:$0xf]
    %v3357 = vld [vmem:[#allocation9 + $0x268] sm:$0xff]
    %v3358 = vld [vmem:[#allocation9 + $0x270] sm:$0xff]
    %v3359 = vld [vmem:[#allocation9 + $0x278] sm:$0xff]
    %v3360 = vld [vmem:[#allocation9 + $0x280] sm:$0xf]
    %v3361 = vld [vmem:[#allocation9 + $0x284] sm:$0xff]
    %v3362 = vld [vmem:[#allocation9 + $0x28c] sm:$0xff]
    %v3363 = vld [vmem:[#allocation9 + $0x294] sm:$0xff]
    %v3364 = vld [vmem:[#allocation9 + $0x29c] sm:$0xf]
    %v3365 = vld [vmem:[#allocation9 + $0x2a0] sm:$0xff]
    %v3366 = vld [vmem:[#allocation9 + $0x2a8] sm:$0xff]
    %v3367 = vld [vmem:[#allocation9 + $0x2b0] sm:$0xff]
    %v3368 = vld [vmem:[#allocation9 + $0x2b8] sm:$0xf]
    %v3369 = vld [vmem:[#allocation9 + $0x2bc] sm:$0xff]
    %v3370 = vld [vmem:[#allocation9 + $0x2c4] sm:$0xff]
    %v3371 = vld [vmem:[#allocation9 + $0x2cc] sm:$0xff]
    %v3372 = vld [vmem:[#allocation9 + $0x2d4] sm:$0xf]
    %v3373 = vld [vmem:[#allocation9 + $0x2d8] sm:$0xff]
    %v3374 = vld [vmem:[#allocation9 + $0x2e0] sm:$0xff]
    %v3375 = vld [vmem:[#allocation9 + $0x2e8] sm:$0xff]
    %v3376 = vld [vmem:[#allocation9 + $0x2f0] sm:$0xf]
    %v3377 = vld [vmem:[#allocation9 + $0x2f4] sm:$0xff]
    %v3378 = vld [vmem:[#allocation9 + $0x2fc] sm:$0xff]
    %v3379 = vld [vmem:[#allocation9 + $0x304] sm:$0xff]
    %v3380 = vld [vmem:[#allocation9 + $0x30c] sm:$0xf]
    %v3381 = vld [vmem:[#allocation9 + $0x310] sm:$0xff]
    %v3382 = vld [vmem:[#allocation9 + $0x318] sm:$0xff]
    %v3383 = vld [vmem:[#allocation9 + $0x320] sm:$0xff]
    %v3384 = vld [vmem:[#allocation9 + $0x328] sm:$0xf]
    %v3385 = vld [vmem:[#allocation9 + $0x32c] sm:$0xff]
    %v3386 = vld [vmem:[#allocation9 + $0x334] sm:$0xff]
    %v3387 = vld [vmem:[#allocation9 + $0x33c] sm:$0xff]
    %v3388 = vld [vmem:[#allocation9 + $0x344] sm:$0xf]
    %v3389 = vld [vmem:[#allocation9 + $0x348] sm:$0xff]
    %v3390 = vld [vmem:[#allocation9 + $0x350] sm:$0xff]
    %v3391 = vld [vmem:[#allocation9 + $0x358] sm:$0xff]
    %v3392 = vld [vmem:[#allocation9 + $0x360] sm:$0xf]
    %v3393 = vld [vmem:[#allocation9 + $0x364] sm:$0xff]
    %v3394 = vld [vmem:[#allocation9 + $0x36c] sm:$0xff]
    %v3395 = vld [vmem:[#allocation9 + $0x374] sm:$0xff]
    %v3396 = vld [vmem:[#allocation9 + $0x37c] sm:$0xf]
    %v3397 = vld [vmem:[#allocation9 + $0x380] sm:$0xff]
    %v3398 = vld [vmem:[#allocation9 + $0x388] sm:$0xff]
    %v3399 = vld [vmem:[#allocation9 + $0x390] sm:$0xff]
    %v3400 = vld [vmem:[#allocation9 + $0x398] sm:$0xf]
    %v3401 = vld [vmem:[#allocation9 + $0x39c] sm:$0xff]
    %v3402 = vld [vmem:[#allocation9 + $0x3a4] sm:$0xff]
    %v3403 = vld [vmem:[#allocation9 + $0x3ac] sm:$0xff]
    %v3404 = vld [vmem:[#allocation9 + $0x3b4] sm:$0xf]
    %v3405 = vld [vmem:[#allocation9 + $0x3b8] sm:$0xff]
    %v3406 = vld [vmem:[#allocation9 + $0x3c0] sm:$0xff]
    %v3407 = vld [vmem:[#allocation9 + $0x3c8] sm:$0xff]
    %v3408 = vld [vmem:[#allocation9 + $0x3d0] sm:$0xf]
    %v3409 = vld [vmem:[#allocation9 + $0x3d4] sm:$0xff]
    %v3410 = vld [vmem:[#allocation9 + $0x3dc] sm:$0xff]
    %v3411 = vld [vmem:[#allocation9 + $0x3e4] sm:$0xff]
    %v3412 = vld [vmem:[#allocation9 + $0x3ec] sm:$0xf]
    %v3413 = vld [vmem:[#allocation9 + $0x3f0] sm:$0xff]
    %v3414 = vld [vmem:[#allocation9 + $0x3f8] sm:$0xff]
    %v3415 = vld [vmem:[#allocation9 + $0x400] sm:$0xff]
    %v3416 = vld [vmem:[#allocation9 + $0x408] sm:$0xf]
    %v3417 = vld [vmem:[#allocation9 + $0x40c] sm:$0xff]
    %v3418 = vld [vmem:[#allocation9 + $0x414] sm:$0xff]
    %v3419 = vld [vmem:[#allocation9 + $0x41c] sm:$0xff]
    %v3420 = vld [vmem:[#allocation9 + $0x424] sm:$0xf]
    %v3421 = vld [vmem:[#allocation9 + $0x428] sm:$0xff]
    %v3422 = vld [vmem:[#allocation9 + $0x430] sm:$0xff]
    %v3423 = vld [vmem:[#allocation9 + $0x438] sm:$0xff]
    %v3424 = vld [vmem:[#allocation9 + $0x440] sm:$0xf]
    %v3425 = vld [vmem:[#allocation9 + $0x444] sm:$0xff]
    %v3426 = vld [vmem:[#allocation9 + $0x44c] sm:$0xff]
    %v3427 = vld [vmem:[#allocation9 + $0x454] sm:$0xff]
    %v3428 = vld [vmem:[#allocation9 + $0x45c] sm:$0xf]
    %v3429 = vld [vmem:[#allocation9 + $0x460] sm:$0xff]
    %v3430 = vld [vmem:[#allocation9 + $0x468] sm:$0xff]
    %v3431 = vld [vmem:[#allocation9 + $0x470] sm:$0xff]
    %v3432 = vld [vmem:[#allocation9 + $0x478] sm:$0xf]
    %v3433 = vld [vmem:[#allocation9 + $0x47c] sm:$0xff]
    %v3434 = vld [vmem:[#allocation9 + $0x484] sm:$0xff]
    %v3435 = vld [vmem:[#allocation9 + $0x48c] sm:$0xff]
    %v3436 = vld [vmem:[#allocation9 + $0x494] sm:$0xf]
    %v3437 = vld [vmem:[#allocation9 + $0x498] sm:$0xff]
    %v3438 = vld [vmem:[#allocation9 + $0x4a0] sm:$0xff]
    %v3439 = vld [vmem:[#allocation9 + $0x4a8] sm:$0xff]
    %v3440 = vld [vmem:[#allocation9 + $0x4b0] sm:$0xf]
    %v3441 = vld [vmem:[#allocation9 + $0x4b4] sm:$0xff]
    %v3442 = vld [vmem:[#allocation9 + $0x4bc] sm:$0xff]
    %v3443 = vld [vmem:[#allocation9 + $0x4c4] sm:$0xff]
    %v3444 = vld [vmem:[#allocation9 + $0x4cc] sm:$0xf]
    %v3445 = vld [vmem:[#allocation9 + $0x4d0] sm:$0xff]
    %v3446 = vld [vmem:[#allocation9 + $0x4d8] sm:$0xff]
    %v3447 = vld [vmem:[#allocation9 + $0x4e0] sm:$0xff]
    %v3448 = vld [vmem:[#allocation9 + $0x4e8] sm:$0xf]
    %v3449 = vld [vmem:[#allocation9 + $0x4ec] sm:$0xff]
    %v3450 = vld [vmem:[#allocation9 + $0x4f4] sm:$0xff]
    %v3451 = vld [vmem:[#allocation9 + $0x4fc] sm:$0xff]
    %v3452 = vld [vmem:[#allocation9 + $0x504] sm:$0xf]
    %v3453 = vld [vmem:[#allocation9 + $0x508] sm:$0xff]
    %v3454 = vld [vmem:[#allocation9 + $0x510] sm:$0xff]
    %v3455 = vld [vmem:[#allocation9 + $0x518] sm:$0xff]
    %v3456 = vld [vmem:[#allocation9 + $0x520] sm:$0xf]
    %v3457 = vld [vmem:[#allocation9 + $0x524] sm:$0xff]
    %v3458 = vld [vmem:[#allocation9 + $0x52c] sm:$0xff]
    %v3459 = vld [vmem:[#allocation9 + $0x534] sm:$0xff]
    %v3460 = vld [vmem:[#allocation9 + $0x53c] sm:$0xf]
    %v3461 = vld [vmem:[#allocation9 + $0x540] sm:$0xff]
    %v3462 = vld [vmem:[#allocation9 + $0x548] sm:$0xff]
    %v3463 = vld [vmem:[#allocation9 + $0x550] sm:$0xff]
    %v3464 = vld [vmem:[#allocation9 + $0x558] sm:$0xf]
    %v3465 = vld [vmem:[#allocation9 + $0x55c] sm:$0xff]
    %v3466 = vld [vmem:[#allocation9 + $0x564] sm:$0xff]
    %v3467 = vld [vmem:[#allocation9 + $0x56c] sm:$0xff]
    %v3468 = vld [vmem:[#allocation9 + $0x574] sm:$0xf]
    %v3469 = vld [vmem:[#allocation9 + $0x578] sm:$0xff]
    %v3470 = vld [vmem:[#allocation9 + $0x580] sm:$0xff]
    %v3471 = vld [vmem:[#allocation9 + $0x588] sm:$0xff]
    %v3472 = vld [vmem:[#allocation9 + $0x590] sm:$0xf]
    %v3473 = vld [vmem:[#allocation9 + $0x594] sm:$0xff]
    %v3474 = vld [vmem:[#allocation9 + $0x59c] sm:$0xff]
    %v3475 = vld [vmem:[#allocation9 + $0x5a4] sm:$0xff]
    %v3476 = vld [vmem:[#allocation9 + $0x5ac] sm:$0xf]
    %v3477 = vld [vmem:[#allocation9 + $0x5b0] sm:$0xff]
    %v3478 = vld [vmem:[#allocation9 + $0x5b8] sm:$0xff]
    %v3479 = vld [vmem:[#allocation9 + $0x5c0] sm:$0xff]
    %v3480 = vld [vmem:[#allocation9 + $0x5c8] sm:$0xf]
    %v3481 = vld [vmem:[#allocation9 + $0x5cc] sm:$0xff]
    %v3482 = vld [vmem:[#allocation9 + $0x5d4] sm:$0xff]
    %v3483 = vld [vmem:[#allocation9 + $0x5dc] sm:$0xff]
    %v3484 = vld [vmem:[#allocation9 + $0x5e4] sm:$0xf]
    %v3485 = vld [vmem:[#allocation9 + $0x5e8] sm:$0xff]
    %v3486 = vld [vmem:[#allocation9 + $0x5f0] sm:$0xff]
    %v3487 = vld [vmem:[#allocation9 + $0x5f8] sm:$0xff]
    %v3488 = vld [vmem:[#allocation9 + $0x600] sm:$0xf]
    %v3489 = vld [vmem:[#allocation9 + $0x604] sm:$0xff]
    %v3490 = vld [vmem:[#allocation9 + $0x60c] sm:$0xff]
    %v3491 = vld [vmem:[#allocation9 + $0x614] sm:$0xff]
    %v3492 = vld [vmem:[#allocation9 + $0x61c] sm:$0xf]
    %v3493 = vld [vmem:[#allocation9 + $0x620] sm:$0xff]
    %v3494 = vld [vmem:[#allocation9 + $0x628] sm:$0xff]
    %v3495 = vld [vmem:[#allocation9 + $0x630] sm:$0xff]
    %v3496 = vld [vmem:[#allocation9 + $0x638] sm:$0xf]
    %v3497 = vld [vmem:[#allocation9 + $0x63c] sm:$0xff]
    %v3498 = vld [vmem:[#allocation9 + $0x644] sm:$0xff]
    %v3499 = vld [vmem:[#allocation9 + $0x64c] sm:$0xff]
    %v3500 = vld [vmem:[#allocation9 + $0x654] sm:$0xf]
    %v3501 = vld [vmem:[#allocation9 + $0x658] sm:$0xff]
    %v3502 = vld [vmem:[#allocation9 + $0x660] sm:$0xff]
    %v3503 = vld [vmem:[#allocation9 + $0x668] sm:$0xff]
    %v3504 = vld [vmem:[#allocation9 + $0x670] sm:$0xf]
    %v3505 = vld [vmem:[#allocation9 + $0x674] sm:$0xff]
    %v3506 = vld [vmem:[#allocation9 + $0x67c] sm:$0xff]
    %v3507 = vld [vmem:[#allocation9 + $0x684] sm:$0xff]
    %v3508 = vld [vmem:[#allocation9 + $0x68c] sm:$0xf]
    %v3509 = vld [vmem:[#allocation9 + $0x690] sm:$0xff]
    %v3510 = vld [vmem:[#allocation9 + $0x698] sm:$0xff]
    %v3511 = vld [vmem:[#allocation9 + $0x6a0] sm:$0xff]
    %v3512 = vld [vmem:[#allocation9 + $0x6a8] sm:$0xf]
    %v3513 = vld [vmem:[#allocation9 + $0x6ac] sm:$0xff]
    %v3514 = vld [vmem:[#allocation9 + $0x6b4] sm:$0xff]
    %v3515 = vld [vmem:[#allocation9 + $0x6bc] sm:$0xff]
    %v3516 = vld [vmem:[#allocation9 + $0x6c4] sm:$0xf]
    %v3517 = vld [vmem:[#allocation9 + $0x6c8] sm:$0xff]
    %v3518 = vld [vmem:[#allocation9 + $0x6d0] sm:$0xff]
    %v3519 = vld [vmem:[#allocation9 + $0x6d8] sm:$0xff]
    %v3520 = vld [vmem:[#allocation9 + $0x6e0] sm:$0xf]
    %v3521 = vld [vmem:[#allocation9 + $0x6e4] sm:$0xff]
    %v3522 = vld [vmem:[#allocation9 + $0x6ec] sm:$0xff]
    %v3523 = vld [vmem:[#allocation9 + $0x6f4] sm:$0xff]
    %v3524 = vld [vmem:[#allocation9 + $0x6fc] sm:$0xf]
    %v3525 = vld [vmem:[#allocation9 + $0x700] sm:$0xff]
    %v3526 = vld [vmem:[#allocation9 + $0x708] sm:$0xff]
    %v3527 = vld [vmem:[#allocation9 + $0x710] sm:$0xff]
    %v3528 = vld [vmem:[#allocation9 + $0x718] sm:$0xf]
    %v3529 = vld [vmem:[#allocation9 + $0x71c] sm:$0xff]
    %v3530 = vld [vmem:[#allocation9 + $0x724] sm:$0xff]
    %v3531 = vld [vmem:[#allocation9 + $0x72c] sm:$0xff]
    %v3532 = vld [vmem:[#allocation9 + $0x734] sm:$0xf]
    %v3533 = vld [vmem:[#allocation9 + $0x738] sm:$0xff]
    %v3534 = vld [vmem:[#allocation9 + $0x740] sm:$0xff]
    %v3535 = vld [vmem:[#allocation9 + $0x748] sm:$0xff]
    %v3536 = vld [vmem:[#allocation9 + $0x750] sm:$0xf]
    %v3537 = vld [vmem:[#allocation9 + $0x754] sm:$0xff]
    %v3538 = vld [vmem:[#allocation9 + $0x75c] sm:$0xff]
    %v3539 = vld [vmem:[#allocation9 + $0x764] sm:$0xff]
    %v3540 = vld [vmem:[#allocation9 + $0x76c] sm:$0xf]
    %v3541 = vld [vmem:[#allocation9 + $0x770] sm:$0xff]
    %v3542 = vld [vmem:[#allocation9 + $0x778] sm:$0xff]
    %v3543 = vld [vmem:[#allocation9 + $0x780] sm:$0xff]
    %v3544 = vld [vmem:[#allocation9 + $0x788] sm:$0xf]
    %v3545 = vld [vmem:[#allocation9 + $0x78c] sm:$0xff]
    %v3546 = vld [vmem:[#allocation9 + $0x794] sm:$0xff]
    %v3547 = vld [vmem:[#allocation9 + $0x79c] sm:$0xff]
    %v3548 = vld [vmem:[#allocation9 + $0x7a4] sm:$0xf]
    %v3549 = vld [vmem:[#allocation9 + $0x7a8] sm:$0xff]
    %v3550 = vld [vmem:[#allocation9 + $0x7b0] sm:$0xff]
    %v3551 = vld [vmem:[#allocation9 + $0x7b8] sm:$0xff]
    %v3552 = vld [vmem:[#allocation9 + $0x7c0] sm:$0xf]
    %v3553 = vld [vmem:[#allocation9 + $0x7c4] sm:$0xff]
    %v3554 = vld [vmem:[#allocation9 + $0x7cc] sm:$0xff]
    %v3555 = vld [vmem:[#allocation9 + $0x7d4] sm:$0xff]
    %v3556 = vld [vmem:[#allocation9 + $0x7dc] sm:$0xf]
    %v3557 = vld [vmem:[#allocation9 + $0x7e0] sm:$0xff]
    %v3558 = vld [vmem:[#allocation9 + $0x7e8] sm:$0xff]
    %v3559 = vld [vmem:[#allocation9 + $0x7f0] sm:$0xff]
    %v3560 = vld [vmem:[#allocation9 + $0x7f8] sm:$0xf]
    %v3561 = vld [vmem:[#allocation9 + $0x7fc] sm:$0xff]
    %v3562 = vld [vmem:[#allocation9 + $0x804] sm:$0xff]
    %v3563 = vld [vmem:[#allocation9 + $0x80c] sm:$0xff]
    %v3564 = vld [vmem:[#allocation9 + $0x814] sm:$0xf]
    %v3565 = vld [vmem:[#allocation9 + $0x818] sm:$0xff]
    %v3566 = vld [vmem:[#allocation9 + $0x820] sm:$0xff]
    %v3567 = vld [vmem:[#allocation9 + $0x828] sm:$0xff]
    %v3568 = vld [vmem:[#allocation9 + $0x830] sm:$0xf]
    %v3569 = vld [vmem:[#allocation9 + $0x834] sm:$0xff]
    %v3570 = vld [vmem:[#allocation9 + $0x83c] sm:$0xff]
    %v3571 = vld [vmem:[#allocation9 + $0x844] sm:$0xff]
    %v3572 = vld [vmem:[#allocation9 + $0x84c] sm:$0xf]
    %v3573 = vld [vmem:[#allocation9 + $0x850] sm:$0xff]
    %v3574 = vld [vmem:[#allocation9 + $0x858] sm:$0xff]
    %v3575 = vld [vmem:[#allocation9 + $0x860] sm:$0xff]
    %v3576 = vld [vmem:[#allocation9 + $0x868] sm:$0xf]
    %v3577 = vld [vmem:[#allocation9 + $0x86c] sm:$0xff]
    %v3578 = vld [vmem:[#allocation9 + $0x874] sm:$0xff]
    %v3579 = vld [vmem:[#allocation9 + $0x87c] sm:$0xff]
    %v3580 = vld [vmem:[#allocation9 + $0x884] sm:$0xf]
    %v3581 = vld [vmem:[#allocation9 + $0x888] sm:$0xff]
    %v3582 = vld [vmem:[#allocation9 + $0x890] sm:$0xff]
    %v3583 = vld [vmem:[#allocation9 + $0x898] sm:$0xff]
    %v3584 = vld [vmem:[#allocation9 + $0x8a0] sm:$0xf]
    %v3585 = vld [vmem:[#allocation9 + $0x8a4] sm:$0xff]
    %v3586 = vld [vmem:[#allocation9 + $0x8ac] sm:$0xff]
    %v3587 = vld [vmem:[#allocation9 + $0x8b4] sm:$0xff]
    %v3588 = vld [vmem:[#allocation9 + $0x8bc] sm:$0xf]
    %v3589 = vld [vmem:[#allocation9 + $0x8c0] sm:$0xff]
    %v3590 = vld [vmem:[#allocation9 + $0x8c8] sm:$0xff]
    %v3591 = vld [vmem:[#allocation9 + $0x8d0] sm:$0xff]
    %v3592 = vld [vmem:[#allocation9 + $0x8d8] sm:$0xf]
    %v3593 = vld [vmem:[#allocation9 + $0x8dc] sm:$0xff]
    %v3594 = vld [vmem:[#allocation9 + $0x8e4] sm:$0xff]
    %v3595 = vld [vmem:[#allocation9 + $0x8ec] sm:$0xff]
    %v3596 = vld [vmem:[#allocation9 + $0x8f4] sm:$0xf]
    %v3597 = vld [vmem:[#allocation9 + $0x8f8] sm:$0xff]
    %v3598 = vld [vmem:[#allocation9 + $0x900] sm:$0xff]
    %v3599 = vld [vmem:[#allocation9 + $0x908] sm:$0xff]
    %v3600 = vld [vmem:[#allocation9 + $0x910] sm:$0xf]
    %v3601 = vld [vmem:[#allocation9 + $0x914] sm:$0xff]
    %v3602 = vld [vmem:[#allocation9 + $0x91c] sm:$0xff]
    %v3603 = vld [vmem:[#allocation9 + $0x924] sm:$0xff]
    %v3604 = vld [vmem:[#allocation9 + $0x92c] sm:$0xf]
    %v3605 = vld [vmem:[#allocation9 + $0x930] sm:$0xff]
    %v3606 = vld [vmem:[#allocation9 + $0x938] sm:$0xff]
    %v3607 = vld [vmem:[#allocation9 + $0x940] sm:$0xff]
    %v3608 = vld [vmem:[#allocation9 + $0x948] sm:$0xf]
    %v3609 = vld [vmem:[#allocation9 + $0x94c] sm:$0xff]
    %v3610 = vld [vmem:[#allocation9 + $0x954] sm:$0xff]
    %v3611 = vld [vmem:[#allocation9 + $0x95c] sm:$0xff]
    %v3612 = vld [vmem:[#allocation9 + $0x964] sm:$0xf]
    %v3613 = vld [vmem:[#allocation9 + $0x968] sm:$0xff]
    %v3614 = vld [vmem:[#allocation9 + $0x970] sm:$0xff]
    %v3615 = vld [vmem:[#allocation9 + $0x978] sm:$0xff]
    %v3616 = vld [vmem:[#allocation9 + $0x980] sm:$0xf]
    %v3617 = vld [vmem:[#allocation9 + $0x984] sm:$0xff]
    %v3618 = vld [vmem:[#allocation9 + $0x98c] sm:$0xff]
    %v3619 = vld [vmem:[#allocation9 + $0x994] sm:$0xff]
    %v3620 = vld [vmem:[#allocation9 + $0x99c] sm:$0xf]
    %v3621 = vld [vmem:[#allocation9 + $0x9a0] sm:$0xff]
    %v3622 = vld [vmem:[#allocation9 + $0x9a8] sm:$0xff]
    %v3623 = vld [vmem:[#allocation9 + $0x9b0] sm:$0xff]
    %v3624 = vld [vmem:[#allocation9 + $0x9b8] sm:$0xf]
    %v3625 = vld [vmem:[#allocation9 + $0x9bc] sm:$0xff]
    %v3626 = vld [vmem:[#allocation9 + $0x9c4] sm:$0xff]
    %v3627 = vld [vmem:[#allocation9 + $0x9cc] sm:$0xff]
    %v3628 = vld [vmem:[#allocation9 + $0x9d4] sm:$0xf]
    %v3629 = vld [vmem:[#allocation9 + $0x9d8] sm:$0xff]
    %v3630 = vld [vmem:[#allocation9 + $0x9e0] sm:$0xff]
    %v3631 = vld [vmem:[#allocation9 + $0x9e8] sm:$0xff]
    %v3632 = vld [vmem:[#allocation9 + $0x9f0] sm:$0xf]
    %v3633 = vld [vmem:[#allocation9 + $0x9f4] sm:$0xff]
    %v3634 = vld [vmem:[#allocation9 + $0x9fc] sm:$0xff]
    %v3635 = vld [vmem:[#allocation9 + $0xa04] sm:$0xff]
    %v3636 = vld [vmem:[#allocation9 + $0xa0c] sm:$0xf]
    %v3637 = vld [vmem:[#allocation9 + $0xa10] sm:$0xff]
    %v3638 = vld [vmem:[#allocation9 + $0xa18] sm:$0xff]
    %v3639 = vld [vmem:[#allocation9 + $0xa20] sm:$0xff]
    %v3640 = vld [vmem:[#allocation9 + $0xa28] sm:$0xf]
    %v3641 = vld [vmem:[#allocation9 + $0xa2c] sm:$0xff]
    %v3642 = vld [vmem:[#allocation9 + $0xa34] sm:$0xff]
    %v3643 = vld [vmem:[#allocation9 + $0xa3c] sm:$0xff]
    %v3644 = vld [vmem:[#allocation9 + $0xa44] sm:$0xf]
    %v3645 = vld [vmem:[#allocation9 + $0xa48] sm:$0xff]
    %v3646 = vld [vmem:[#allocation9 + $0xa50] sm:$0xff]
    %v3647 = vld [vmem:[#allocation9 + $0xa58] sm:$0xff]
    %v3648 = vld [vmem:[#allocation9 + $0xa60] sm:$0xf]
    %v3649 = vld [vmem:[#allocation9 + $0xa64] sm:$0xff]
    %v3650 = vld [vmem:[#allocation9 + $0xa6c] sm:$0xff]
    %v3651 = vld [vmem:[#allocation9 + $0xa74] sm:$0xff]
    %v3652 = vld [vmem:[#allocation9 + $0xa7c] sm:$0xf]
    %v3653 = vld [vmem:[#allocation9 + $0xa80] sm:$0xff]
    %v3654 = vld [vmem:[#allocation9 + $0xa88] sm:$0xff]
    %v3655 = vld [vmem:[#allocation9 + $0xa90] sm:$0xff]
    %v3656 = vld [vmem:[#allocation9 + $0xa98] sm:$0xf]
    %v3657 = vld [vmem:[#allocation9 + $0xa9c] sm:$0xff]
    %v3658 = vld [vmem:[#allocation9 + $0xaa4] sm:$0xff]
    %v3659 = vld [vmem:[#allocation9 + $0xaac] sm:$0xff]
    %v3660 = vld [vmem:[#allocation9 + $0xab4] sm:$0xf]
    %v3661 = vld [vmem:[#allocation9 + $0xab8] sm:$0xff]
    %v3662 = vld [vmem:[#allocation9 + $0xac0] sm:$0xff]
    %v3663 = vld [vmem:[#allocation9 + $0xac8] sm:$0xff]
    %v3664 = vld [vmem:[#allocation9 + $0xad0] sm:$0xf]
    %v3665 = vld [vmem:[#allocation9 + $0xad4] sm:$0xff]
    %v3666 = vld [vmem:[#allocation9 + $0xadc] sm:$0xff]
    %v3667 = vld [vmem:[#allocation9 + $0xae4] sm:$0xff]
    %v3668 = vld [vmem:[#allocation9 + $0xaec] sm:$0xf]
    %v3669 = vld [vmem:[#allocation9 + $0xaf0] sm:$0xff]
    %v3670 = vld [vmem:[#allocation9 + $0xaf8] sm:$0xff]
    %v3671 = vld [vmem:[#allocation9 + $0xb00] sm:$0xff]
    %v3672 = vld [vmem:[#allocation9 + $0xb08] sm:$0xf]
    %v3673 = vld [vmem:[#allocation9 + $0xb0c] sm:$0xff]
    %v3674 = vld [vmem:[#allocation9 + $0xb14] sm:$0xff]
    %v3675 = vld [vmem:[#allocation9 + $0xb1c] sm:$0xff]
    %v3676 = vld [vmem:[#allocation9 + $0xb24] sm:$0xf]
    %v3677 = vld [vmem:[#allocation9 + $0xb28] sm:$0xff]
    %v3678 = vld [vmem:[#allocation9 + $0xb30] sm:$0xff]
    %v3679 = vld [vmem:[#allocation9 + $0xb38] sm:$0xff]
    %v3680 = vld [vmem:[#allocation9 + $0xb40] sm:$0xf]
    %v3681 = vld [vmem:[#allocation9 + $0xb44] sm:$0xff]
    %v3682 = vld [vmem:[#allocation9 + $0xb4c] sm:$0xff]
    %v3683 = vld [vmem:[#allocation9 + $0xb54] sm:$0xff]
    %v3684 = vld [vmem:[#allocation9 + $0xb5c] sm:$0xf]
    %v3685 = vld [vmem:[#allocation9 + $0xb60] sm:$0xff]
    %v3686 = vld [vmem:[#allocation9 + $0xb68] sm:$0xff]
    %v3687 = vld [vmem:[#allocation9 + $0xb70] sm:$0xff]
    %v3688 = vld [vmem:[#allocation9 + $0xb78] sm:$0xf]
    %v3689 = vld [vmem:[#allocation9 + $0xb7c] sm:$0xff]
    %v3690 = vld [vmem:[#allocation9 + $0xb84] sm:$0xff]
    %v3691 = vld [vmem:[#allocation9 + $0xb8c] sm:$0xff]
    %v3692 = vld [vmem:[#allocation9 + $0xb94] sm:$0xf]
    %v3693 = vld [vmem:[#allocation9 + $0xb98] sm:$0xff]
    %v3694 = vld [vmem:[#allocation9 + $0xba0] sm:$0xff]
    %v3695 = vld [vmem:[#allocation9 + $0xba8] sm:$0xff]
    %v3696 = vld [vmem:[#allocation9 + $0xbb0] sm:$0xf]
    %v3697 = vld [vmem:[#allocation9 + $0xbb4] sm:$0xff]
    %v3698 = vld [vmem:[#allocation9 + $0xbbc] sm:$0xff]
    %v3699 = vld [vmem:[#allocation9 + $0xbc4] sm:$0xff]
    %v3700 = vld [vmem:[#allocation9 + $0xbcc] sm:$0xf]
    %v3701 = vld [vmem:[#allocation9 + $0xbd0] sm:$0xff]
    %v3702 = vld [vmem:[#allocation9 + $0xbd8] sm:$0xff]
    %v3703 = vld [vmem:[#allocation9 + $0xbe0] sm:$0xff]
    %v3704 = vld [vmem:[#allocation9 + $0xbe8] sm:$0xf]
    %v3705 = vld [vmem:[#allocation9 + $0xbec] sm:$0xff]
    %v3706 = vld [vmem:[#allocation9 + $0xbf4] sm:$0xff]
    %v3707 = vld [vmem:[#allocation9 + $0xbfc] sm:$0xff]
    %v3708 = vld [vmem:[#allocation9 + $0xc04] sm:$0xf]
    %v3709 = vld [vmem:[#allocation9 + $0xc08] sm:$0xff]
    %v3710 = vld [vmem:[#allocation9 + $0xc10] sm:$0xff]
    %v3711 = vld [vmem:[#allocation9 + $0xc18] sm:$0xff]
    %v3712 = vld [vmem:[#allocation9 + $0xc20] sm:$0xf]
    %v3713 = vld [vmem:[#allocation9 + $0xc24] sm:$0xff]
    %v3714 = vld [vmem:[#allocation9 + $0xc2c] sm:$0xff]
    %v3715 = vld [vmem:[#allocation9 + $0xc34] sm:$0xff]
    %v3716 = vld [vmem:[#allocation9 + $0xc3c] sm:$0xf]
    %v3717 = vld [vmem:[#allocation9 + $0xc40] sm:$0xff]
    %v3718 = vld [vmem:[#allocation9 + $0xc48] sm:$0xff]
    %v3719 = vld [vmem:[#allocation9 + $0xc50] sm:$0xff]
    %v3720 = vld [vmem:[#allocation9 + $0xc58] sm:$0xf]
    %v3721 = vld [vmem:[#allocation9 + $0xc5c] sm:$0xff]
    %v3722 = vld [vmem:[#allocation9 + $0xc64] sm:$0xff]
    %v3723 = vld [vmem:[#allocation9 + $0xc6c] sm:$0xff]
    %v3724 = vld [vmem:[#allocation9 + $0xc74] sm:$0xf]
    %v3725 = vld [vmem:[#allocation9 + $0xc78] sm:$0xff]
    %v3726 = vld [vmem:[#allocation9 + $0xc80] sm:$0xff]
    %v3727 = vld [vmem:[#allocation9 + $0xc88] sm:$0xff]
    %v3728 = vld [vmem:[#allocation9 + $0xc90] sm:$0xf]
    %v3729 = vld [vmem:[#allocation9 + $0xc94] sm:$0xff]
    %v3730 = vld [vmem:[#allocation9 + $0xc9c] sm:$0xff]
    %v3731 = vld [vmem:[#allocation9 + $0xca4] sm:$0xff]
    %v3732 = vld [vmem:[#allocation9 + $0xcac] sm:$0xf]
    %v3733 = vld [vmem:[#allocation9 + $0xcb0] sm:$0xff]
    %v3734 = vld [vmem:[#allocation9 + $0xcb8] sm:$0xff]
    %v3735 = vld [vmem:[#allocation9 + $0xcc0] sm:$0xff]
    %v3736 = vld [vmem:[#allocation9 + $0xcc8] sm:$0xf]
    %v3737 = vld [vmem:[#allocation9 + $0xccc] sm:$0xff]
    %v3738 = vld [vmem:[#allocation9 + $0xcd4] sm:$0xff]
    %v3739 = vld [vmem:[#allocation9 + $0xcdc] sm:$0xff]
    %v3740 = vld [vmem:[#allocation9 + $0xce4] sm:$0xf]
    %v3741 = vld [vmem:[#allocation9 + $0xce8] sm:$0xff]
    %v3742 = vld [vmem:[#allocation9 + $0xcf0] sm:$0xff]
    %v3743 = vld [vmem:[#allocation9 + $0xcf8] sm:$0xff]
    %v3744 = vld [vmem:[#allocation9 + $0xd00] sm:$0xf]
    %v3745 = vld [vmem:[#allocation9 + $0xd04] sm:$0xff]
    %v3746 = vld [vmem:[#allocation9 + $0xd0c] sm:$0xff]
    %v3747 = vld [vmem:[#allocation9 + $0xd14] sm:$0xff]
    %v3748 = vld [vmem:[#allocation9 + $0xd1c] sm:$0xf]
    %v3749 = vld [vmem:[#allocation9 + $0xd20] sm:$0xff]
    %v3750 = vld [vmem:[#allocation9 + $0xd28] sm:$0xff]
    %v3751 = vld [vmem:[#allocation9 + $0xd30] sm:$0xff]
    %v3752 = vld [vmem:[#allocation9 + $0xd38] sm:$0xf]
    %v3753 = vld [vmem:[#allocation9 + $0xd3c] sm:$0xff]
    %v3754 = vld [vmem:[#allocation9 + $0xd44] sm:$0xff]
    %v3755 = vld [vmem:[#allocation9 + $0xd4c] sm:$0xff]
    %v3756 = vld [vmem:[#allocation9 + $0xd54] sm:$0xf]
    %v3757 = vld [vmem:[#allocation9 + $0xd58] sm:$0xff]
    %v3758 = vld [vmem:[#allocation9 + $0xd60] sm:$0xff]
    %v3759 = vld [vmem:[#allocation9 + $0xd68] sm:$0xff]
    %v3760 = vld [vmem:[#allocation9 + $0xd70] sm:$0xf]
    %v3761 = vld [vmem:[#allocation9 + $0xd74] sm:$0xff]
    %v3762 = vld [vmem:[#allocation9 + $0xd7c] sm:$0xff]
    %v3763 = vld [vmem:[#allocation9 + $0xd84] sm:$0xff]
    %v3764 = vld [vmem:[#allocation9 + $0xd8c] sm:$0xf]
    %v3765 = vld [vmem:[#allocation9 + $0xd90] sm:$0xff]
    %v3766 = vld [vmem:[#allocation9 + $0xd98] sm:$0xff]
    %v3767 = vld [vmem:[#allocation9 + $0xda0] sm:$0xff]
    %v3768 = vld [vmem:[#allocation9 + $0xda8] sm:$0xf]
    %v3769 = vld [vmem:[#allocation9 + $0xdac] sm:$0xff]
    %v3770 = vld [vmem:[#allocation9 + $0xdb4] sm:$0xff]
    %v3771 = vld [vmem:[#allocation9 + $0xdbc] sm:$0xff]
    %v3772 = vld [vmem:[#allocation9 + $0xdc4] sm:$0xf]
    %v3773 = vld [vmem:[#allocation9 + $0xdc8] sm:$0xff]
    %v3774 = vld [vmem:[#allocation9 + $0xdd0] sm:$0xff]
    %v3775 = vld [vmem:[#allocation9 + $0xdd8] sm:$0xff]
    %v3776 = vld [vmem:[#allocation9 + $0xde0] sm:$0xf]
    %v3777 = vld [vmem:[#allocation9 + $0xde4] sm:$0xff]
    %v3778 = vld [vmem:[#allocation9 + $0xdec] sm:$0xff]
    %v3779 = vld [vmem:[#allocation9 + $0xdf4] sm:$0xff]
    %v3780 = vld [vmem:[#allocation9 + $0xdfc] sm:$0xf]
    %v3781 = vld [vmem:[#allocation10 + $0x2b] sm:$0xff]
    %v3783 = vlaneseq
    %v3784 = vshrl.u32 %v3783, 7
    %v3785 = vsub.s32 0, %v3784
    %v3786 = vrot.slane %v3781, %v3785
    %v3787 = vlaneseq
    %v3788 = vshrl.u32 %v3787, 7
    %v3789 = vsub.s32 1, %v3788
    %v3790 = vrot.slane %v3781, %v3789
    %v3791 = vlaneseq
    %v3792 = vshrl.u32 %v3791, 7
    %v3793 = vsub.s32 2, %v3792
    %v3794 = vrot.slane %v3781, %v3793
    %v3795 = vlaneseq
    %v3796 = vshrl.u32 %v3795, 7
    %v3797 = vsub.s32 3, %v3796
    %v3798 = vrot.slane %v3781, %v3797
    %v3799 = vlaneseq
    %v3800 = vshrl.u32 %v3799, 7
    %v3801 = vsub.s32 4, %v3800
    %v3802 = vrot.slane %v3781, %v3801
    %v3803 = vlaneseq
    %v3804 = vshrl.u32 %v3803, 7
    %v3805 = vsub.s32 5, %v3804
    %v3806 = vrot.slane %v3781, %v3805
    %v3807 = vlaneseq
    %v3808 = vshrl.u32 %v3807, 7
    %v3809 = vsub.s32 6, %v3808
    %v3810 = vrot.slane %v3781, %v3809
    %v4330 = vunpack.c.l.b16 %v3269
    %v4331 = vunpack.c.h.b16 %v3269
    %v4332 = vunpack.c.l.b16 %v3270
    %v4333 = vunpack.c.h.b16 %v3270
    %v4334 = vunpack.c.l.b16 %v3271
    %v4335 = vunpack.c.h.b16 %v3271
    %v4336 = vunpack.c.l.b16 %v3272
    %v4337 = vunpack.c.l.b16 %v3273
    %v4338 = vunpack.c.h.b16 %v3273
    %v4339 = vunpack.c.l.b16 %v3274
    %v4340 = vunpack.c.h.b16 %v3274
    %v4341 = vunpack.c.l.b16 %v3275
    %v4342 = vunpack.c.h.b16 %v3275
    %v4343 = vunpack.c.l.b16 %v3276
    %v4344 = vunpack.c.l.b16 %v3277
    %v4345 = vunpack.c.h.b16 %v3277
    %v4346 = vunpack.c.l.b16 %v3278
    %v4347 = vunpack.c.h.b16 %v3278
    %v4348 = vunpack.c.l.b16 %v3279
    %v4349 = vunpack.c.h.b16 %v3279
    %v4350 = vunpack.c.l.b16 %v3280
    %v4351 = vunpack.c.l.b16 %v3281
    %v4352 = vunpack.c.h.b16 %v3281
    %v4353 = vunpack.c.l.b16 %v3282
    %v4354 = vunpack.c.h.b16 %v3282
    %v4355 = vunpack.c.l.b16 %v3283
    %v4356 = vunpack.c.h.b16 %v3283
    %v4357 = vunpack.c.l.b16 %v3284
    %v4358 = vunpack.c.l.b16 %v3285
    %v4359 = vunpack.c.h.b16 %v3285
    %v4360 = vunpack.c.l.b16 %v3286
    %v4361 = vunpack.c.h.b16 %v3286
    %v4362 = vunpack.c.l.b16 %v3287
    %v4363 = vunpack.c.h.b16 %v3287
    %v4364 = vunpack.c.l.b16 %v3288
    %v4365 = vunpack.c.l.b16 %v3289
    %v4366 = vunpack.c.h.b16 %v3289
    %v4367 = vunpack.c.l.b16 %v3290
    %v4368 = vunpack.c.h.b16 %v3290
    %v4369 = vunpack.c.l.b16 %v3291
    %v4370 = vunpack.c.h.b16 %v3291
    %v4371 = vunpack.c.l.b16 %v3292
    %v4372 = vunpack.c.l.b16 %v3293
    %v4373 = vunpack.c.h.b16 %v3293
    %v4374 = vunpack.c.l.b16 %v3294
    %v4375 = vunpack.c.h.b16 %v3294
    %v4376 = vunpack.c.l.b16 %v3295
    %v4377 = vunpack.c.h.b16 %v3295
    %v4378 = vunpack.c.l.b16 %v3296
    %v4379 = vunpack.c.l.b16 %v3297
    %v4380 = vunpack.c.h.b16 %v3297
    %v4381 = vunpack.c.l.b16 %v3298
    %v4382 = vunpack.c.h.b16 %v3298
    %v4383 = vunpack.c.l.b16 %v3299
    %v4384 = vunpack.c.h.b16 %v3299
    %v4385 = vunpack.c.l.b16 %v3300
    %v4386 = vunpack.c.l.b16 %v3301
    %v4387 = vunpack.c.h.b16 %v3301
    %v4388 = vunpack.c.l.b16 %v3302
    %v4389 = vunpack.c.h.b16 %v3302
    %v4390 = vunpack.c.l.b16 %v3303
    %v4391 = vunpack.c.h.b16 %v3303
    %v4392 = vunpack.c.l.b16 %v3304
    %v4393 = vunpack.c.l.b16 %v3305
    %v4394 = vunpack.c.h.b16 %v3305
    %v4395 = vunpack.c.l.b16 %v3306
    %v4396 = vunpack.c.h.b16 %v3306
    %v4397 = vunpack.c.l.b16 %v3307
    %v4398 = vunpack.c.h.b16 %v3307
    %v4399 = vunpack.c.l.b16 %v3308
    %v4400 = vunpack.c.l.b16 %v3309
    %v4401 = vunpack.c.h.b16 %v3309
    %v4402 = vunpack.c.l.b16 %v3310
    %v4403 = vunpack.c.h.b16 %v3310
    %v4404 = vunpack.c.l.b16 %v3311
    %v4405 = vunpack.c.h.b16 %v3311
    %v4406 = vunpack.c.l.b16 %v3312
    %v4407 = vunpack.c.l.b16 %v3313
    %v4408 = vunpack.c.h.b16 %v3313
    %v4409 = vunpack.c.l.b16 %v3314
    %v4410 = vunpack.c.h.b16 %v3314
    %v4411 = vunpack.c.l.b16 %v3315
    %v4412 = vunpack.c.h.b16 %v3315
    %v4413 = vunpack.c.l.b16 %v3316
    %v4414 = vunpack.c.l.b16 %v3317
    %v4415 = vunpack.c.h.b16 %v3317
    %v4416 = vunpack.c.l.b16 %v3318
    %v4417 = vunpack.c.h.b16 %v3318
    %v4418 = vunpack.c.l.b16 %v3319
    %v4419 = vunpack.c.h.b16 %v3319
    %v4420 = vunpack.c.l.b16 %v3320
    %v4421 = vunpack.c.l.b16 %v3321
    %v4422 = vunpack.c.h.b16 %v3321
    %v4423 = vunpack.c.l.b16 %v3322
    %v4424 = vunpack.c.h.b16 %v3322
    %v4425 = vunpack.c.l.b16 %v3323
    %v4426 = vunpack.c.h.b16 %v3323
    %v4427 = vunpack.c.l.b16 %v3324
    %v4428 = vunpack.c.l.b16 %v3325
    %v4429 = vunpack.c.h.b16 %v3325
    %v4430 = vunpack.c.l.b16 %v3326
    %v4431 = vunpack.c.h.b16 %v3326
    %v4432 = vunpack.c.l.b16 %v3327
    %v4433 = vunpack.c.h.b16 %v3327
    %v4434 = vunpack.c.l.b16 %v3328
    %v4435 = vunpack.c.l.b16 %v3329
    %v4436 = vunpack.c.h.b16 %v3329
    %v4437 = vunpack.c.l.b16 %v3330
    %v4438 = vunpack.c.h.b16 %v3330
    %v4439 = vunpack.c.l.b16 %v3331
    %v4440 = vunpack.c.h.b16 %v3331
    %v4441 = vunpack.c.l.b16 %v3332
    %v4442 = vunpack.c.l.b16 %v3333
    %v4443 = vunpack.c.h.b16 %v3333
    %v4444 = vunpack.c.l.b16 %v3334
    %v4445 = vunpack.c.h.b16 %v3334
    %v4446 = vunpack.c.l.b16 %v3335
    %v4447 = vunpack.c.h.b16 %v3335
    %v4448 = vunpack.c.l.b16 %v3336
    %v4449 = vunpack.c.l.b16 %v3337
    %v4450 = vunpack.c.h.b16 %v3337
    %v4451 = vunpack.c.l.b16 %v3338
    %v4452 = vunpack.c.h.b16 %v3338
    %v4453 = vunpack.c.l.b16 %v3339
    %v4454 = vunpack.c.h.b16 %v3339
    %v4455 = vunpack.c.l.b16 %v3340
    %v4456 = vunpack.c.l.b16 %v3341
    %v4457 = vunpack.c.h.b16 %v3341
    %v4458 = vunpack.c.l.b16 %v3342
    %v4459 = vunpack.c.h.b16 %v3342
    %v4460 = vunpack.c.l.b16 %v3343
    %v4461 = vunpack.c.h.b16 %v3343
    %v4462 = vunpack.c.l.b16 %v3344
    %v4463 = vunpack.c.l.b16 %v3345
    %v4464 = vunpack.c.h.b16 %v3345
    %v4465 = vunpack.c.l.b16 %v3346
    %v4466 = vunpack.c.h.b16 %v3346
    %v4467 = vunpack.c.l.b16 %v3347
    %v4468 = vunpack.c.h.b16 %v3347
    %v4469 = vunpack.c.l.b16 %v3348
    %v4470 = vunpack.c.l.b16 %v3349
    %v4471 = vunpack.c.h.b16 %v3349
    %v4472 = vunpack.c.l.b16 %v3350
    %v4473 = vunpack.c.h.b16 %v3350
    %v4474 = vunpack.c.l.b16 %v3351
    %v4475 = vunpack.c.h.b16 %v3351
    %v4476 = vunpack.c.l.b16 %v3352
    %v4477 = vunpack.c.l.b16 %v3353
    %v4478 = vunpack.c.h.b16 %v3353
    %v4479 = vunpack.c.l.b16 %v3354
    %v4480 = vunpack.c.h.b16 %v3354
    %v4481 = vunpack.c.l.b16 %v3355
    %v4482 = vunpack.c.h.b16 %v3355
    %v4483 = vunpack.c.l.b16 %v3356
    %v4484 = vunpack.c.l.b16 %v3357
    %v4485 = vunpack.c.h.b16 %v3357
    %v4486 = vunpack.c.l.b16 %v3358
    %v4487 = vunpack.c.h.b16 %v3358
    %v4488 = vunpack.c.l.b16 %v3359
    %v4489 = vunpack.c.h.b16 %v3359
    %v4490 = vunpack.c.l.b16 %v3360
    %v4491 = vunpack.c.l.b16 %v3361
    %v4492 = vunpack.c.h.b16 %v3361
    %v4493 = vunpack.c.l.b16 %v3362
    %v4494 = vunpack.c.h.b16 %v3362
    %v4495 = vunpack.c.l.b16 %v3363
    %v4496 = vunpack.c.h.b16 %v3363
    %v4497 = vunpack.c.l.b16 %v3364
    %v4498 = vunpack.c.l.b16 %v3365
    %v4499 = vunpack.c.h.b16 %v3365
    %v4500 = vunpack.c.l.b16 %v3366
    %v4501 = vunpack.c.h.b16 %v3366
    %v4502 = vunpack.c.l.b16 %v3367
    %v4503 = vunpack.c.h.b16 %v3367
    %v4504 = vunpack.c.l.b16 %v3368
    %v4505 = vunpack.c.l.b16 %v3369
    %v4506 = vunpack.c.h.b16 %v3369
    %v4507 = vunpack.c.l.b16 %v3370
    %v4508 = vunpack.c.h.b16 %v3370
    %v4509 = vunpack.c.l.b16 %v3371
    %v4510 = vunpack.c.h.b16 %v3371
    %v4511 = vunpack.c.l.b16 %v3372
    %v4512 = vunpack.c.l.b16 %v3373
    %v4513 = vunpack.c.h.b16 %v3373
    %v4514 = vunpack.c.l.b16 %v3374
    %v4515 = vunpack.c.h.b16 %v3374
    %v4516 = vunpack.c.l.b16 %v3375
    %v4517 = vunpack.c.h.b16 %v3375
    %v4518 = vunpack.c.l.b16 %v3376
    %v4519 = vunpack.c.l.b16 %v3377
    %v4520 = vunpack.c.h.b16 %v3377
    %v4521 = vunpack.c.l.b16 %v3378
    %v4522 = vunpack.c.h.b16 %v3378
    %v4523 = vunpack.c.l.b16 %v3379
    %v4524 = vunpack.c.h.b16 %v3379
    %v4525 = vunpack.c.l.b16 %v3380
    %v4526 = vunpack.c.l.b16 %v3381
    %v4527 = vunpack.c.h.b16 %v3381
    %v4528 = vunpack.c.l.b16 %v3382
    %v4529 = vunpack.c.h.b16 %v3382
    %v4530 = vunpack.c.l.b16 %v3383
    %v4531 = vunpack.c.h.b16 %v3383
    %v4532 = vunpack.c.l.b16 %v3384
    %v4533 = vunpack.c.l.b16 %v3385
    %v4534 = vunpack.c.h.b16 %v3385
    %v4535 = vunpack.c.l.b16 %v3386
    %v4536 = vunpack.c.h.b16 %v3386
    %v4537 = vunpack.c.l.b16 %v3387
    %v4538 = vunpack.c.h.b16 %v3387
    %v4539 = vunpack.c.l.b16 %v3388
    %v4540 = vunpack.c.l.b16 %v3389
    %v4541 = vunpack.c.h.b16 %v3389
    %v4542 = vunpack.c.l.b16 %v3390
    %v4543 = vunpack.c.h.b16 %v3390
    %v4544 = vunpack.c.l.b16 %v3391
    %v4545 = vunpack.c.h.b16 %v3391
    %v4546 = vunpack.c.l.b16 %v3392
    %v4547 = vunpack.c.l.b16 %v3393
    %v4548 = vunpack.c.h.b16 %v3393
    %v4549 = vunpack.c.l.b16 %v3394
    %v4550 = vunpack.c.h.b16 %v3394
    %v4551 = vunpack.c.l.b16 %v3395
    %v4552 = vunpack.c.h.b16 %v3395
    %v4553 = vunpack.c.l.b16 %v3396
    %v4554 = vunpack.c.l.b16 %v3397
    %v4555 = vunpack.c.h.b16 %v3397
    %v4556 = vunpack.c.l.b16 %v3398
    %v4557 = vunpack.c.h.b16 %v3398
    %v4558 = vunpack.c.l.b16 %v3399
    %v4559 = vunpack.c.h.b16 %v3399
    %v4560 = vunpack.c.l.b16 %v3400
    %v4561 = vunpack.c.l.b16 %v3401
    %v4562 = vunpack.c.h.b16 %v3401
    %v4563 = vunpack.c.l.b16 %v3402
    %v4564 = vunpack.c.h.b16 %v3402
    %v4565 = vunpack.c.l.b16 %v3403
    %v4566 = vunpack.c.h.b16 %v3403
    %v4567 = vunpack.c.l.b16 %v3404
    %v4568 = vunpack.c.l.b16 %v3405
    %v4569 = vunpack.c.h.b16 %v3405
    %v4570 = vunpack.c.l.b16 %v3406
    %v4571 = vunpack.c.h.b16 %v3406
    %v4572 = vunpack.c.l.b16 %v3407
    %v4573 = vunpack.c.h.b16 %v3407
    %v4574 = vunpack.c.l.b16 %v3408
    %v4575 = vunpack.c.l.b16 %v3409
    %v4576 = vunpack.c.h.b16 %v3409
    %v4577 = vunpack.c.l.b16 %v3410
    %v4578 = vunpack.c.h.b16 %v3410
    %v4579 = vunpack.c.l.b16 %v3411
    %v4580 = vunpack.c.h.b16 %v3411
    %v4581 = vunpack.c.l.b16 %v3412
    %v4582 = vunpack.c.l.b16 %v3413
    %v4583 = vunpack.c.h.b16 %v3413
    %v4584 = vunpack.c.l.b16 %v3414
    %v4585 = vunpack.c.h.b16 %v3414
    %v4586 = vunpack.c.l.b16 %v3415
    %v4587 = vunpack.c.h.b16 %v3415
    %v4588 = vunpack.c.l.b16 %v3416
    %v4589 = vunpack.c.l.b16 %v3417
    %v4590 = vunpack.c.h.b16 %v3417
    %v4591 = vunpack.c.l.b16 %v3418
    %v4592 = vunpack.c.h.b16 %v3418
    %v4593 = vunpack.c.l.b16 %v3419
    %v4594 = vunpack.c.h.b16 %v3419
    %v4595 = vunpack.c.l.b16 %v3420
    %v4596 = vunpack.c.l.b16 %v3421
    %v4597 = vunpack.c.h.b16 %v3421
    %v4598 = vunpack.c.l.b16 %v3422
    %v4599 = vunpack.c.h.b16 %v3422
    %v4600 = vunpack.c.l.b16 %v3423
    %v4601 = vunpack.c.h.b16 %v3423
    %v4602 = vunpack.c.l.b16 %v3424
    %v4603 = vunpack.c.l.b16 %v3425
    %v4604 = vunpack.c.h.b16 %v3425
    %v4605 = vunpack.c.l.b16 %v3426
    %v4606 = vunpack.c.h.b16 %v3426
    %v4607 = vunpack.c.l.b16 %v3427
    %v4608 = vunpack.c.h.b16 %v3427
    %v4609 = vunpack.c.l.b16 %v3428
    %v4610 = vunpack.c.l.b16 %v3429
    %v4611 = vunpack.c.h.b16 %v3429
    %v4612 = vunpack.c.l.b16 %v3430
    %v4613 = vunpack.c.h.b16 %v3430
    %v4614 = vunpack.c.l.b16 %v3431
    %v4615 = vunpack.c.h.b16 %v3431
    %v4616 = vunpack.c.l.b16 %v3432
    %v4617 = vunpack.c.l.b16 %v3433
    %v4618 = vunpack.c.h.b16 %v3433
    %v4619 = vunpack.c.l.b16 %v3434
    %v4620 = vunpack.c.h.b16 %v3434
    %v4621 = vunpack.c.l.b16 %v3435
    %v4622 = vunpack.c.h.b16 %v3435
    %v4623 = vunpack.c.l.b16 %v3436
    %v4624 = vunpack.c.l.b16 %v3437
    %v4625 = vunpack.c.h.b16 %v3437
    %v4626 = vunpack.c.l.b16 %v3438
    %v4627 = vunpack.c.h.b16 %v3438
    %v4628 = vunpack.c.l.b16 %v3439
    %v4629 = vunpack.c.h.b16 %v3439
    %v4630 = vunpack.c.l.b16 %v3440
    %v4631 = vunpack.c.l.b16 %v3441
    %v4632 = vunpack.c.h.b16 %v3441
    %v4633 = vunpack.c.l.b16 %v3442
    %v4634 = vunpack.c.h.b16 %v3442
    %v4635 = vunpack.c.l.b16 %v3443
    %v4636 = vunpack.c.h.b16 %v3443
    %v4637 = vunpack.c.l.b16 %v3444
    %v4638 = vunpack.c.l.b16 %v3445
    %v4639 = vunpack.c.h.b16 %v3445
    %v4640 = vunpack.c.l.b16 %v3446
    %v4641 = vunpack.c.h.b16 %v3446
    %v4642 = vunpack.c.l.b16 %v3447
    %v4643 = vunpack.c.h.b16 %v3447
    %v4644 = vunpack.c.l.b16 %v3448
    %v4645 = vunpack.c.l.b16 %v3449
    %v4646 = vunpack.c.h.b16 %v3449
    %v4647 = vunpack.c.l.b16 %v3450
    %v4648 = vunpack.c.h.b16 %v3450
    %v4649 = vunpack.c.l.b16 %v3451
    %v4650 = vunpack.c.h.b16 %v3451
    %v4651 = vunpack.c.l.b16 %v3452
    %v4652 = vunpack.c.l.b16 %v3453
    %v4653 = vunpack.c.h.b16 %v3453
    %v4654 = vunpack.c.l.b16 %v3454
    %v4655 = vunpack.c.h.b16 %v3454
    %v4656 = vunpack.c.l.b16 %v3455
    %v4657 = vunpack.c.h.b16 %v3455
    %v4658 = vunpack.c.l.b16 %v3456
    %v4659 = vunpack.c.l.b16 %v3457
    %v4660 = vunpack.c.h.b16 %v3457
    %v4661 = vunpack.c.l.b16 %v3458
    %v4662 = vunpack.c.h.b16 %v3458
    %v4663 = vunpack.c.l.b16 %v3459
    %v4664 = vunpack.c.h.b16 %v3459
    %v4665 = vunpack.c.l.b16 %v3460
    %v4666 = vunpack.c.l.b16 %v3461
    %v4667 = vunpack.c.h.b16 %v3461
    %v4668 = vunpack.c.l.b16 %v3462
    %v4669 = vunpack.c.h.b16 %v3462
    %v4670 = vunpack.c.l.b16 %v3463
    %v4671 = vunpack.c.h.b16 %v3463
    %v4672 = vunpack.c.l.b16 %v3464
    %v4673 = vunpack.c.l.b16 %v3465
    %v4674 = vunpack.c.h.b16 %v3465
    %v4675 = vunpack.c.l.b16 %v3466
    %v4676 = vunpack.c.h.b16 %v3466
    %v4677 = vunpack.c.l.b16 %v3467
    %v4678 = vunpack.c.h.b16 %v3467
    %v4679 = vunpack.c.l.b16 %v3468
    %v4680 = vunpack.c.l.b16 %v3469
    %v4681 = vunpack.c.h.b16 %v3469
    %v4682 = vunpack.c.l.b16 %v3470
    %v4683 = vunpack.c.h.b16 %v3470
    %v4684 = vunpack.c.l.b16 %v3471
    %v4685 = vunpack.c.h.b16 %v3471
    %v4686 = vunpack.c.l.b16 %v3472
    %v4687 = vunpack.c.l.b16 %v3473
    %v4688 = vunpack.c.h.b16 %v3473
    %v4689 = vunpack.c.l.b16 %v3474
    %v4690 = vunpack.c.h.b16 %v3474
    %v4691 = vunpack.c.l.b16 %v3475
    %v4692 = vunpack.c.h.b16 %v3475
    %v4693 = vunpack.c.l.b16 %v3476
    %v4694 = vunpack.c.l.b16 %v3477
    %v4695 = vunpack.c.h.b16 %v3477
    %v4696 = vunpack.c.l.b16 %v3478
    %v4697 = vunpack.c.h.b16 %v3478
    %v4698 = vunpack.c.l.b16 %v3479
    %v4699 = vunpack.c.h.b16 %v3479
    %v4700 = vunpack.c.l.b16 %v3480
    %v4701 = vunpack.c.l.b16 %v3481
    %v4702 = vunpack.c.h.b16 %v3481
    %v4703 = vunpack.c.l.b16 %v3482
    %v4704 = vunpack.c.h.b16 %v3482
    %v4705 = vunpack.c.l.b16 %v3483
    %v4706 = vunpack.c.h.b16 %v3483
    %v4707 = vunpack.c.l.b16 %v3484
    %v4708 = vunpack.c.l.b16 %v3485
    %v4709 = vunpack.c.h.b16 %v3485
    %v4710 = vunpack.c.l.b16 %v3486
    %v4711 = vunpack.c.h.b16 %v3486
    %v4712 = vunpack.c.l.b16 %v3487
    %v4713 = vunpack.c.h.b16 %v3487
    %v4714 = vunpack.c.l.b16 %v3488
    %v4715 = vunpack.c.l.b16 %v3489
    %v4716 = vunpack.c.h.b16 %v3489
    %v4717 = vunpack.c.l.b16 %v3490
    %v4718 = vunpack.c.h.b16 %v3490
    %v4719 = vunpack.c.l.b16 %v3491
    %v4720 = vunpack.c.h.b16 %v3491
    %v4721 = vunpack.c.l.b16 %v3492
    %v4722 = vunpack.c.l.b16 %v3493
    %v4723 = vunpack.c.h.b16 %v3493
    %v4724 = vunpack.c.l.b16 %v3494
    %v4725 = vunpack.c.h.b16 %v3494
    %v4726 = vunpack.c.l.b16 %v3495
    %v4727 = vunpack.c.h.b16 %v3495
    %v4728 = vunpack.c.l.b16 %v3496
    %v4729 = vunpack.c.l.b16 %v3497
    %v4730 = vunpack.c.h.b16 %v3497
    %v4731 = vunpack.c.l.b16 %v3498
    %v4732 = vunpack.c.h.b16 %v3498
    %v4733 = vunpack.c.l.b16 %v3499
    %v4734 = vunpack.c.h.b16 %v3499
    %v4735 = vunpack.c.l.b16 %v3500
    %v4736 = vunpack.c.l.b16 %v3501
    %v4737 = vunpack.c.h.b16 %v3501
    %v4738 = vunpack.c.l.b16 %v3502
    %v4739 = vunpack.c.h.b16 %v3502
    %v4740 = vunpack.c.l.b16 %v3503
    %v4741 = vunpack.c.h.b16 %v3503
    %v4742 = vunpack.c.l.b16 %v3504
    %v4743 = vunpack.c.l.b16 %v3505
    %v4744 = vunpack.c.h.b16 %v3505
    %v4745 = vunpack.c.l.b16 %v3506
    %v4746 = vunpack.c.h.b16 %v3506
    %v4747 = vunpack.c.l.b16 %v3507
    %v4748 = vunpack.c.h.b16 %v3507
    %v4749 = vunpack.c.l.b16 %v3508
    %v4750 = vunpack.c.l.b16 %v3509
    %v4751 = vunpack.c.h.b16 %v3509
    %v4752 = vunpack.c.l.b16 %v3510
    %v4753 = vunpack.c.h.b16 %v3510
    %v4754 = vunpack.c.l.b16 %v3511
    %v4755 = vunpack.c.h.b16 %v3511
    %v4756 = vunpack.c.l.b16 %v3512
    %v4757 = vunpack.c.l.b16 %v3513
    %v4758 = vunpack.c.h.b16 %v3513
    %v4759 = vunpack.c.l.b16 %v3514
    %v4760 = vunpack.c.h.b16 %v3514
    %v4761 = vunpack.c.l.b16 %v3515
    %v4762 = vunpack.c.h.b16 %v3515
    %v4763 = vunpack.c.l.b16 %v3516
    %v4764 = vunpack.c.l.b16 %v3517
    %v4765 = vunpack.c.h.b16 %v3517
    %v4766 = vunpack.c.l.b16 %v3518
    %v4767 = vunpack.c.h.b16 %v3518
    %v4768 = vunpack.c.l.b16 %v3519
    %v4769 = vunpack.c.h.b16 %v3519
    %v4770 = vunpack.c.l.b16 %v3520
    %v4771 = vunpack.c.l.b16 %v3521
    %v4772 = vunpack.c.h.b16 %v3521
    %v4773 = vunpack.c.l.b16 %v3522
    %v4774 = vunpack.c.h.b16 %v3522
    %v4775 = vunpack.c.l.b16 %v3523
    %v4776 = vunpack.c.h.b16 %v3523
    %v4777 = vunpack.c.l.b16 %v3524
    %v4778 = vunpack.c.l.b16 %v3525
    %v4779 = vunpack.c.h.b16 %v3525
    %v4780 = vunpack.c.l.b16 %v3526
    %v4781 = vunpack.c.h.b16 %v3526
    %v4782 = vunpack.c.l.b16 %v3527
    %v4783 = vunpack.c.h.b16 %v3527
    %v4784 = vunpack.c.l.b16 %v3528
    %v4785 = vunpack.c.l.b16 %v3529
    %v4786 = vunpack.c.h.b16 %v3529
    %v4787 = vunpack.c.l.b16 %v3530
    %v4788 = vunpack.c.h.b16 %v3530
    %v4789 = vunpack.c.l.b16 %v3531
    %v4790 = vunpack.c.h.b16 %v3531
    %v4791 = vunpack.c.l.b16 %v3532
    %v4792 = vunpack.c.l.b16 %v3533
    %v4793 = vunpack.c.h.b16 %v3533
    %v4794 = vunpack.c.l.b16 %v3534
    %v4795 = vunpack.c.h.b16 %v3534
    %v4796 = vunpack.c.l.b16 %v3535
    %v4797 = vunpack.c.h.b16 %v3535
    %v4798 = vunpack.c.l.b16 %v3536
    %v4799 = vunpack.c.l.b16 %v3537
    %v4800 = vunpack.c.h.b16 %v3537
    %v4801 = vunpack.c.l.b16 %v3538
    %v4802 = vunpack.c.h.b16 %v3538
    %v4803 = vunpack.c.l.b16 %v3539
    %v4804 = vunpack.c.h.b16 %v3539
    %v4805 = vunpack.c.l.b16 %v3540
    %v4806 = vunpack.c.l.b16 %v3541
    %v4807 = vunpack.c.h.b16 %v3541
    %v4808 = vunpack.c.l.b16 %v3542
    %v4809 = vunpack.c.h.b16 %v3542
    %v4810 = vunpack.c.l.b16 %v3543
    %v4811 = vunpack.c.h.b16 %v3543
    %v4812 = vunpack.c.l.b16 %v3544
    %v4813 = vunpack.c.l.b16 %v3545
    %v4814 = vunpack.c.h.b16 %v3545
    %v4815 = vunpack.c.l.b16 %v3546
    %v4816 = vunpack.c.h.b16 %v3546
    %v4817 = vunpack.c.l.b16 %v3547
    %v4818 = vunpack.c.h.b16 %v3547
    %v4819 = vunpack.c.l.b16 %v3548
    %v4820 = vunpack.c.l.b16 %v3549
    %v4821 = vunpack.c.h.b16 %v3549
    %v4822 = vunpack.c.l.b16 %v3550
    %v4823 = vunpack.c.h.b16 %v3550
    %v4824 = vunpack.c.l.b16 %v3551
    %v4825 = vunpack.c.h.b16 %v3551
    %v4826 = vunpack.c.l.b16 %v3552
    %v4827 = vunpack.c.l.b16 %v3553
    %v4828 = vunpack.c.h.b16 %v3553
    %v4829 = vunpack.c.l.b16 %v3554
    %v4830 = vunpack.c.h.b16 %v3554
    %v4831 = vunpack.c.l.b16 %v3555
    %v4832 = vunpack.c.h.b16 %v3555
    %v4833 = vunpack.c.l.b16 %v3556
    %v4834 = vunpack.c.l.b16 %v3557
    %v4835 = vunpack.c.h.b16 %v3557
    %v4836 = vunpack.c.l.b16 %v3558
    %v4837 = vunpack.c.h.b16 %v3558
    %v4838 = vunpack.c.l.b16 %v3559
    %v4839 = vunpack.c.h.b16 %v3559
    %v4840 = vunpack.c.l.b16 %v3560
    %v4841 = vunpack.c.l.b16 %v3561
    %v4842 = vunpack.c.h.b16 %v3561
    %v4843 = vunpack.c.l.b16 %v3562
    %v4844 = vunpack.c.h.b16 %v3562
    %v4845 = vunpack.c.l.b16 %v3563
    %v4846 = vunpack.c.h.b16 %v3563
    %v4847 = vunpack.c.l.b16 %v3564
    %v4848 = vunpack.c.l.b16 %v3565
    %v4849 = vunpack.c.h.b16 %v3565
    %v4850 = vunpack.c.l.b16 %v3566
    %v4851 = vunpack.c.h.b16 %v3566
    %v4852 = vunpack.c.l.b16 %v3567
    %v4853 = vunpack.c.h.b16 %v3567
    %v4854 = vunpack.c.l.b16 %v3568
    %v4855 = vunpack.c.l.b16 %v3569
    %v4856 = vunpack.c.h.b16 %v3569
    %v4857 = vunpack.c.l.b16 %v3570
    %v4858 = vunpack.c.h.b16 %v3570
    %v4859 = vunpack.c.l.b16 %v3571
    %v4860 = vunpack.c.h.b16 %v3571
    %v4861 = vunpack.c.l.b16 %v3572
    %v4862 = vunpack.c.l.b16 %v3573
    %v4863 = vunpack.c.h.b16 %v3573
    %v4864 = vunpack.c.l.b16 %v3574
    %v4865 = vunpack.c.h.b16 %v3574
    %v4866 = vunpack.c.l.b16 %v3575
    %v4867 = vunpack.c.h.b16 %v3575
    %v4868 = vunpack.c.l.b16 %v3576
    %v4869 = vunpack.c.l.b16 %v3577
    %v4870 = vunpack.c.h.b16 %v3577
    %v4871 = vunpack.c.l.b16 %v3578
    %v4872 = vunpack.c.h.b16 %v3578
    %v4873 = vunpack.c.l.b16 %v3579
    %v4874 = vunpack.c.h.b16 %v3579
    %v4875 = vunpack.c.l.b16 %v3580
    %v4876 = vunpack.c.l.b16 %v3581
    %v4877 = vunpack.c.h.b16 %v3581
    %v4878 = vunpack.c.l.b16 %v3582
    %v4879 = vunpack.c.h.b16 %v3582
    %v4880 = vunpack.c.l.b16 %v3583
    %v4881 = vunpack.c.h.b16 %v3583
    %v4882 = vunpack.c.l.b16 %v3584
    %v4883 = vunpack.c.l.b16 %v3585
    %v4884 = vunpack.c.h.b16 %v3585
    %v4885 = vunpack.c.l.b16 %v3586
    %v4886 = vunpack.c.h.b16 %v3586
    %v4887 = vunpack.c.l.b16 %v3587
    %v4888 = vunpack.c.h.b16 %v3587
    %v4889 = vunpack.c.l.b16 %v3588
    %v4890 = vunpack.c.l.b16 %v3589
    %v4891 = vunpack.c.h.b16 %v3589
    %v4892 = vunpack.c.l.b16 %v3590
    %v4893 = vunpack.c.h.b16 %v3590
    %v4894 = vunpack.c.l.b16 %v3591
    %v4895 = vunpack.c.h.b16 %v3591
    %v4896 = vunpack.c.l.b16 %v3592
    %v4897 = vunpack.c.l.b16 %v3593
    %v4898 = vunpack.c.h.b16 %v3593
    %v4899 = vunpack.c.l.b16 %v3594
    %v4900 = vunpack.c.h.b16 %v3594
    %v4901 = vunpack.c.l.b16 %v3595
    %v4902 = vunpack.c.h.b16 %v3595
    %v4903 = vunpack.c.l.b16 %v3596
    %v4904 = vunpack.c.l.b16 %v3597
    %v4905 = vunpack.c.h.b16 %v3597
    %v4906 = vunpack.c.l.b16 %v3598
    %v4907 = vunpack.c.h.b16 %v3598
    %v4908 = vunpack.c.l.b16 %v3599
    %v4909 = vunpack.c.h.b16 %v3599
    %v4910 = vunpack.c.l.b16 %v3600
    %v4911 = vunpack.c.l.b16 %v3601
    %v4912 = vunpack.c.h.b16 %v3601
    %v4913 = vunpack.c.l.b16 %v3602
    %v4914 = vunpack.c.h.b16 %v3602
    %v4915 = vunpack.c.l.b16 %v3603
    %v4916 = vunpack.c.h.b16 %v3603
    %v4917 = vunpack.c.l.b16 %v3604
    %v4918 = vunpack.c.l.b16 %v3605
    %v4919 = vunpack.c.h.b16 %v3605
    %v4920 = vunpack.c.l.b16 %v3606
    %v4921 = vunpack.c.h.b16 %v3606
    %v4922 = vunpack.c.l.b16 %v3607
    %v4923 = vunpack.c.h.b16 %v3607
    %v4924 = vunpack.c.l.b16 %v3608
    %v4925 = vunpack.c.l.b16 %v3609
    %v4926 = vunpack.c.h.b16 %v3609
    %v4927 = vunpack.c.l.b16 %v3610
    %v4928 = vunpack.c.h.b16 %v3610
    %v4929 = vunpack.c.l.b16 %v3611
    %v4930 = vunpack.c.h.b16 %v3611
    %v4931 = vunpack.c.l.b16 %v3612
    %v4932 = vunpack.c.l.b16 %v3613
    %v4933 = vunpack.c.h.b16 %v3613
    %v4934 = vunpack.c.l.b16 %v3614
    %v4935 = vunpack.c.h.b16 %v3614
    %v4936 = vunpack.c.l.b16 %v3615
    %v4937 = vunpack.c.h.b16 %v3615
    %v4938 = vunpack.c.l.b16 %v3616
    %v4939 = vunpack.c.l.b16 %v3617
    %v4940 = vunpack.c.h.b16 %v3617
    %v4941 = vunpack.c.l.b16 %v3618
    %v4942 = vunpack.c.h.b16 %v3618
    %v4943 = vunpack.c.l.b16 %v3619
    %v4944 = vunpack.c.h.b16 %v3619
    %v4945 = vunpack.c.l.b16 %v3620
    %v4946 = vunpack.c.l.b16 %v3621
    %v4947 = vunpack.c.h.b16 %v3621
    %v4948 = vunpack.c.l.b16 %v3622
    %v4949 = vunpack.c.h.b16 %v3622
    %v4950 = vunpack.c.l.b16 %v3623
    %v4951 = vunpack.c.h.b16 %v3623
    %v4952 = vunpack.c.l.b16 %v3624
    %v4953 = vunpack.c.l.b16 %v3625
    %v4954 = vunpack.c.h.b16 %v3625
    %v4955 = vunpack.c.l.b16 %v3626
    %v4956 = vunpack.c.h.b16 %v3626
    %v4957 = vunpack.c.l.b16 %v3627
    %v4958 = vunpack.c.h.b16 %v3627
    %v4959 = vunpack.c.l.b16 %v3628
    %v4960 = vunpack.c.l.b16 %v3629
    %v4961 = vunpack.c.h.b16 %v3629
    %v4962 = vunpack.c.l.b16 %v3630
    %v4963 = vunpack.c.h.b16 %v3630
    %v4964 = vunpack.c.l.b16 %v3631
    %v4965 = vunpack.c.h.b16 %v3631
    %v4966 = vunpack.c.l.b16 %v3632
    %v4967 = vunpack.c.l.b16 %v3633
    %v4968 = vunpack.c.h.b16 %v3633
    %v4969 = vunpack.c.l.b16 %v3634
    %v4970 = vunpack.c.h.b16 %v3634
    %v4971 = vunpack.c.l.b16 %v3635
    %v4972 = vunpack.c.h.b16 %v3635
    %v4973 = vunpack.c.l.b16 %v3636
    %v4974 = vunpack.c.l.b16 %v3637
    %v4975 = vunpack.c.h.b16 %v3637
    %v4976 = vunpack.c.l.b16 %v3638
    %v4977 = vunpack.c.h.b16 %v3638
    %v4978 = vunpack.c.l.b16 %v3639
    %v4979 = vunpack.c.h.b16 %v3639
    %v4980 = vunpack.c.l.b16 %v3640
    %v4981 = vunpack.c.l.b16 %v3641
    %v4982 = vunpack.c.h.b16 %v3641
    %v4983 = vunpack.c.l.b16 %v3642
    %v4984 = vunpack.c.h.b16 %v3642
    %v4985 = vunpack.c.l.b16 %v3643
    %v4986 = vunpack.c.h.b16 %v3643
    %v4987 = vunpack.c.l.b16 %v3644
    %v4988 = vunpack.c.l.b16 %v3645
    %v4989 = vunpack.c.h.b16 %v3645
    %v4990 = vunpack.c.l.b16 %v3646
    %v4991 = vunpack.c.h.b16 %v3646
    %v4992 = vunpack.c.l.b16 %v3647
    %v4993 = vunpack.c.h.b16 %v3647
    %v4994 = vunpack.c.l.b16 %v3648
    %v4995 = vunpack.c.l.b16 %v3649
    %v4996 = vunpack.c.h.b16 %v3649
    %v4997 = vunpack.c.l.b16 %v3650
    %v4998 = vunpack.c.h.b16 %v3650
    %v4999 = vunpack.c.l.b16 %v3651
    %v5000 = vunpack.c.h.b16 %v3651
    %v5001 = vunpack.c.l.b16 %v3652
    %v5002 = vunpack.c.l.b16 %v3653
    %v5003 = vunpack.c.h.b16 %v3653
    %v5004 = vunpack.c.l.b16 %v3654
    %v5005 = vunpack.c.h.b16 %v3654
    %v5006 = vunpack.c.l.b16 %v3655
    %v5007 = vunpack.c.h.b16 %v3655
    %v5008 = vunpack.c.l.b16 %v3656
    %v5009 = vunpack.c.l.b16 %v3657
    %v5010 = vunpack.c.h.b16 %v3657
    %v5011 = vunpack.c.l.b16 %v3658
    %v5012 = vunpack.c.h.b16 %v3658
    %v5013 = vunpack.c.l.b16 %v3659
    %v5014 = vunpack.c.h.b16 %v3659
    %v5015 = vunpack.c.l.b16 %v3660
    %v5016 = vunpack.c.l.b16 %v3661
    %v5017 = vunpack.c.h.b16 %v3661
    %v5018 = vunpack.c.l.b16 %v3662
    %v5019 = vunpack.c.h.b16 %v3662
    %v5020 = vunpack.c.l.b16 %v3663
    %v5021 = vunpack.c.h.b16 %v3663
    %v5022 = vunpack.c.l.b16 %v3664
    %v5023 = vunpack.c.l.b16 %v3665
    %v5024 = vunpack.c.h.b16 %v3665
    %v5025 = vunpack.c.l.b16 %v3666
    %v5026 = vunpack.c.h.b16 %v3666
    %v5027 = vunpack.c.l.b16 %v3667
    %v5028 = vunpack.c.h.b16 %v3667
    %v5029 = vunpack.c.l.b16 %v3668
    %v5030 = vunpack.c.l.b16 %v3669
    %v5031 = vunpack.c.h.b16 %v3669
    %v5032 = vunpack.c.l.b16 %v3670
    %v5033 = vunpack.c.h.b16 %v3670
    %v5034 = vunpack.c.l.b16 %v3671
    %v5035 = vunpack.c.h.b16 %v3671
    %v5036 = vunpack.c.l.b16 %v3672
    %v5037 = vunpack.c.l.b16 %v3673
    %v5038 = vunpack.c.h.b16 %v3673
    %v5039 = vunpack.c.l.b16 %v3674
    %v5040 = vunpack.c.h.b16 %v3674
    %v5041 = vunpack.c.l.b16 %v3675
    %v5042 = vunpack.c.h.b16 %v3675
    %v5043 = vunpack.c.l.b16 %v3676
    %v5044 = vunpack.c.l.b16 %v3677
    %v5045 = vunpack.c.h.b16 %v3677
    %v5046 = vunpack.c.l.b16 %v3678
    %v5047 = vunpack.c.h.b16 %v3678
    %v5048 = vunpack.c.l.b16 %v3679
    %v5049 = vunpack.c.h.b16 %v3679
    %v5050 = vunpack.c.l.b16 %v3680
    %v5051 = vunpack.c.l.b16 %v3681
    %v5052 = vunpack.c.h.b16 %v3681
    %v5053 = vunpack.c.l.b16 %v3682
    %v5054 = vunpack.c.h.b16 %v3682
    %v5055 = vunpack.c.l.b16 %v3683
    %v5056 = vunpack.c.h.b16 %v3683
    %v5057 = vunpack.c.l.b16 %v3684
    %v5058 = vunpack.c.l.b16 %v3685
    %v5059 = vunpack.c.h.b16 %v3685
    %v5060 = vunpack.c.l.b16 %v3686
    %v5061 = vunpack.c.h.b16 %v3686
    %v5062 = vunpack.c.l.b16 %v3687
    %v5063 = vunpack.c.h.b16 %v3687
    %v5064 = vunpack.c.l.b16 %v3688
    %v5065 = vunpack.c.l.b16 %v3689
    %v5066 = vunpack.c.h.b16 %v3689
    %v5067 = vunpack.c.l.b16 %v3690
    %v5068 = vunpack.c.h.b16 %v3690
    %v5069 = vunpack.c.l.b16 %v3691
    %v5070 = vunpack.c.h.b16 %v3691
    %v5071 = vunpack.c.l.b16 %v3692
    %v5072 = vunpack.c.l.b16 %v3693
    %v5073 = vunpack.c.h.b16 %v3693
    %v5074 = vunpack.c.l.b16 %v3694
    %v5075 = vunpack.c.h.b16 %v3694
    %v5076 = vunpack.c.l.b16 %v3695
    %v5077 = vunpack.c.h.b16 %v3695
    %v5078 = vunpack.c.l.b16 %v3696
    %v5079 = vunpack.c.l.b16 %v3697
    %v5080 = vunpack.c.h.b16 %v3697
    %v5081 = vunpack.c.l.b16 %v3698
    %v5082 = vunpack.c.h.b16 %v3698
    %v5083 = vunpack.c.l.b16 %v3699
    %v5084 = vunpack.c.h.b16 %v3699
    %v5085 = vunpack.c.l.b16 %v3700
    %v5086 = vunpack.c.l.b16 %v3701
    %v5087 = vunpack.c.h.b16 %v3701
    %v5088 = vunpack.c.l.b16 %v3702
    %v5089 = vunpack.c.h.b16 %v3702
    %v5090 = vunpack.c.l.b16 %v3703
    %v5091 = vunpack.c.h.b16 %v3703
    %v5092 = vunpack.c.l.b16 %v3704
    %v5093 = vunpack.c.l.b16 %v3705
    %v5094 = vunpack.c.h.b16 %v3705
    %v5095 = vunpack.c.l.b16 %v3706
    %v5096 = vunpack.c.h.b16 %v3706
    %v5097 = vunpack.c.l.b16 %v3707
    %v5098 = vunpack.c.h.b16 %v3707
    %v5099 = vunpack.c.l.b16 %v3708
    %v5100 = vunpack.c.l.b16 %v3709
    %v5101 = vunpack.c.h.b16 %v3709
    %v5102 = vunpack.c.l.b16 %v3710
    %v5103 = vunpack.c.h.b16 %v3710
    %v5104 = vunpack.c.l.b16 %v3711
    %v5105 = vunpack.c.h.b16 %v3711
    %v5106 = vunpack.c.l.b16 %v3712
    %v5107 = vunpack.c.l.b16 %v3713
    %v5108 = vunpack.c.h.b16 %v3713
    %v5109 = vunpack.c.l.b16 %v3714
    %v5110 = vunpack.c.h.b16 %v3714
    %v5111 = vunpack.c.l.b16 %v3715
    %v5112 = vunpack.c.h.b16 %v3715
    %v5113 = vunpack.c.l.b16 %v3716
    %v5114 = vunpack.c.l.b16 %v3717
    %v5115 = vunpack.c.h.b16 %v3717
    %v5116 = vunpack.c.l.b16 %v3718
    %v5117 = vunpack.c.h.b16 %v3718
    %v5118 = vunpack.c.l.b16 %v3719
    %v5119 = vunpack.c.h.b16 %v3719
    %v5120 = vunpack.c.l.b16 %v3720
    %v5121 = vunpack.c.l.b16 %v3721
    %v5122 = vunpack.c.h.b16 %v3721
    %v5123 = vunpack.c.l.b16 %v3722
    %v5124 = vunpack.c.h.b16 %v3722
    %v5125 = vunpack.c.l.b16 %v3723
    %v5126 = vunpack.c.h.b16 %v3723
    %v5127 = vunpack.c.l.b16 %v3724
    %v5128 = vunpack.c.l.b16 %v3725
    %v5129 = vunpack.c.h.b16 %v3725
    %v5130 = vunpack.c.l.b16 %v3726
    %v5131 = vunpack.c.h.b16 %v3726
    %v5132 = vunpack.c.l.b16 %v3727
    %v5133 = vunpack.c.h.b16 %v3727
    %v5134 = vunpack.c.l.b16 %v3728
    %v5135 = vunpack.c.l.b16 %v3729
    %v5136 = vunpack.c.h.b16 %v3729
    %v5137 = vunpack.c.l.b16 %v3730
    %v5138 = vunpack.c.h.b16 %v3730
    %v5139 = vunpack.c.l.b16 %v3731
    %v5140 = vunpack.c.h.b16 %v3731
    %v5141 = vunpack.c.l.b16 %v3732
    %v5142 = vunpack.c.l.b16 %v3733
    %v5143 = vunpack.c.h.b16 %v3733
    %v5144 = vunpack.c.l.b16 %v3734
    %v5145 = vunpack.c.h.b16 %v3734
    %v5146 = vunpack.c.l.b16 %v3735
    %v5147 = vunpack.c.h.b16 %v3735
    %v5148 = vunpack.c.l.b16 %v3736
    %v5149 = vunpack.c.l.b16 %v3737
    %v5150 = vunpack.c.h.b16 %v3737
    %v5151 = vunpack.c.l.b16 %v3738
    %v5152 = vunpack.c.h.b16 %v3738
    %v5153 = vunpack.c.l.b16 %v3739
    %v5154 = vunpack.c.h.b16 %v3739
    %v5155 = vunpack.c.l.b16 %v3740
    %v5156 = vunpack.c.l.b16 %v3741
    %v5157 = vunpack.c.h.b16 %v3741
    %v5158 = vunpack.c.l.b16 %v3742
    %v5159 = vunpack.c.h.b16 %v3742
    %v5160 = vunpack.c.l.b16 %v3743
    %v5161 = vunpack.c.h.b16 %v3743
    %v5162 = vunpack.c.l.b16 %v3744
    %v5163 = vunpack.c.l.b16 %v3745
    %v5164 = vunpack.c.h.b16 %v3745
    %v5165 = vunpack.c.l.b16 %v3746
    %v5166 = vunpack.c.h.b16 %v3746
    %v5167 = vunpack.c.l.b16 %v3747
    %v5168 = vunpack.c.h.b16 %v3747
    %v5169 = vunpack.c.l.b16 %v3748
    %v5170 = vunpack.c.l.b16 %v3749
    %v5171 = vunpack.c.h.b16 %v3749
    %v5172 = vunpack.c.l.b16 %v3750
    %v5173 = vunpack.c.h.b16 %v3750
    %v5174 = vunpack.c.l.b16 %v3751
    %v5175 = vunpack.c.h.b16 %v3751
    %v5176 = vunpack.c.l.b16 %v3752
    %v5177 = vunpack.c.l.b16 %v3753
    %v5178 = vunpack.c.h.b16 %v3753
    %v5179 = vunpack.c.l.b16 %v3754
    %v5180 = vunpack.c.h.b16 %v3754
    %v5181 = vunpack.c.l.b16 %v3755
    %v5182 = vunpack.c.h.b16 %v3755
    %v5183 = vunpack.c.l.b16 %v3756
    %v5184 = vunpack.c.l.b16 %v3757
    %v5185 = vunpack.c.h.b16 %v3757
    %v5186 = vunpack.c.l.b16 %v3758
    %v5187 = vunpack.c.h.b16 %v3758
    %v5188 = vunpack.c.l.b16 %v3759
    %v5189 = vunpack.c.h.b16 %v3759
    %v5190 = vunpack.c.l.b16 %v3760
    %v5191 = vunpack.c.l.b16 %v3761
    %v5192 = vunpack.c.h.b16 %v3761
    %v5193 = vunpack.c.l.b16 %v3762
    %v5194 = vunpack.c.h.b16 %v3762
    %v5195 = vunpack.c.l.b16 %v3763
    %v5196 = vunpack.c.h.b16 %v3763
    %v5197 = vunpack.c.l.b16 %v3764
    %v5198 = vunpack.c.l.b16 %v3765
    %v5199 = vunpack.c.h.b16 %v3765
    %v5200 = vunpack.c.l.b16 %v3766
    %v5201 = vunpack.c.h.b16 %v3766
    %v5202 = vunpack.c.l.b16 %v3767
    %v5203 = vunpack.c.h.b16 %v3767
    %v5204 = vunpack.c.l.b16 %v3768
    %v5205 = vunpack.c.l.b16 %v3769
    %v5206 = vunpack.c.h.b16 %v3769
    %v5207 = vunpack.c.l.b16 %v3770
    %v5208 = vunpack.c.h.b16 %v3770
    %v5209 = vunpack.c.l.b16 %v3771
    %v5210 = vunpack.c.h.b16 %v3771
    %v5211 = vunpack.c.l.b16 %v3772
    %v5212 = vunpack.c.l.b16 %v3773
    %v5213 = vunpack.c.h.b16 %v3773
    %v5214 = vunpack.c.l.b16 %v3774
    %v5215 = vunpack.c.h.b16 %v3774
    %v5216 = vunpack.c.l.b16 %v3775
    %v5217 = vunpack.c.h.b16 %v3775
    %v5218 = vunpack.c.l.b16 %v3776
    %v5219 = vunpack.c.l.b16 %v3777
    %v5220 = vunpack.c.h.b16 %v3777
    %v5221 = vunpack.c.l.b16 %v3778
    %v5222 = vunpack.c.h.b16 %v3778
    %v5223 = vunpack.c.l.b16 %v3779
    %v5224 = vunpack.c.h.b16 %v3779
    %v5225 = vunpack.c.l.b16 %v3780
    %v5226 = vpack.c.b16 %v4337, %v4330
    %v5227 = vpack.c.b16 %v4338, %v4331
    %v5228 = vpack.c.b16 %v4339, %v4332
    %v5229 = vpack.c.b16 %v4340, %v4333
    %v5230 = vpack.c.b16 %v4341, %v4334
    %v5231 = vpack.c.b16 %v4342, %v4335
    %v5232 = vpack.c.b16 %v4343, %v4336
    %v5233 = vpack.c.b16 %v4351, %v4344
    %v5234 = vpack.c.b16 %v4352, %v4345
    %v5235 = vpack.c.b16 %v4353, %v4346
    %v5236 = vpack.c.b16 %v4354, %v4347
    %v5237 = vpack.c.b16 %v4355, %v4348
    %v5238 = vpack.c.b16 %v4356, %v4349
    %v5239 = vpack.c.b16 %v4357, %v4350
    %v5240 = vpack.c.b16 %v4365, %v4358
    %v5241 = vpack.c.b16 %v4366, %v4359
    %v5242 = vpack.c.b16 %v4367, %v4360
    %v5243 = vpack.c.b16 %v4368, %v4361
    %v5244 = vpack.c.b16 %v4369, %v4362
    %v5245 = vpack.c.b16 %v4370, %v4363
    %v5246 = vpack.c.b16 %v4371, %v4364
    %v5247 = vpack.c.b16 %v4379, %v4372
    %v5248 = vpack.c.b16 %v4380, %v4373
    %v5249 = vpack.c.b16 %v4381, %v4374
    %v5250 = vpack.c.b16 %v4382, %v4375
    %v5251 = vpack.c.b16 %v4383, %v4376
    %v5252 = vpack.c.b16 %v4384, %v4377
    %v5253 = vpack.c.b16 %v4385, %v4378
    %v5254 = vpack.c.b16 %v4393, %v4386
    %v5255 = vpack.c.b16 %v4394, %v4387
    %v5256 = vpack.c.b16 %v4395, %v4388
    %v5257 = vpack.c.b16 %v4396, %v4389
    %v5258 = vpack.c.b16 %v4397, %v4390
    %v5259 = vpack.c.b16 %v4398, %v4391
    %v5260 = vpack.c.b16 %v4399, %v4392
    %v5261 = vpack.c.b16 %v4407, %v4400
    %v5262 = vpack.c.b16 %v4408, %v4401
    %v5263 = vpack.c.b16 %v4409, %v4402
    %v5264 = vpack.c.b16 %v4410, %v4403
    %v5265 = vpack.c.b16 %v4411, %v4404
    %v5266 = vpack.c.b16 %v4412, %v4405
    %v5267 = vpack.c.b16 %v4413, %v4406
    %v5268 = vpack.c.b16 %v4421, %v4414
    %v5269 = vpack.c.b16 %v4422, %v4415
    %v5270 = vpack.c.b16 %v4423, %v4416
    %v5271 = vpack.c.b16 %v4424, %v4417
    %v5272 = vpack.c.b16 %v4425, %v4418
    %v5273 = vpack.c.b16 %v4426, %v4419
    %v5274 = vpack.c.b16 %v4427, %v4420
    %v5275 = vpack.c.b16 %v4435, %v4428
    %v5276 = vpack.c.b16 %v4436, %v4429
    %v5277 = vpack.c.b16 %v4437, %v4430
    %v5278 = vpack.c.b16 %v4438, %v4431
    %v5279 = vpack.c.b16 %v4439, %v4432
    %v5280 = vpack.c.b16 %v4440, %v4433
    %v5281 = vpack.c.b16 %v4441, %v4434
    %v5282 = vpack.c.b16 %v4449, %v4442
    %v5283 = vpack.c.b16 %v4450, %v4443
    %v5284 = vpack.c.b16 %v4451, %v4444
    %v5285 = vpack.c.b16 %v4452, %v4445
    %v5286 = vpack.c.b16 %v4453, %v4446
    %v5287 = vpack.c.b16 %v4454, %v4447
    %v5288 = vpack.c.b16 %v4455, %v4448
    %v5289 = vpack.c.b16 %v4463, %v4456
    %v5290 = vpack.c.b16 %v4464, %v4457
    %v5291 = vpack.c.b16 %v4465, %v4458
    %v5292 = vpack.c.b16 %v4466, %v4459
    %v5293 = vpack.c.b16 %v4467, %v4460
    %v5294 = vpack.c.b16 %v4468, %v4461
    %v5295 = vpack.c.b16 %v4469, %v4462
    %v5296 = vpack.c.b16 %v4477, %v4470
    %v5297 = vpack.c.b16 %v4478, %v4471
    %v5298 = vpack.c.b16 %v4479, %v4472
    %v5299 = vpack.c.b16 %v4480, %v4473
    %v5300 = vpack.c.b16 %v4481, %v4474
    %v5301 = vpack.c.b16 %v4482, %v4475
    %v5302 = vpack.c.b16 %v4483, %v4476
    %v5303 = vpack.c.b16 %v4491, %v4484
    %v5304 = vpack.c.b16 %v4492, %v4485
    %v5305 = vpack.c.b16 %v4493, %v4486
    %v5306 = vpack.c.b16 %v4494, %v4487
    %v5307 = vpack.c.b16 %v4495, %v4488
    %v5308 = vpack.c.b16 %v4496, %v4489
    %v5309 = vpack.c.b16 %v4497, %v4490
    %v5310 = vpack.c.b16 %v4505, %v4498
    %v5311 = vpack.c.b16 %v4506, %v4499
    %v5312 = vpack.c.b16 %v4507, %v4500
    %v5313 = vpack.c.b16 %v4508, %v4501
    %v5314 = vpack.c.b16 %v4509, %v4502
    %v5315 = vpack.c.b16 %v4510, %v4503
    %v5316 = vpack.c.b16 %v4511, %v4504
    %v5317 = vpack.c.b16 %v4519, %v4512
    %v5318 = vpack.c.b16 %v4520, %v4513
    %v5319 = vpack.c.b16 %v4521, %v4514
    %v5320 = vpack.c.b16 %v4522, %v4515
    %v5321 = vpack.c.b16 %v4523, %v4516
    %v5322 = vpack.c.b16 %v4524, %v4517
    %v5323 = vpack.c.b16 %v4525, %v4518
    %v5324 = vpack.c.b16 %v4533, %v4526
    %v5325 = vpack.c.b16 %v4534, %v4527
    %v5326 = vpack.c.b16 %v4535, %v4528
    %v5327 = vpack.c.b16 %v4536, %v4529
    %v5328 = vpack.c.b16 %v4537, %v4530
    %v5329 = vpack.c.b16 %v4538, %v4531
    %v5330 = vpack.c.b16 %v4539, %v4532
    %v5331 = vpack.c.b16 %v4547, %v4540
    %v5332 = vpack.c.b16 %v4548, %v4541
    %v5333 = vpack.c.b16 %v4549, %v4542
    %v5334 = vpack.c.b16 %v4550, %v4543
    %v5335 = vpack.c.b16 %v4551, %v4544
    %v5336 = vpack.c.b16 %v4552, %v4545
    %v5337 = vpack.c.b16 %v4553, %v4546
    %v5338 = vpack.c.b16 %v4561, %v4554
    %v5339 = vpack.c.b16 %v4562, %v4555
    %v5340 = vpack.c.b16 %v4563, %v4556
    %v5341 = vpack.c.b16 %v4564, %v4557
    %v5342 = vpack.c.b16 %v4565, %v4558
    %v5343 = vpack.c.b16 %v4566, %v4559
    %v5344 = vpack.c.b16 %v4567, %v4560
    %v5345 = vpack.c.b16 %v4575, %v4568
    %v5346 = vpack.c.b16 %v4576, %v4569
    %v5347 = vpack.c.b16 %v4577, %v4570
    %v5348 = vpack.c.b16 %v4578, %v4571
    %v5349 = vpack.c.b16 %v4579, %v4572
    %v5350 = vpack.c.b16 %v4580, %v4573
    %v5351 = vpack.c.b16 %v4581, %v4574
    %v5352 = vpack.c.b16 %v4589, %v4582
    %v5353 = vpack.c.b16 %v4590, %v4583
    %v5354 = vpack.c.b16 %v4591, %v4584
    %v5355 = vpack.c.b16 %v4592, %v4585
    %v5356 = vpack.c.b16 %v4593, %v4586
    %v5357 = vpack.c.b16 %v4594, %v4587
    %v5358 = vpack.c.b16 %v4595, %v4588
    %v5359 = vpack.c.b16 %v4603, %v4596
    %v5360 = vpack.c.b16 %v4604, %v4597
    %v5361 = vpack.c.b16 %v4605, %v4598
    %v5362 = vpack.c.b16 %v4606, %v4599
    %v5363 = vpack.c.b16 %v4607, %v4600
    %v5364 = vpack.c.b16 %v4608, %v4601
    %v5365 = vpack.c.b16 %v4609, %v4602
    %v5366 = vpack.c.b16 %v4617, %v4610
    %v5367 = vpack.c.b16 %v4618, %v4611
    %v5368 = vpack.c.b16 %v4619, %v4612
    %v5369 = vpack.c.b16 %v4620, %v4613
    %v5370 = vpack.c.b16 %v4621, %v4614
    %v5371 = vpack.c.b16 %v4622, %v4615
    %v5372 = vpack.c.b16 %v4623, %v4616
    %v5373 = vpack.c.b16 %v4631, %v4624
    %v5374 = vpack.c.b16 %v4632, %v4625
    %v5375 = vpack.c.b16 %v4633, %v4626
    %v5376 = vpack.c.b16 %v4634, %v4627
    %v5377 = vpack.c.b16 %v4635, %v4628
    %v5378 = vpack.c.b16 %v4636, %v4629
    %v5379 = vpack.c.b16 %v4637, %v4630
    %v5380 = vpack.c.b16 %v4645, %v4638
    %v5381 = vpack.c.b16 %v4646, %v4639
    %v5382 = vpack.c.b16 %v4647, %v4640
    %v5383 = vpack.c.b16 %v4648, %v4641
    %v5384 = vpack.c.b16 %v4649, %v4642
    %v5385 = vpack.c.b16 %v4650, %v4643
    %v5386 = vpack.c.b16 %v4651, %v4644
    %v5387 = vpack.c.b16 %v4659, %v4652
    %v5388 = vpack.c.b16 %v4660, %v4653
    %v5389 = vpack.c.b16 %v4661, %v4654
    %v5390 = vpack.c.b16 %v4662, %v4655
    %v5391 = vpack.c.b16 %v4663, %v4656
    %v5392 = vpack.c.b16 %v4664, %v4657
    %v5393 = vpack.c.b16 %v4665, %v4658
    %v5394 = vpack.c.b16 %v4673, %v4666
    %v5395 = vpack.c.b16 %v4674, %v4667
    %v5396 = vpack.c.b16 %v4675, %v4668
    %v5397 = vpack.c.b16 %v4676, %v4669
    %v5398 = vpack.c.b16 %v4677, %v4670
    %v5399 = vpack.c.b16 %v4678, %v4671
    %v5400 = vpack.c.b16 %v4679, %v4672
    %v5401 = vpack.c.b16 %v4687, %v4680
    %v5402 = vpack.c.b16 %v4688, %v4681
    %v5403 = vpack.c.b16 %v4689, %v4682
    %v5404 = vpack.c.b16 %v4690, %v4683
    %v5405 = vpack.c.b16 %v4691, %v4684
    %v5406 = vpack.c.b16 %v4692, %v4685
    %v5407 = vpack.c.b16 %v4693, %v4686
    %v5408 = vpack.c.b16 %v4701, %v4694
    %v5409 = vpack.c.b16 %v4702, %v4695
    %v5410 = vpack.c.b16 %v4703, %v4696
    %v5411 = vpack.c.b16 %v4704, %v4697
    %v5412 = vpack.c.b16 %v4705, %v4698
    %v5413 = vpack.c.b16 %v4706, %v4699
    %v5414 = vpack.c.b16 %v4707, %v4700
    %v5415 = vpack.c.b16 %v4715, %v4708
    %v5416 = vpack.c.b16 %v4716, %v4709
    %v5417 = vpack.c.b16 %v4717, %v4710
    %v5418 = vpack.c.b16 %v4718, %v4711
    %v5419 = vpack.c.b16 %v4719, %v4712
    %v5420 = vpack.c.b16 %v4720, %v4713
    %v5421 = vpack.c.b16 %v4721, %v4714
    %v5422 = vpack.c.b16 %v4729, %v4722
    %v5423 = vpack.c.b16 %v4730, %v4723
    %v5424 = vpack.c.b16 %v4731, %v4724
    %v5425 = vpack.c.b16 %v4732, %v4725
    %v5426 = vpack.c.b16 %v4733, %v4726
    %v5427 = vpack.c.b16 %v4734, %v4727
    %v5428 = vpack.c.b16 %v4735, %v4728
    %v5429 = vpack.c.b16 %v4743, %v4736
    %v5430 = vpack.c.b16 %v4744, %v4737
    %v5431 = vpack.c.b16 %v4745, %v4738
    %v5432 = vpack.c.b16 %v4746, %v4739
    %v5433 = vpack.c.b16 %v4747, %v4740
    %v5434 = vpack.c.b16 %v4748, %v4741
    %v5435 = vpack.c.b16 %v4749, %v4742
    %v5436 = vpack.c.b16 %v4757, %v4750
    %v5437 = vpack.c.b16 %v4758, %v4751
    %v5438 = vpack.c.b16 %v4759, %v4752
    %v5439 = vpack.c.b16 %v4760, %v4753
    %v5440 = vpack.c.b16 %v4761, %v4754
    %v5441 = vpack.c.b16 %v4762, %v4755
    %v5442 = vpack.c.b16 %v4763, %v4756
    %v5443 = vpack.c.b16 %v4771, %v4764
    %v5444 = vpack.c.b16 %v4772, %v4765
    %v5445 = vpack.c.b16 %v4773, %v4766
    %v5446 = vpack.c.b16 %v4774, %v4767
    %v5447 = vpack.c.b16 %v4775, %v4768
    %v5448 = vpack.c.b16 %v4776, %v4769
    %v5449 = vpack.c.b16 %v4777, %v4770
    %v5450 = vpack.c.b16 %v4785, %v4778
    %v5451 = vpack.c.b16 %v4786, %v4779
    %v5452 = vpack.c.b16 %v4787, %v4780
    %v5453 = vpack.c.b16 %v4788, %v4781
    %v5454 = vpack.c.b16 %v4789, %v4782
    %v5455 = vpack.c.b16 %v4790, %v4783
    %v5456 = vpack.c.b16 %v4791, %v4784
    %v5457 = vpack.c.b16 %v4799, %v4792
    %v5458 = vpack.c.b16 %v4800, %v4793
    %v5459 = vpack.c.b16 %v4801, %v4794
    %v5460 = vpack.c.b16 %v4802, %v4795
    %v5461 = vpack.c.b16 %v4803, %v4796
    %v5462 = vpack.c.b16 %v4804, %v4797
    %v5463 = vpack.c.b16 %v4805, %v4798
    %v5464 = vpack.c.b16 %v4813, %v4806
    %v5465 = vpack.c.b16 %v4814, %v4807
    %v5466 = vpack.c.b16 %v4815, %v4808
    %v5467 = vpack.c.b16 %v4816, %v4809
    %v5468 = vpack.c.b16 %v4817, %v4810
    %v5469 = vpack.c.b16 %v4818, %v4811
    %v5470 = vpack.c.b16 %v4819, %v4812
    %v5471 = vpack.c.b16 %v4827, %v4820
    %v5472 = vpack.c.b16 %v4828, %v4821
    %v5473 = vpack.c.b16 %v4829, %v4822
    %v5474 = vpack.c.b16 %v4830, %v4823
    %v5475 = vpack.c.b16 %v4831, %v4824
    %v5476 = vpack.c.b16 %v4832, %v4825
    %v5477 = vpack.c.b16 %v4833, %v4826
    %v5478 = vpack.c.b16 %v4841, %v4834
    %v5479 = vpack.c.b16 %v4842, %v4835
    %v5480 = vpack.c.b16 %v4843, %v4836
    %v5481 = vpack.c.b16 %v4844, %v4837
    %v5482 = vpack.c.b16 %v4845, %v4838
    %v5483 = vpack.c.b16 %v4846, %v4839
    %v5484 = vpack.c.b16 %v4847, %v4840
    %v5485 = vpack.c.b16 %v4855, %v4848
    %v5486 = vpack.c.b16 %v4856, %v4849
    %v5487 = vpack.c.b16 %v4857, %v4850
    %v5488 = vpack.c.b16 %v4858, %v4851
    %v5489 = vpack.c.b16 %v4859, %v4852
    %v5490 = vpack.c.b16 %v4860, %v4853
    %v5491 = vpack.c.b16 %v4861, %v4854
    %v5492 = vpack.c.b16 %v4869, %v4862
    %v5493 = vpack.c.b16 %v4870, %v4863
    %v5494 = vpack.c.b16 %v4871, %v4864
    %v5495 = vpack.c.b16 %v4872, %v4865
    %v5496 = vpack.c.b16 %v4873, %v4866
    %v5497 = vpack.c.b16 %v4874, %v4867
    %v5498 = vpack.c.b16 %v4875, %v4868
    %v5499 = vpack.c.b16 %v4883, %v4876
    %v5500 = vpack.c.b16 %v4884, %v4877
    %v5501 = vpack.c.b16 %v4885, %v4878
    %v5502 = vpack.c.b16 %v4886, %v4879
    %v5503 = vpack.c.b16 %v4887, %v4880
    %v5504 = vpack.c.b16 %v4888, %v4881
    %v5505 = vpack.c.b16 %v4889, %v4882
    %v5506 = vpack.c.b16 %v4897, %v4890
    %v5507 = vpack.c.b16 %v4898, %v4891
    %v5508 = vpack.c.b16 %v4899, %v4892
    %v5509 = vpack.c.b16 %v4900, %v4893
    %v5510 = vpack.c.b16 %v4901, %v4894
    %v5511 = vpack.c.b16 %v4902, %v4895
    %v5512 = vpack.c.b16 %v4903, %v4896
    %v5513 = vpack.c.b16 %v4911, %v4904
    %v5514 = vpack.c.b16 %v4912, %v4905
    %v5515 = vpack.c.b16 %v4913, %v4906
    %v5516 = vpack.c.b16 %v4914, %v4907
    %v5517 = vpack.c.b16 %v4915, %v4908
    %v5518 = vpack.c.b16 %v4916, %v4909
    %v5519 = vpack.c.b16 %v4917, %v4910
    %v5520 = vpack.c.b16 %v4925, %v4918
    %v5521 = vpack.c.b16 %v4926, %v4919
    %v5522 = vpack.c.b16 %v4927, %v4920
    %v5523 = vpack.c.b16 %v4928, %v4921
    %v5524 = vpack.c.b16 %v4929, %v4922
    %v5525 = vpack.c.b16 %v4930, %v4923
    %v5526 = vpack.c.b16 %v4931, %v4924
    %v5527 = vpack.c.b16 %v4939, %v4932
    %v5528 = vpack.c.b16 %v4940, %v4933
    %v5529 = vpack.c.b16 %v4941, %v4934
    %v5530 = vpack.c.b16 %v4942, %v4935
    %v5531 = vpack.c.b16 %v4943, %v4936
    %v5532 = vpack.c.b16 %v4944, %v4937
    %v5533 = vpack.c.b16 %v4945, %v4938
    %v5534 = vpack.c.b16 %v4953, %v4946
    %v5535 = vpack.c.b16 %v4954, %v4947
    %v5536 = vpack.c.b16 %v4955, %v4948
    %v5537 = vpack.c.b16 %v4956, %v4949
    %v5538 = vpack.c.b16 %v4957, %v4950
    %v5539 = vpack.c.b16 %v4958, %v4951
    %v5540 = vpack.c.b16 %v4959, %v4952
    %v5541 = vpack.c.b16 %v4967, %v4960
    %v5542 = vpack.c.b16 %v4968, %v4961
    %v5543 = vpack.c.b16 %v4969, %v4962
    %v5544 = vpack.c.b16 %v4970, %v4963
    %v5545 = vpack.c.b16 %v4971, %v4964
    %v5546 = vpack.c.b16 %v4972, %v4965
    %v5547 = vpack.c.b16 %v4973, %v4966
    %v5548 = vpack.c.b16 %v4981, %v4974
    %v5549 = vpack.c.b16 %v4982, %v4975
    %v5550 = vpack.c.b16 %v4983, %v4976
    %v5551 = vpack.c.b16 %v4984, %v4977
    %v5552 = vpack.c.b16 %v4985, %v4978
    %v5553 = vpack.c.b16 %v4986, %v4979
    %v5554 = vpack.c.b16 %v4987, %v4980
    %v5555 = vpack.c.b16 %v4995, %v4988
    %v5556 = vpack.c.b16 %v4996, %v4989
    %v5557 = vpack.c.b16 %v4997, %v4990
    %v5558 = vpack.c.b16 %v4998, %v4991
    %v5559 = vpack.c.b16 %v4999, %v4992
    %v5560 = vpack.c.b16 %v5000, %v4993
    %v5561 = vpack.c.b16 %v5001, %v4994
    %v5562 = vpack.c.b16 %v5009, %v5002
    %v5563 = vpack.c.b16 %v5010, %v5003
    %v5564 = vpack.c.b16 %v5011, %v5004
    %v5565 = vpack.c.b16 %v5012, %v5005
    %v5566 = vpack.c.b16 %v5013, %v5006
    %v5567 = vpack.c.b16 %v5014, %v5007
    %v5568 = vpack.c.b16 %v5015, %v5008
    %v5569 = vpack.c.b16 %v5023, %v5016
    %v5570 = vpack.c.b16 %v5024, %v5017
    %v5571 = vpack.c.b16 %v5025, %v5018
    %v5572 = vpack.c.b16 %v5026, %v5019
    %v5573 = vpack.c.b16 %v5027, %v5020
    %v5574 = vpack.c.b16 %v5028, %v5021
    %v5575 = vpack.c.b16 %v5029, %v5022
    %v5576 = vpack.c.b16 %v5037, %v5030
    %v5577 = vpack.c.b16 %v5038, %v5031
    %v5578 = vpack.c.b16 %v5039, %v5032
    %v5579 = vpack.c.b16 %v5040, %v5033
    %v5580 = vpack.c.b16 %v5041, %v5034
    %v5581 = vpack.c.b16 %v5042, %v5035
    %v5582 = vpack.c.b16 %v5043, %v5036
    %v5583 = vpack.c.b16 %v5051, %v5044
    %v5584 = vpack.c.b16 %v5052, %v5045
    %v5585 = vpack.c.b16 %v5053, %v5046
    %v5586 = vpack.c.b16 %v5054, %v5047
    %v5587 = vpack.c.b16 %v5055, %v5048
    %v5588 = vpack.c.b16 %v5056, %v5049
    %v5589 = vpack.c.b16 %v5057, %v5050
    %v5590 = vpack.c.b16 %v5065, %v5058
    %v5591 = vpack.c.b16 %v5066, %v5059
    %v5592 = vpack.c.b16 %v5067, %v5060
    %v5593 = vpack.c.b16 %v5068, %v5061
    %v5594 = vpack.c.b16 %v5069, %v5062
    %v5595 = vpack.c.b16 %v5070, %v5063
    %v5596 = vpack.c.b16 %v5071, %v5064
    %v5597 = vpack.c.b16 %v5079, %v5072
    %v5598 = vpack.c.b16 %v5080, %v5073
    %v5599 = vpack.c.b16 %v5081, %v5074
    %v5600 = vpack.c.b16 %v5082, %v5075
    %v5601 = vpack.c.b16 %v5083, %v5076
    %v5602 = vpack.c.b16 %v5084, %v5077
    %v5603 = vpack.c.b16 %v5085, %v5078
    %v5604 = vpack.c.b16 %v5093, %v5086
    %v5605 = vpack.c.b16 %v5094, %v5087
    %v5606 = vpack.c.b16 %v5095, %v5088
    %v5607 = vpack.c.b16 %v5096, %v5089
    %v5608 = vpack.c.b16 %v5097, %v5090
    %v5609 = vpack.c.b16 %v5098, %v5091
    %v5610 = vpack.c.b16 %v5099, %v5092
    %v5611 = vpack.c.b16 %v5107, %v5100
    %v5612 = vpack.c.b16 %v5108, %v5101
    %v5613 = vpack.c.b16 %v5109, %v5102
    %v5614 = vpack.c.b16 %v5110, %v5103
    %v5615 = vpack.c.b16 %v5111, %v5104
    %v5616 = vpack.c.b16 %v5112, %v5105
    %v5617 = vpack.c.b16 %v5113, %v5106
    %v5618 = vpack.c.b16 %v5121, %v5114
    %v5619 = vpack.c.b16 %v5122, %v5115
    %v5620 = vpack.c.b16 %v5123, %v5116
    %v5621 = vpack.c.b16 %v5124, %v5117
    %v5622 = vpack.c.b16 %v5125, %v5118
    %v5623 = vpack.c.b16 %v5126, %v5119
    %v5624 = vpack.c.b16 %v5127, %v5120
    %v5625 = vpack.c.b16 %v5135, %v5128
    %v5626 = vpack.c.b16 %v5136, %v5129
    %v5627 = vpack.c.b16 %v5137, %v5130
    %v5628 = vpack.c.b16 %v5138, %v5131
    %v5629 = vpack.c.b16 %v5139, %v5132
    %v5630 = vpack.c.b16 %v5140, %v5133
    %v5631 = vpack.c.b16 %v5141, %v5134
    %v5632 = vpack.c.b16 %v5149, %v5142
    %v5633 = vpack.c.b16 %v5150, %v5143
    %v5634 = vpack.c.b16 %v5151, %v5144
    %v5635 = vpack.c.b16 %v5152, %v5145
    %v5636 = vpack.c.b16 %v5153, %v5146
    %v5637 = vpack.c.b16 %v5154, %v5147
    %v5638 = vpack.c.b16 %v5155, %v5148
    %v5639 = vpack.c.b16 %v5163, %v5156
    %v5640 = vpack.c.b16 %v5164, %v5157
    %v5641 = vpack.c.b16 %v5165, %v5158
    %v5642 = vpack.c.b16 %v5166, %v5159
    %v5643 = vpack.c.b16 %v5167, %v5160
    %v5644 = vpack.c.b16 %v5168, %v5161
    %v5645 = vpack.c.b16 %v5169, %v5162
    %v5646 = vpack.c.b16 %v5177, %v5170
    %v5647 = vpack.c.b16 %v5178, %v5171
    %v5648 = vpack.c.b16 %v5179, %v5172
    %v5649 = vpack.c.b16 %v5180, %v5173
    %v5650 = vpack.c.b16 %v5181, %v5174
    %v5651 = vpack.c.b16 %v5182, %v5175
    %v5652 = vpack.c.b16 %v5183, %v5176
    %v5653 = vpack.c.b16 %v5191, %v5184
    %v5654 = vpack.c.b16 %v5192, %v5185
    %v5655 = vpack.c.b16 %v5193, %v5186
    %v5656 = vpack.c.b16 %v5194, %v5187
    %v5657 = vpack.c.b16 %v5195, %v5188
    %v5658 = vpack.c.b16 %v5196, %v5189
    %v5659 = vpack.c.b16 %v5197, %v5190
    %v5660 = vpack.c.b16 %v5205, %v5198
    %v5661 = vpack.c.b16 %v5206, %v5199
    %v5662 = vpack.c.b16 %v5207, %v5200
    %v5663 = vpack.c.b16 %v5208, %v5201
    %v5664 = vpack.c.b16 %v5209, %v5202
    %v5665 = vpack.c.b16 %v5210, %v5203
    %v5666 = vpack.c.b16 %v5211, %v5204
    %v5667 = vpack.c.b16 %v5219, %v5212
    %v5668 = vpack.c.b16 %v5220, %v5213
    %v5669 = vpack.c.b16 %v5221, %v5214
    %v5670 = vpack.c.b16 %v5222, %v5215
    %v5671 = vpack.c.b16 %v5223, %v5216
    %v5672 = vpack.c.b16 %v5224, %v5217
    %v5673 = vpack.c.b16 %v5225, %v5218
    %6122 = vmatprep.subr.bf16.mxu0 %v5227
    %6123 = vmatpush1.bf16.msra.mxu0 %v5226
    %6124 = vmatprep.subr.bf16.mxu0 %v5234
    %6125 = vmatpush1.bf16.msra.mxu0 %v5233
    %6126 = vmatprep.subr.bf16.mxu0 %v5241
    %6127 = vmatpush1.bf16.msra.mxu0 %v5240
    %6128 = vmatprep.subr.bf16.mxu0 %v5248
    %6129 = vmatpush1.bf16.msra.mxu0 %v5247
    %6130 = vmatprep.subr.bf16.mxu0 %v5255
    %6131 = vmatpush1.bf16.msra.mxu0 %v5254
    %6132 = vmatprep.subr.bf16.mxu0 %v5262
    %6133 = vmatpush1.bf16.msra.mxu0 %v5261
    %6134 = vmatprep.subr.bf16.mxu0 %v5269
    %6135 = vmatpush1.bf16.msra.mxu0 %v5268
    %6136 = vmatprep.subr.bf16.mxu0 %v5276
    %6137 = vmatpush1.bf16.msra.mxu0 %v5275
    %6138 = vmatprep.subr.bf16.mxu0 %v5283
    %6139 = vmatpush1.bf16.msra.mxu0 %v5282
    %6140 = vmatprep.subr.bf16.mxu0 %v5290
    %6141 = vmatpush1.bf16.msra.mxu0 %v5289
    %6142 = vmatprep.subr.bf16.mxu0 %v5297
    %6143 = vmatpush1.bf16.msra.mxu0 %v5296
    %6144 = vmatprep.subr.bf16.mxu0 %v5304
    %6145 = vmatpush1.bf16.msra.mxu0 %v5303
    %6146 = vmatprep.subr.bf16.mxu0 %v5311
    %6147 = vmatpush1.bf16.msra.mxu0 %v5310
    %6148 = vmatprep.subr.bf16.mxu0 %v5318
    %6149 = vmatpush1.bf16.msra.mxu0 %v5317
    %6150 = vmatprep.subr.bf16.mxu0 %v5325
    %6151 = vmatpush1.bf16.msra.mxu0 %v5324
    %6152 = vmatprep.subr.bf16.mxu0 %v5332
    %6153 = vmatpush1.bf16.msra.mxu0 %v5331
    %6154 = vmatprep.mubr.bf16.mxu0 %v3262
    %6155 = vmatmul.mubr.bf16.gmra.mrb[0].mxu0 %v3261
    %v6156 = vpop.f32.mrb[0].mxu0
    %v6157 = vadd.f32 %v3786, %v6156
    %v6158 = vpop.f32.mrb[0].mxu0
    %v6159 = vadd.f32 %v3790, %v6158
    %v6160 = vpop.f32.mrb[0].mxu0
    %v6161 = vpop.f32.mrb[0].mxu0
    %6162 = vdwg.mxu0
    %6163 = vmatprep.subr.bf16.mxu0 %v5339
    %6164 = vmatpush1.bf16.msra.mxu0 %v5338
    %6165 = vmatprep.subr.bf16.mxu0 %v5346
    %6166 = vmatpush1.bf16.msra.mxu0 %v5345
    %6167 = vmatprep.subr.bf16.mxu0 %v5353
    %6168 = vmatpush1.bf16.msra.mxu0 %v5352
    %6169 = vmatprep.subr.bf16.mxu0 %v5360
    %6170 = vmatpush1.bf16.msra.mxu0 %v5359
    %6171 = vmatprep.subr.bf16.mxu0 %v5367
    %6172 = vmatpush1.bf16.msra.mxu0 %v5366
    %6173 = vmatprep.subr.bf16.mxu0 %v5374
    %6174 = vmatpush1.bf16.msra.mxu0 %v5373
    %6175 = vmatprep.subr.bf16.mxu0 %v5381
    %6176 = vmatpush1.bf16.msra.mxu0 %v5380
    %6177 = vmatprep.subr.bf16.mxu0 %v5388
    %6178 = vmatpush1.bf16.msra.mxu0 %v5387
    %6179 = vmatprep.subr.bf16.mxu0 %v5395
    %6180 = vmatpush1.bf16.msra.mxu0 %v5394
    %6181 = vmatprep.subr.bf16.mxu0 %v5402
    %6182 = vmatpush1.bf16.msra.mxu0 %v5401
    %6183 = vmatprep.subr.bf16.mxu0 %v5409
    %6184 = vmatpush1.bf16.msra.mxu0 %v5408
    %6185 = vmatprep.subr.bf16.mxu0 %v5416
    %6186 = vmatpush1.bf16.msra.mxu0 %v5415
    %6187 = vmatprep.subr.bf16.mxu0 %v5423
    %6188 = vmatpush1.bf16.msra.mxu0 %v5422
    %6189 = vmatprep.subr.bf16.mxu0 %v5430
    %6190 = vmatpush1.bf16.msra.mxu0 %v5429
    %6191 = vmatprep.subr.bf16.mxu0 %v5437
    %6192 = vmatpush1.bf16.msra.mxu0 %v5436
    %6193 = vmatprep.subr.bf16.mxu0 %v5444
    %6194 = vmatpush1.bf16.msra.mxu0 %v5443
    %6195 = vmatprep.mubr.bf16.mxu0 %v3264
    %6196 = vmatmul.mubr.bf16.gmra.mrb[0].mxu0 %v3263
    %v6197 = vpop.f32.mrb[0].mxu0
    %v6198 = vadd.f32 %v6157, %v6197
    %v6199 = vpop.f32.mrb[0].mxu0
    %v6200 = vadd.f32 %v6159, %v6199
    %v6201 = vpop.f32.mrb[0].mxu0
    %v6202 = vpop.f32.mrb[0].mxu0
    %6203 = vdwg.mxu0
    %6204 = vmatprep.subr.bf16.mxu0 %v5451
    %6205 = vmatpush1.bf16.msra.mxu0 %v5450
    %6206 = vmatprep.subr.bf16.mxu0 %v5458
    %6207 = vmatpush1.bf16.msra.mxu0 %v5457
    %6208 = vmatprep.subr.bf16.mxu0 %v5465
    %6209 = vmatpush1.bf16.msra.mxu0 %v5464
    %6210 = vmatprep.subr.bf16.mxu0 %v5472
    %6211 = vmatpush1.bf16.msra.mxu0 %v5471
    %6212 = vmatprep.subr.bf16.mxu0 %v5479
    %6213 = vmatpush1.bf16.msra.mxu0 %v5478
    %6214 = vmatprep.subr.bf16.mxu0 %v5486
    %6215 = vmatpush1.bf16.msra.mxu0 %v5485
    %6216 = vmatprep.subr.bf16.mxu0 %v5493
    %6217 = vmatpush1.bf16.msra.mxu0 %v5492
    %6218 = vmatprep.subr.bf16.mxu0 %v5500
    %6219 = vmatpush1.bf16.msra.mxu0 %v5499
    %6220 = vmatprep.subr.bf16.mxu0 %v5507
    %6221 = vmatpush1.bf16.msra.mxu0 %v5506
    %6222 = vmatprep.subr.bf16.mxu0 %v5514
    %6223 = vmatpush1.bf16.msra.mxu0 %v5513
    %6224 = vmatprep.subr.bf16.mxu0 %v5521
    %6225 = vmatpush1.bf16.msra.mxu0 %v5520
    %6226 = vmatprep.subr.bf16.mxu0 %v5528
    %6227 = vmatpush1.bf16.msra.mxu0 %v5527
    %6228 = vmatprep.subr.bf16.mxu0 %v5535
    %6229 = vmatpush1.bf16.msra.mxu0 %v5534
    %6230 = vmatprep.subr.bf16.mxu0 %v5542
    %6231 = vmatpush1.bf16.msra.mxu0 %v5541
    %6232 = vmatprep.subr.bf16.mxu0 %v5549
    %6233 = vmatpush1.bf16.msra.mxu0 %v5548
    %6234 = vmatprep.subr.bf16.mxu0 %v5556
    %6235 = vmatpush1.bf16.msra.mxu0 %v5555
    %6236 = vmatprep.mubr.bf16.mxu0 %v3266
    %6237 = vmatmul.mubr.bf16.gmra.mrb[0].mxu0 %v3265
    %v6238 = vpop.f32.mrb[0].mxu0
    %v6239 = vadd.f32 %v6198, %v6238
    %v6240 = vpop.f32.mrb[0].mxu0
    %v6241 = vadd.f32 %v6200, %v6240
    %v6242 = vpop.f32.mrb[0].mxu0
    %v6243 = vpop.f32.mrb[0].mxu0
    %6244 = vdwg.mxu0
    %6245 = vmatprep.subr.bf16.mxu0 %v5563
    %6246 = vmatpush1.bf16.msra.mxu0 %v5562
    %6247 = vmatprep.subr.bf16.mxu0 %v5570
    %6248 = vmatpush1.bf16.msra.mxu0 %v5569
    %6249 = vmatprep.subr.bf16.mxu0 %v5577
    %6250 = vmatpush1.bf16.msra.mxu0 %v5576
    %6251 = vmatprep.subr.bf16.mxu0 %v5584
    %6252 = vmatpush1.bf16.msra.mxu0 %v5583
    %6253 = vmatprep.subr.bf16.mxu0 %v5591
    %6254 = vmatpush1.bf16.msra.mxu0 %v5590
    %6255 = vmatprep.subr.bf16.mxu0 %v5598
    %6256 = vmatpush1.bf16.msra.mxu0 %v5597
    %6257 = vmatprep.subr.bf16.mxu0 %v5605
    %6258 = vmatpush1.bf16.msra.mxu0 %v5604
    %6259 = vmatprep.subr.bf16.mxu0 %v5612
    %6260 = vmatpush1.bf16.msra.mxu0 %v5611
    %6261 = vmatprep.subr.bf16.mxu0 %v5619
    %6262 = vmatpush1.bf16.msra.mxu0 %v5618
    %6263 = vmatprep.subr.bf16.mxu0 %v5626
    %6264 = vmatpush1.bf16.msra.mxu0 %v5625
    %6265 = vmatprep.subr.bf16.mxu0 %v5633
    %6266 = vmatpush1.bf16.msra.mxu0 %v5632
    %6267 = vmatprep.subr.bf16.mxu0 %v5640
    %6268 = vmatpush1.bf16.msra.mxu0 %v5639
    %6269 = vmatprep.subr.bf16.mxu0 %v5647
    %6270 = vmatpush1.bf16.msra.mxu0 %v5646
    %6271 = vmatprep.subr.bf16.mxu0 %v5654
    %6272 = vmatpush1.bf16.msra.mxu0 %v5653
    %6273 = vmatprep.subr.bf16.mxu0 %v5661
    %6274 = vmatpush1.bf16.msra.mxu0 %v5660
    %6275 = vmatprep.subr.bf16.mxu0 %v5668
    %6276 = vmatpush1.bf16.msra.mxu0 %v5667
    %6277 = vmatprep.mubr.bf16.mxu0 %v3268
    %6278 = vmatmul.mubr.bf16.gmra.mrb[0].mxu0 %v3267
    %v6279 = vpop.f32.mrb[0].mxu0
    %v6280 = vadd.f32 %v6239, %v6279
    %v6281 = vpop.f32.mrb[0].mxu0
    %v6282 = vadd.f32 %v6241, %v6281
    %v6283 = vpop.f32.mrb[0].mxu0
    %v6284 = vpop.f32.mrb[0].mxu0
    %6285 = vdwg.mxu0
    %6286 = vmatprep.subr.bf16.mxu0 %v5229
    %6287 = vmatpush1.bf16.msra.mxu0 %v5228
    %6288 = vmatprep.subr.bf16.mxu0 %v5236
    %6289 = vmatpush1.bf16.msra.mxu0 %v5235
    %6290 = vmatprep.subr.bf16.mxu0 %v5243
    %6291 = vmatpush1.bf16.msra.mxu0 %v5242
    %6292 = vmatprep.subr.bf16.mxu0 %v5250
    %6293 = vmatpush1.bf16.msra.mxu0 %v5249
    %6294 = vmatprep.subr.bf16.mxu0 %v5257
    %6295 = vmatpush1.bf16.msra.mxu0 %v5256
    %6296 = vmatprep.subr.bf16.mxu0 %v5264
    %6297 = vmatpush1.bf16.msra.mxu0 %v5263
    %6298 = vmatprep.subr.bf16.mxu0 %v5271
    %6299 = vmatpush1.bf16.msra.mxu0 %v5270
    %6300 = vmatprep.subr.bf16.mxu0 %v5278
    %6301 = vmatpush1.bf16.msra.mxu0 %v5277
    %6302 = vmatprep.subr.bf16.mxu0 %v5285
    %6303 = vmatpush1.bf16.msra.mxu0 %v5284
    %6304 = vmatprep.subr.bf16.mxu0 %v5292
    %6305 = vmatpush1.bf16.msra.mxu0 %v5291
    %6306 = vmatprep.subr.bf16.mxu0 %v5299
    %6307 = vmatpush1.bf16.msra.mxu0 %v5298
    %6308 = vmatprep.subr.bf16.mxu0 %v5306
    %6309 = vmatpush1.bf16.msra.mxu0 %v5305
    %6310 = vmatprep.subr.bf16.mxu0 %v5313
    %6311 = vmatpush1.bf16.msra.mxu0 %v5312
    %6312 = vmatprep.subr.bf16.mxu0 %v5320
    %6313 = vmatpush1.bf16.msra.mxu0 %v5319
    %6314 = vmatprep.subr.bf16.mxu0 %v5327
    %6315 = vmatpush1.bf16.msra.mxu0 %v5326
    %6316 = vmatprep.subr.bf16.mxu0 %v5334
    %6317 = vmatpush1.bf16.msra.mxu0 %v5333
    %6318 = vmatprep.mubr.bf16.mxu0 %v3262
    %6319 = vmatmul.mubr.bf16.gmra.mrb[0].mxu0 %v3261
    %v6320 = vpop.f32.mrb[0].mxu0
    %v6321 = vadd.f32 %v3794, %v6320
    %v6322 = vpop.f32.mrb[0].mxu0
    %v6323 = vadd.f32 %v3798, %v6322
    %v6324 = vpop.f32.mrb[0].mxu0
    %v6325 = vpop.f32.mrb[0].mxu0
    %6326 = vdwg.mxu0
    %6327 = vmatprep.subr.bf16.mxu0 %v5341
    %6328 = vmatpush1.bf16.msra.mxu0 %v5340
    %6329 = vmatprep.subr.bf16.mxu0 %v5348
    %6330 = vmatpush1.bf16.msra.mxu0 %v5347
    %6331 = vmatprep.subr.bf16.mxu0 %v5355
    %6332 = vmatpush1.bf16.msra.mxu0 %v5354
    %6333 = vmatprep.subr.bf16.mxu0 %v5362
    %6334 = vmatpush1.bf16.msra.mxu0 %v5361
    %6335 = vmatprep.subr.bf16.mxu0 %v5369
    %6336 = vmatpush1.bf16.msra.mxu0 %v5368
    %6337 = vmatprep.subr.bf16.mxu0 %v5376
    %6338 = vmatpush1.bf16.msra.mxu0 %v5375
    %6339 = vmatprep.subr.bf16.mxu0 %v5383
    %6340 = vmatpush1.bf16.msra.mxu0 %v5382
    %6341 = vmatprep.subr.bf16.mxu0 %v5390
    %6342 = vmatpush1.bf16.msra.mxu0 %v5389
    %6343 = vmatprep.subr.bf16.mxu0 %v5397
    %6344 = vmatpush1.bf16.msra.mxu0 %v5396
    %6345 = vmatprep.subr.bf16.mxu0 %v5404
    %6346 = vmatpush1.bf16.msra.mxu0 %v5403
    %6347 = vmatprep.subr.bf16.mxu0 %v5411
    %6348 = vmatpush1.bf16.msra.mxu0 %v5410
    %6349 = vmatprep.subr.bf16.mxu0 %v5418
    %6350 = vmatpush1.bf16.msra.mxu0 %v5417
    %6351 = vmatprep.subr.bf16.mxu0 %v5425
    %6352 = vmatpush1.bf16.msra.mxu0 %v5424
    %6353 = vmatprep.subr.bf16.mxu0 %v5432
    %6354 = vmatpush1.bf16.msra.mxu0 %v5431
    %6355 = vmatprep.subr.bf16.mxu0 %v5439
    %6356 = vmatpush1.bf16.msra.mxu0 %v5438
    %6357 = vmatprep.subr.bf16.mxu0 %v5446
    %6358 = vmatpush1.bf16.msra.mxu0 %v5445
    %6359 = vmatprep.mubr.bf16.mxu0 %v3264
    %6360 = vmatmul.mubr.bf16.gmra.mrb[0].mxu0 %v3263
    %v6361 = vpop.f32.mrb[0].mxu0
    %v6362 = vadd.f32 %v6321, %v6361
    %v6363 = vpop.f32.mrb[0].mxu0
    %v6364 = vadd.f32 %v6323, %v6363
    %v6365 = vpop.f32.mrb[0].mxu0
    %v6366 = vpop.f32.mrb[0].mxu0
    %6367 = vdwg.mxu0
    %6368 = vmatprep.subr.bf16.mxu0 %v5453
    %6369 = vmatpush1.bf16.msra.mxu0 %v5452
    %6370 = vmatprep.subr.bf16.mxu0 %v5460
    %6371 = vmatpush1.bf16.msra.mxu0 %v5459
    %6372 = vmatprep.subr.bf16.mxu0 %v5467
    %6373 = vmatpush1.bf16.msra.mxu0 %v5466
    %6374 = vmatprep.subr.bf16.mxu0 %v5474
    %6375 = vmatpush1.bf16.msra.mxu0 %v5473
    %6376 = vmatprep.subr.bf16.mxu0 %v5481
    %6377 = vmatpush1.bf16.msra.mxu0 %v5480
    %6378 = vmatprep.subr.bf16.mxu0 %v5488
    %6379 = vmatpush1.bf16.msra.mxu0 %v5487
    %6380 = vmatprep.subr.bf16.mxu0 %v5495
    %6381 = vmatpush1.bf16.msra.mxu0 %v5494
    %6382 = vmatprep.subr.bf16.mxu0 %v5502
    %6383 = vmatpush1.bf16.msra.mxu0 %v5501
    %6384 = vmatprep.subr.bf16.mxu0 %v5509
    %6385 = vmatpush1.bf16.msra.mxu0 %v5508
    %6386 = vmatprep.subr.bf16.mxu0 %v5516
    %6387 = vmatpush1.bf16.msra.mxu0 %v5515
    %6388 = vmatprep.subr.bf16.mxu0 %v5523
    %6389 = vmatpush1.bf16.msra.mxu0 %v5522
    %6390 = vmatprep.subr.bf16.mxu0 %v5530
    %6391 = vmatpush1.bf16.msra.mxu0 %v5529
    %6392 = vmatprep.subr.bf16.mxu0 %v5537
    %6393 = vmatpush1.bf16.msra.mxu0 %v5536
    %6394 = vmatprep.subr.bf16.mxu0 %v5544
    %6395 = vmatpush1.bf16.msra.mxu0 %v5543
    %6396 = vmatprep.subr.bf16.mxu0 %v5551
    %6397 = vmatpush1.bf16.msra.mxu0 %v5550
    %6398 = vmatprep.subr.bf16.mxu0 %v5558
    %6399 = vmatpush1.bf16.msra.mxu0 %v5557
    %6400 = vmatprep.mubr.bf16.mxu0 %v3266
    %6401 = vmatmul.mubr.bf16.gmra.mrb[0].mxu0 %v3265
    %v6402 = vpop.f32.mrb[0].mxu0
    %v6403 = vadd.f32 %v6362, %v6402
    %v6404 = vpop.f32.mrb[0].mxu0
    %v6405 = vadd.f32 %v6364, %v6404
    %v6406 = vpop.f32.mrb[0].mxu0
    %v6407 = vpop.f32.mrb[0].mxu0
    %6408 = vdwg.mxu0
    %6409 = vmatprep.subr.bf16.mxu0 %v5565
    %6410 = vmatpush1.bf16.msra.mxu0 %v5564
    %6411 = vmatprep.subr.bf16.mxu0 %v5572
    %6412 = vmatpush1.bf16.msra.mxu0 %v5571
    %6413 = vmatprep.subr.bf16.mxu0 %v5579
    %6414 = vmatpush1.bf16.msra.mxu0 %v5578
    %6415 = vmatprep.subr.bf16.mxu0 %v5586
    %6416 = vmatpush1.bf16.msra.mxu0 %v5585
    %6417 = vmatprep.subr.bf16.mxu0 %v5593
    %6418 = vmatpush1.bf16.msra.mxu0 %v5592
    %6419 = vmatprep.subr.bf16.mxu0 %v5600
    %6420 = vmatpush1.bf16.msra.mxu0 %v5599
    %6421 = vmatprep.subr.bf16.mxu0 %v5607
    %6422 = vmatpush1.bf16.msra.mxu0 %v5606
    %6423 = vmatprep.subr.bf16.mxu0 %v5614
    %6424 = vmatpush1.bf16.msra.mxu0 %v5613
    %6425 = vmatprep.subr.bf16.mxu0 %v5621
    %6426 = vmatpush1.bf16.msra.mxu0 %v5620
    %6427 = vmatprep.subr.bf16.mxu0 %v5628
    %6428 = vmatpush1.bf16.msra.mxu0 %v5627
    %6429 = vmatprep.subr.bf16.mxu0 %v5635
    %6430 = vmatpush1.bf16.msra.mxu0 %v5634
    %6431 = vmatprep.subr.bf16.mxu0 %v5642
    %6432 = vmatpush1.bf16.msra.mxu0 %v5641
    %6433 = vmatprep.subr.bf16.mxu0 %v5649
    %6434 = vmatpush1.bf16.msra.mxu0 %v5648
    %6435 = vmatprep.subr.bf16.mxu0 %v5656
    %6436 = vmatpush1.bf16.msra.mxu0 %v5655
    %6437 = vmatprep.subr.bf16.mxu0 %v5663
    %6438 = vmatpush1.bf16.msra.mxu0 %v5662
    %6439 = vmatprep.subr.bf16.mxu0 %v5670
    %6440 = vmatpush1.bf16.msra.mxu0 %v5669
    %6441 = vmatprep.mubr.bf16.mxu0 %v3268
    %6442 = vmatmul.mubr.bf16.gmra.mrb[0].mxu0 %v3267
    %v6443 = vpop.f32.mrb[0].mxu0
    %v6444 = vadd.f32 %v6403, %v6443
    %v6445 = vpop.f32.mrb[0].mxu0
    %v6446 = vadd.f32 %v6405, %v6445
    %v6447 = vpop.f32.mrb[0].mxu0
    %v6448 = vpop.f32.mrb[0].mxu0
    %6449 = vdwg.mxu0
    %6450 = vmatprep.subr.bf16.mxu0 %v5231
    %6451 = vmatpush1.bf16.msra.mxu0 %v5230
    %6452 = vmatprep.subr.bf16.mxu0 %v5238
    %6453 = vmatpush1.bf16.msra.mxu0 %v5237
    %6454 = vmatprep.subr.bf16.mxu0 %v5245
    %6455 = vmatpush1.bf16.msra.mxu0 %v5244
    %6456 = vmatprep.subr.bf16.mxu0 %v5252
    %6457 = vmatpush1.bf16.msra.mxu0 %v5251
    %6458 = vmatprep.subr.bf16.mxu0 %v5259
    %6459 = vmatpush1.bf16.msra.mxu0 %v5258
    %6460 = vmatprep.subr.bf16.mxu0 %v5266
    %6461 = vmatpush1.bf16.msra.mxu0 %v5265
    %6462 = vmatprep.subr.bf16.mxu0 %v5273
    %6463 = vmatpush1.bf16.msra.mxu0 %v5272
    %6464 = vmatprep.subr.bf16.mxu0 %v5280
    %6465 = vmatpush1.bf16.msra.mxu0 %v5279
    %6466 = vmatprep.subr.bf16.mxu0 %v5287
    %6467 = vmatpush1.bf16.msra.mxu0 %v5286
    %6468 = vmatprep.subr.bf16.mxu0 %v5294
    %6469 = vmatpush1.bf16.msra.mxu0 %v5293
    %6470 = vmatprep.subr.bf16.mxu0 %v5301
    %6471 = vmatpush1.bf16.msra.mxu0 %v5300
    %6472 = vmatprep.subr.bf16.mxu0 %v5308
    %6473 = vmatpush1.bf16.msra.mxu0 %v5307
    %6474 = vmatprep.subr.bf16.mxu0 %v5315
    %6475 = vmatpush1.bf16.msra.mxu0 %v5314
    %6476 = vmatprep.subr.bf16.mxu0 %v5322
    %6477 = vmatpush1.bf16.msra.mxu0 %v5321
    %6478 = vmatprep.subr.bf16.mxu0 %v5329
    %6479 = vmatpush1.bf16.msra.mxu0 %v5328
    %6480 = vmatprep.subr.bf16.mxu0 %v5336
    %6481 = vmatpush1.bf16.msra.mxu0 %v5335
    %6482 = vmatprep.mubr.bf16.mxu0 %v3262
    %6483 = vmatmul.mubr.bf16.gmra.mrb[0].mxu0 %v3261
    %v6484 = vpop.f32.mrb[0].mxu0
    %v6485 = vadd.f32 %v3802, %v6484
    %v6486 = vpop.f32.mrb[0].mxu0
    %v6487 = vadd.f32 %v3806, %v6486
    %v6488 = vpop.f32.mrb[0].mxu0
    %v6489 = vpop.f32.mrb[0].mxu0
    %6490 = vdwg.mxu0
    %6491 = vmatprep.subr.bf16.mxu0 %v5343
    %6492 = vmatpush1.bf16.msra.mxu0 %v5342
    %6493 = vmatprep.subr.bf16.mxu0 %v5350
    %6494 = vmatpush1.bf16.msra.mxu0 %v5349
    %6495 = vmatprep.subr.bf16.mxu0 %v5357
    %6496 = vmatpush1.bf16.msra.mxu0 %v5356
    %6497 = vmatprep.subr.bf16.mxu0 %v5364
    %6498 = vmatpush1.bf16.msra.mxu0 %v5363
    %6499 = vmatprep.subr.bf16.mxu0 %v5371
    %6500 = vmatpush1.bf16.msra.mxu0 %v5370
    %6501 = vmatprep.subr.bf16.mxu0 %v5378
    %6502 = vmatpush1.bf16.msra.mxu0 %v5377
    %6503 = vmatprep.subr.bf16.mxu0 %v5385
    %6504 = vmatpush1.bf16.msra.mxu0 %v5384
    %6505 = vmatprep.subr.bf16.mxu0 %v5392
    %6506 = vmatpush1.bf16.msra.mxu0 %v5391
    %6507 = vmatprep.subr.bf16.mxu0 %v5399
    %6508 = vmatpush1.bf16.msra.mxu0 %v5398
    %6509 = vmatprep.subr.bf16.mxu0 %v5406
    %6510 = vmatpush1.bf16.msra.mxu0 %v5405
    %6511 = vmatprep.subr.bf16.mxu0 %v5413
    %6512 = vmatpush1.bf16.msra.mxu0 %v5412
    %6513 = vmatprep.subr.bf16.mxu0 %v5420
    %6514 = vmatpush1.bf16.msra.mxu0 %v5419
    %6515 = vmatprep.subr.bf16.mxu0 %v5427
    %6516 = vmatpush1.bf16.msra.mxu0 %v5426
    %6517 = vmatprep.subr.bf16.mxu0 %v5434
    %6518 = vmatpush1.bf16.msra.mxu0 %v5433
    %6519 = vmatprep.subr.bf16.mxu0 %v5441
    %6520 = vmatpush1.bf16.msra.mxu0 %v5440
    %6521 = vmatprep.subr.bf16.mxu0 %v5448
    %6522 = vmatpush1.bf16.msra.mxu0 %v5447
    %6523 = vmatprep.mubr.bf16.mxu0 %v3264
    %6524 = vmatmul.mubr.bf16.gmra.mrb[0].mxu0 %v3263
    %v6525 = vpop.f32.mrb[0].mxu0
    %v6526 = vadd.f32 %v6485, %v6525
    %v6527 = vpop.f32.mrb[0].mxu0
    %v6528 = vadd.f32 %v6487, %v6527
    %v6529 = vpop.f32.mrb[0].mxu0
    %v6530 = vpop.f32.mrb[0].mxu0
    %6531 = vdwg.mxu0
    %6532 = vmatprep.subr.bf16.mxu0 %v5455
    %6533 = vmatpush1.bf16.msra.mxu0 %v5454
    %6534 = vmatprep.subr.bf16.mxu0 %v5462
    %6535 = vmatpush1.bf16.msra.mxu0 %v5461
    %6536 = vmatprep.subr.bf16.mxu0 %v5469
    %6537 = vmatpush1.bf16.msra.mxu0 %v5468
    %6538 = vmatprep.subr.bf16.mxu0 %v5476
    %6539 = vmatpush1.bf16.msra.mxu0 %v5475
    %6540 = vmatprep.subr.bf16.mxu0 %v5483
    %6541 = vmatpush1.bf16.msra.mxu0 %v5482
    %6542 = vmatprep.subr.bf16.mxu0 %v5490
    %6543 = vmatpush1.bf16.msra.mxu0 %v5489
    %6544 = vmatprep.subr.bf16.mxu0 %v5497
    %6545 = vmatpush1.bf16.msra.mxu0 %v5496
    %6546 = vmatprep.subr.bf16.mxu0 %v5504
    %6547 = vmatpush1.bf16.msra.mxu0 %v5503
    %6548 = vmatprep.subr.bf16.mxu0 %v5511
    %6549 = vmatpush1.bf16.msra.mxu0 %v5510
    %6550 = vmatprep.subr.bf16.mxu0 %v5518
    %6551 = vmatpush1.bf16.msra.mxu0 %v5517
    %6552 = vmatprep.subr.bf16.mxu0 %v5525
    %6553 = vmatpush1.bf16.msra.mxu0 %v5524
    %6554 = vmatprep.subr.bf16.mxu0 %v5532
    %6555 = vmatpush1.bf16.msra.mxu0 %v5531
    %6556 = vmatprep.subr.bf16.mxu0 %v5539
    %6557 = vmatpush1.bf16.msra.mxu0 %v5538
    %6558 = vmatprep.subr.bf16.mxu0 %v5546
    %6559 = vmatpush1.bf16.msra.mxu0 %v5545
    %6560 = vmatprep.subr.bf16.mxu0 %v5553
    %6561 = vmatpush1.bf16.msra.mxu0 %v5552
    %6562 = vmatprep.subr.bf16.mxu0 %v5560
    %6563 = vmatpush1.bf16.msra.mxu0 %v5559
    %6564 = vmatprep.mubr.bf16.mxu0 %v3266
    %6565 = vmatmul.mubr.bf16.gmra.mrb[0].mxu0 %v3265
    %v6566 = vpop.f32.mrb[0].mxu0
    %v6567 = vadd.f32 %v6526, %v6566
    %v6568 = vpop.f32.mrb[0].mxu0
    %v6569 = vadd.f32 %v6528, %v6568
    %v6570 = vpop.f32.mrb[0].mxu0
    %v6571 = vpop.f32.mrb[0].mxu0
    %6572 = vdwg.mxu0
    %6573 = vmatprep.subr.bf16.mxu0 %v5567
    %6574 = vmatpush1.bf16.msra.mxu0 %v5566
    %6575 = vmatprep.subr.bf16.mxu0 %v5574
    %6576 = vmatpush1.bf16.msra.mxu0 %v5573
    %6577 = vmatprep.subr.bf16.mxu0 %v5581
    %6578 = vmatpush1.bf16.msra.mxu0 %v5580
    %6579 = vmatprep.subr.bf16.mxu0 %v5588
    %6580 = vmatpush1.bf16.msra.mxu0 %v5587
    %6581 = vmatprep.subr.bf16.mxu0 %v5595
    %6582 = vmatpush1.bf16.msra.mxu0 %v5594
    %6583 = vmatprep.subr.bf16.mxu0 %v5602
    %6584 = vmatpush1.bf16.msra.mxu0 %v5601
    %6585 = vmatprep.subr.bf16.mxu0 %v5609
    %6586 = vmatpush1.bf16.msra.mxu0 %v5608
    %6587 = vmatprep.subr.bf16.mxu0 %v5616
    %6588 = vmatpush1.bf16.msra.mxu0 %v5615
    %6589 = vmatprep.subr.bf16.mxu0 %v5623
    %6590 = vmatpush1.bf16.msra.mxu0 %v5622
    %6591 = vmatprep.subr.bf16.mxu0 %v5630
    %6592 = vmatpush1.bf16.msra.mxu0 %v5629
    %6593 = vmatprep.subr.bf16.mxu0 %v5637
    %6594 = vmatpush1.bf16.msra.mxu0 %v5636
    %6595 = vmatprep.subr.bf16.mxu0 %v5644
    %6596 = vmatpush1.bf16.msra.mxu0 %v5643
    %6597 = vmatprep.subr.bf16.mxu0 %v5651
    %6598 = vmatpush1.bf16.msra.mxu0 %v5650
    %6599 = vmatprep.subr.bf16.mxu0 %v5658
    %6600 = vmatpush1.bf16.msra.mxu0 %v5657
    %6601 = vmatprep.subr.bf16.mxu0 %v5665
    %6602 = vmatpush1.bf16.msra.mxu0 %v5664
    %6603 = vmatprep.subr.bf16.mxu0 %v5672
    %6604 = vmatpush1.bf16.msra.mxu0 %v5671
    %6605 = vmatprep.mubr.bf16.mxu0 %v3268
    %6606 = vmatmul.mubr.bf16.gmra.mrb[0].mxu0 %v3267
    %v6607 = vpop.f32.mrb[0].mxu0
    %v6608 = vadd.f32 %v6567, %v6607
    %v6609 = vpop.f32.mrb[0].mxu0
    %v6610 = vadd.f32 %v6569, %v6609
    %v6611 = vpop.f32.mrb[0].mxu0
    %v6612 = vpop.f32.mrb[0].mxu0
    %6613 = vdwg.mxu0
    %6614 = vmatprep.subr.bf16.mxu0 0
    %6615 = vmatpush1.bf16.msra.mxu0 %v5232
    %6616 = vmatprep.subr.bf16.mxu0 0
    %6617 = vmatpush1.bf16.msra.mxu0 %v5239
    %6618 = vmatprep.subr.bf16.mxu0 0
    %6619 = vmatpush1.bf16.msra.mxu0 %v5246
    %6620 = vmatprep.subr.bf16.mxu0 0
    %6621 = vmatpush1.bf16.msra.mxu0 %v5253
    %6622 = vmatprep.subr.bf16.mxu0 0
    %6623 = vmatpush1.bf16.msra.mxu0 %v5260
    %6624 = vmatprep.subr.bf16.mxu0 0
    %6625 = vmatpush1.bf16.msra.mxu0 %v5267
    %6626 = vmatprep.subr.bf16.mxu0 0
    %6627 = vmatpush1.bf16.msra.mxu0 %v5274
    %6628 = vmatprep.subr.bf16.mxu0 0
    %6629 = vmatpush1.bf16.msra.mxu0 %v5281
    %6630 = vmatprep.subr.bf16.mxu0 0
    %6631 = vmatpush1.bf16.msra.mxu0 %v5288
    %6632 = vmatprep.subr.bf16.mxu0 0
    %6633 = vmatpush1.bf16.msra.mxu0 %v5295
    %6634 = vmatprep.subr.bf16.mxu0 0
    %6635 = vmatpush1.bf16.msra.mxu0 %v5302
    %6636 = vmatprep.subr.bf16.mxu0 0
    %6637 = vmatpush1.bf16.msra.mxu0 %v5309
    %6638 = vmatprep.subr.bf16.mxu0 0
    %6639 = vmatpush1.bf16.msra.mxu0 %v5316
    %6640 = vmatprep.subr.bf16.mxu0 0
    %6641 = vmatpush1.bf16.msra.mxu0 %v5323
    %6642 = vmatprep.subr.bf16.mxu0 0
    %6643 = vmatpush1.bf16.msra.mxu0 %v5330
    %6644 = vmatprep.subr.bf16.mxu0 0
    %6645 = vmatpush1.bf16.msra.mxu0 %v5337
    %6646 = vmatprep.mubr.bf16.mxu0 %v3262
    %6647 = vmatmul.mubr.bf16.gmra.mrb[0].mxu0 %v3261
    %v6648 = vpop.f32.mrb[0].mxu0
    %v6649 = vadd.f32 %v3810, %v6648
    %v6650 = vpop.f32.mrb[0].mxu0
    %v6651 = vpop.f32.mrb[0].mxu0
    %v6652 = vpop.f32.mrb[0].mxu0
    %6653 = vdwg.mxu0
    %6654 = vmatprep.subr.bf16.mxu0 0
    %6655 = vmatpush1.bf16.msra.mxu0 %v5344
    %6656 = vmatprep.subr.bf16.mxu0 0
    %6657 = vmatpush1.bf16.msra.mxu0 %v5351
    %6658 = vmatprep.subr.bf16.mxu0 0
    %6659 = vmatpush1.bf16.msra.mxu0 %v5358
    %6660 = vmatprep.subr.bf16.mxu0 0
    %6661 = vmatpush1.bf16.msra.mxu0 %v5365
    %6662 = vmatprep.subr.bf16.mxu0 0
    %6663 = vmatpush1.bf16.msra.mxu0 %v5372
    %6664 = vmatprep.subr.bf16.mxu0 0
    %6665 = vmatpush1.bf16.msra.mxu0 %v5379
    %6666 = vmatprep.subr.bf16.mxu0 0
    %6667 = vmatpush1.bf16.msra.mxu0 %v5386
    %6668 = vmatprep.subr.bf16.mxu0 0
    %6669 = vmatpush1.bf16.msra.mxu0 %v5393
    %6670 = vmatprep.subr.bf16.mxu0 0
    %6671 = vmatpush1.bf16.msra.mxu0 %v5400
    %6672 = vmatprep.subr.bf16.mxu0 0
    %6673 = vmatpush1.bf16.msra.mxu0 %v5407
    %6674 = vmatprep.subr.bf16.mxu0 0
    %6675 = vmatpush1.bf16.msra.mxu0 %v5414
    %6676 = vmatprep.subr.bf16.mxu0 0
    %6677 = vmatpush1.bf16.msra.mxu0 %v5421
    %6678 = vmatprep.subr.bf16.mxu0 0
    %6679 = vmatpush1.bf16.msra.mxu0 %v5428
    %6680 = vmatprep.subr.bf16.mxu0 0
    %6681 = vmatpush1.bf16.msra.mxu0 %v5435
    %6682 = vmatprep.subr.bf16.mxu0 0
    %6683 = vmatpush1.bf16.msra.mxu0 %v5442
    %6684 = vmatprep.subr.bf16.mxu0 0
    %6685 = vmatpush1.bf16.msra.mxu0 %v5449
    %6686 = vmatprep.mubr.bf16.mxu0 %v3264
    %6687 = vmatmul.mubr.bf16.gmra.mrb[0].mxu0 %v3263
    %v6688 = vpop.f32.mrb[0].mxu0
    %v6689 = vadd.f32 %v6649, %v6688
    %v6690 = vpop.f32.mrb[0].mxu0
    %v6691 = vpop.f32.mrb[0].mxu0
    %v6692 = vpop.f32.mrb[0].mxu0
    %6693 = vdwg.mxu0
    %6694 = vmatprep.subr.bf16.mxu0 0
    %6695 = vmatpush1.bf16.msra.mxu0 %v5456
    %6696 = vmatprep.subr.bf16.mxu0 0
    %6697 = vmatpush1.bf16.msra.mxu0 %v5463
    %6698 = vmatprep.subr.bf16.mxu0 0
    %6699 = vmatpush1.bf16.msra.mxu0 %v5470
    %6700 = vmatprep.subr.bf16.mxu0 0
    %6701 = vmatpush1.bf16.msra.mxu0 %v5477
    %6702 = vmatprep.subr.bf16.mxu0 0
    %6703 = vmatpush1.bf16.msra.mxu0 %v5484
    %6704 = vmatprep.subr.bf16.mxu0 0
    %6705 = vmatpush1.bf16.msra.mxu0 %v5491
    %6706 = vmatprep.subr.bf16.mxu0 0
    %6707 = vmatpush1.bf16.msra.mxu0 %v5498
    %6708 = vmatprep.subr.bf16.mxu0 0
    %6709 = vmatpush1.bf16.msra.mxu0 %v5505
    %6710 = vmatprep.subr.bf16.mxu0 0
    %6711 = vmatpush1.bf16.msra.mxu0 %v5512
    %6712 = vmatprep.subr.bf16.mxu0 0
    %6713 = vmatpush1.bf16.msra.mxu0 %v5519
    %6714 = vmatprep.subr.bf16.mxu0 0
    %6715 = vmatpush1.bf16.msra.mxu0 %v5526
    %6716 = vmatprep.subr.bf16.mxu0 0
    %6717 = vmatpush1.bf16.msra.mxu0 %v5533
    %6718 = vmatprep.subr.bf16.mxu0 0
    %6719 = vmatpush1.bf16.msra.mxu0 %v5540
    %6720 = vmatprep.subr.bf16.mxu0 0
    %6721 = vmatpush1.bf16.msra.mxu0 %v5547
    %6722 = vmatprep.subr.bf16.mxu0 0
    %6723 = vmatpush1.bf16.msra.mxu0 %v5554
    %6724 = vmatprep.subr.bf16.mxu0 0
    %6725 = vmatpush1.bf16.msra.mxu0 %v5561
    %6726 = vmatprep.mubr.bf16.mxu0 %v3266
    %6727 = vmatmul.mubr.bf16.gmra.mrb[0].mxu0 %v3265
    %v6728 = vpop.f32.mrb[0].mxu0
    %v6729 = vadd.f32 %v6689, %v6728
    %v6730 = vpop.f32.mrb[0].mxu0
    %v6731 = vpop.f32.mrb[0].mxu0
    %v6732 = vpop.f32.mrb[0].mxu0
    %6733 = vdwg.mxu0
    %6734 = vmatprep.subr.bf16.mxu0 0
    %6735 = vmatpush1.bf16.msra.mxu0 %v5568
    %6736 = vmatprep.subr.bf16.mxu0 0
    %6737 = vmatpush1.bf16.msra.mxu0 %v5575
    %6738 = vmatprep.subr.bf16.mxu0 0
    %6739 = vmatpush1.bf16.msra.mxu0 %v5582
    %6740 = vmatprep.subr.bf16.mxu0 0
    %6741 = vmatpush1.bf16.msra.mxu0 %v5589
    %6742 = vmatprep.subr.bf16.mxu0 0
    %6743 = vmatpush1.bf16.msra.mxu0 %v5596
    %6744 = vmatprep.subr.bf16.mxu0 0
    %6745 = vmatpush1.bf16.msra.mxu0 %v5603
    %6746 = vmatprep.subr.bf16.mxu0 0
    %6747 = vmatpush1.bf16.msra.mxu0 %v5610
    %6748 = vmatprep.subr.bf16.mxu0 0
    %6749 = vmatpush1.bf16.msra.mxu0 %v5617
    %6750 = vmatprep.subr.bf16.mxu0 0
    %6751 = vmatpush1.bf16.msra.mxu0 %v5624
    %6752 = vmatprep.subr.bf16.mxu0 0
    %6753 = vmatpush1.bf16.msra.mxu0 %v5631
    %6754 = vmatprep.subr.bf16.mxu0 0
    %6755 = vmatpush1.bf16.msra.mxu0 %v5638
    %6756 = vmatprep.subr.bf16.mxu0 0
    %6757 = vmatpush1.bf16.msra.mxu0 %v5645
    %6758 = vmatprep.subr.bf16.mxu0 0
    %6759 = vmatpush1.bf16.msra.mxu0 %v5652
    %6760 = vmatprep.subr.bf16.mxu0 0
    %6761 = vmatpush1.bf16.msra.mxu0 %v5659
    %6762 = vmatprep.subr.bf16.mxu0 0
    %6763 = vmatpush1.bf16.msra.mxu0 %v5666
    %6764 = vmatprep.subr.bf16.mxu0 0
    %6765 = vmatpush1.bf16.msra.mxu0 %v5673
    %6766 = vmatprep.mubr.bf16.mxu0 %v3268
    %6767 = vmatmul.mubr.bf16.gmra.mrb[0].mxu0 %v3267
    %v6768 = vpop.f32.mrb[0].mxu0
    %v6769 = vadd.f32 %v6729, %v6768
    %v6770 = vpop.f32.mrb[0].mxu0
    %v6771 = vpop.f32.mrb[0].mxu0
    %v6772 = vpop.f32.mrb[0].mxu0
    %6773 = vdwg.mxu0
    %v6774 = vtanh.pop %v6280
    %v6775 = vtanh.pop %v6282
    %v6776 = vtanh.pop %v6444
    %v6777 = vtanh.pop %v6446
    %v6778 = vtanh.pop %v6608
    %v6779 = vtanh.pop %v6610
    %v6780 = vtanh.pop %v6769
    %6781 = vst [vmem:[%s7] sm:$0xff] %v6774
    %6782 = vst [vmem:[%s7 + $0x8] sm:$0xff] %v6775
    %6783 = vst [vmem:[%s7 + $0x10] sm:$0xff] %v6776
    %6784 = vst [vmem:[%s7 + $0x18] sm:$0xff] %v6777
    %6785 = vst [vmem:[%s7 + $0x20] sm:$0xff] %v6778
    %6786 = vst [vmem:[%s7 + $0x28] sm:$0xff] %v6779
    %6787 = vst [vmem:[%s7 + $0x30] sm:$0xff] %v6780
    // Predicated region
    $region54: #{cgan_forward.1} parent=1 // pred_check
      _
    $region55: #{cgan_forward.1} parent=1 // pred_check_branch
      %6789 = sbr.rel (0) target = $region57
    $region56: #{cgan_forward.1} parent=1 // pred_region
      _
    $region57: #{cgan_forward.1} parent=1 // pred_fallthru
      _
    // Predicated region
    $region58: #{cgan_forward.1} parent=1 // pred_check
      _
    $region59: #{cgan_forward.1} parent=1 // pred_check_branch
      %6791 = sbr.rel (0) target = $region61
    $region60: #{cgan_forward.1} parent=1 // pred_region
      _
    $region61: #{cgan_forward.1} parent=1 // pred_fallthru
      _
    %6792 = vsyncpa [#allocation3], 1
    %6793 = vsyncpa [#allocation5], 1
    %6794 = vsyncpa [#allocation8], 1
    %6795 = vsyncpa [#allocation11], 1

</llo_original>
